<compile_context>
chip_gen: v6e
topology: v6e:2x2x1
jax: 0.10.0
libtpu: 0.0.40
codegen_flags: <defaults>
</compile_context>

<pallas_src>
import functools

import jax
import jax.numpy as jnp
from jax import lax
from jax.experimental import pallas as pl
from jax.experimental.pallas import tpu as pltpu


MID = 256        # hard-coded mid channels in the PyTorch module
BN_EPS = 1e-5
LANE = 128
HALO = 8         # extra slab rows (>= 2 needed for the kw taps; 8 keeps everything 8-aligned)


def _round_up(x, m):
    return (x + m - 1) // m * m


def _aux_kernel(x_hbm, w1_ref, shift_ref, w2_ref, b2_ref, o_ref,
                xbuf, acc_ref, sem, *, tm, width):
    # x_hbm:     (P_pad, Cin_pad)     bf16, raw HBM ref (manual DMA)
    # w1_ref:    (9, Cin_pad, 256)    bf16, VMEM-resident, BN scale folded in
    # shift_ref: (1, 256)             f32, folded BN shift
    # w2_ref:    (256, NC_pad)        bf16, VMEM-resident
    # b2_ref:    (1, NC_pad)          f32
    # o_ref:     (tm, NC_pad)         f32, written on the last kh tap
    # xbuf:      (2, tm + HALO, Cin_pad) bf16 double buffer, acc_ref: (tm, 256) f32
    i = pl.program_id(0)
    kh = pl.program_id(1)
    n_kh = pl.num_programs(1)          # 3
    slab_rows = xbuf.shape[1]          # tm + HALO

    def start_fetch(tap, slot_idx):
        # rows [i*tm + tap*width, ... + slab_rows) of the flattened NHWC input
        start = i * tm + tap * width
        pltpu.make_async_copy(
            x_hbm.at[pl.ds(start, slab_rows), :],
            xbuf.at[slot_idx],
            sem.at[slot_idx],
        ).start()

    slot = kh % 2

    # Prime the pipeline at the first tap of every M tile (megacore-safe regardless of how
    # the "parallel" i axis is split across TensorCores).
    @pl.when(kh == 0)
    def _prime():
        start_fetch(0, 0)

    # Wait for the current tap's slab.
    pltpu.make_async_copy(
        x_hbm.at[pl.ds(0, slab_rows), :], xbuf.at[slot], sem.at[slot]
    ).wait()

    # Prefetch the next tap's slab while computing on this one.
    @pl.when(kh + 1 < n_kh)
    def _prefetch():
        start_fetch(kh + 1, 1 - slot)

    slab = xbuf[slot]                  # (tm + HALO, Cin_pad) bf16, aligned
    base = kh * 3

    # kw = 0 tap: first contribution of this kh -> assign or accumulate (no zero-init pass).
    y = jnp.dot(slab, w1_ref[base], preferred_element_type=jnp.float32)

    @pl.when(kh == 0)
    def _init():
        acc_ref[...] = y[0:tm, :]

    @pl.when(kh > 0)
    def _acc0():
        acc_ref[...] += y[0:tm, :]

    # kw = 1, 2 taps: shift the f32 partial-result rows (all MXU operands stay aligned).
    y = jnp.dot(slab, w1_ref[base + 1], preferred_element_type=jnp.float32)
    acc_ref[...] += y[1:tm + 1, :]
    y = jnp.dot(slab, w1_ref[base + 2], preferred_element_type=jnp.float32)
    acc_ref[...] += y[2:tm + 2, :]

    # Epilogue on the last tap: BN shift (scale folded into W1) + ReLU + 1x1 conv + bias.
    @pl.when(kh == n_kh - 1)
    def _epilogue():
        a = jnp.maximum(acc_ref[...] + shift_ref[...], 0.0)
        # TODO(synk): Dropout2d(0.1) is identity in eval mode; training-mode channel dropout
        # would need pltpu.prng_* masks.
        z = jnp.dot(a.astype(w2_ref.dtype), w2_ref[...],
                    preferred_element_type=jnp.float32) + b2_ref[...]
        o_ref[...] = z


def aux_loss_forward(x_nchw, params, *, tm=1024):
    """x_nchw: [N, Cin, H, W] float32 -> [N, num_classes, H-2, W-2] float32.

    tm = output rows per M tile.  1024 fits comfortably in v7x's 64 MiB VMEM (with the
    resident W1 at Cin=1024); on v5e/v6e (128 MiB VMEM) it can be raised to 2048.
    """
    w1 = params["conv1_w"]          # [256, Cin, 3, 3]
    gamma = params["bn_gamma"]      # [256]
    beta = params["bn_beta"]        # [256]
    mean = params["bn_mean"]        # [256]
    var = params["bn_var"]          # [256]
    w2 = params["conv2_w"]          # [num_classes, 256, 1, 1]
    b2 = params["conv2_b"]          # [num_classes]

    N, Cin, H, W = x_nchw.shape
    Ho, Wo = H - 2, W - 2
    num_classes = w2.shape[0]

    Cin_pad = _round_up(Cin, LANE)
    NC_pad = _round_up(num_classes, LANE)

    # The conv is evaluated at every input position (flattened-shift identity); the invalid
    # border positions are sliced off after the kernel.
    M = N * H * W

    # ---- tile geometry ----
    tm = max(LANE, _round_up(tm, LANE))
    tm = min(tm, _round_up(M, LANE))
    # Keep at least two M tiles when possible so the "parallel" axis can split across v7x's
    # two TensorCores.
    if M > 2 * LANE and _round_up(M, tm) // tm < 2:
        tm = max(LANE, _round_up((M + 1) // 2, LANE))
    M_pad = _round_up(M, tm)
    P_pad = _round_up(M_pad + 2 * W + HALO, 8)   # furthest row any slab DMA can touch

    # ---- flatten x once (NHWC, bf16); no 9x im2col materialization ----
    x_flat = jnp.transpose(x_nchw, (0, 2, 3, 1)).reshape(M, Cin).astype(jnp.bfloat16)
    x_flat = jnp.pad(x_flat, ((0, P_pad - M), (0, Cin_pad - Cin)))

    # ---- fold BN scale into W1 columns; keep the shift for the kernel epilogue ----
    scale = gamma / jnp.sqrt(var + BN_EPS)                          # [256]
    shift = (beta - mean * scale).reshape(1, MID).astype(jnp.float32)
    # [O, Cin, kh, kw] -> [kh, kw, Cin, O] -> [9, Cin_pad, 256] (tap index = kh*3 + kw)
    w1_mat = jnp.transpose(w1, (2, 3, 1, 0)) * scale[None, None, None, :]
    w1_mat = w1_mat.reshape(9, Cin, MID).astype(jnp.bfloat16)
    w1_mat = jnp.pad(w1_mat, ((0, 0), (0, Cin_pad - Cin), (0, 0)))

    # ---- 1x1 conv as a matmul with a lane-dense, 128-padded output ----
    w2_mat = jnp.transpose(w2.reshape(num_classes, MID), (1, 0)).astype(jnp.bfloat16)
    w2_mat = jnp.pad(w2_mat, ((0, 0), (0, NC_pad - num_classes)))
    b2_row = jnp.pad(b2.astype(jnp.float32), (0, NC_pad - num_classes)).reshape(1, NC_pad)

    grid = (M_pad // tm, 3)

    conv1_flops = 2 * grid[0] * 3 * 3 * (tm + HALO) * Cin_pad * MID
    conv2_flops = 2 * M_pad * MID * NC_pad
    cost = pl.CostEstimate(
        flops=conv1_flops + conv2_flops,
        transcendentals=0,
        bytes_accessed=(grid[0] * 3 * (tm + HALO) * Cin_pad * 2   # x slabs (3 per M tile)
                        + 9 * Cin_pad * MID * 2                   # resident W1 (read once)
                        + MID * NC_pad * 2 + MID * 4 + NC_pad * 4  # W2 / shift / b2
                        + M_pad * NC_pad * 4),                     # output writeback
    )

    kernel = functools.partial(_aux_kernel, tm=tm, width=W)

    out_flat = pl.pallas_call(
        kernel,
        out_shape=jax.ShapeDtypeStruct((M_pad, NC_pad), jnp.float32),
        grid_spec=pltpu.PrefetchScalarGridSpec(
            num_scalar_prefetch=0,
            grid=grid,
            in_specs=[
                pl.BlockSpec(memory_space=pl.ANY),                        # x stays in HBM
                pl.BlockSpec((9, Cin_pad, MID), lambda i, k: (0, 0, 0)),  # W1 resident
                pl.BlockSpec((1, MID), lambda i, k: (0, 0)),              # BN shift
                pl.BlockSpec((MID, NC_pad), lambda i, k: (0, 0)),         # W2 resident
                pl.BlockSpec((1, NC_pad), lambda i, k: (0, 0)),           # b2
            ],
            out_specs=pl.BlockSpec((tm, NC_pad), lambda i, k: (i, 0)),
            scratch_shapes=[
                pltpu.VMEM((2, tm + HALO, Cin_pad), jnp.bfloat16),  # x-slab double buffer
                pltpu.VMEM((tm, MID), jnp.float32),                 # conv1 accumulator
                pltpu.SemaphoreType.DMA((2,)),
            ],
        ),
        compiler_params=pltpu.CompilerParams(
            dimension_semantics=("parallel", "arbitrary"),
            vmem_limit_bytes=48 * 1024 * 1024,   # above scoped default, below v7x's 64 MiB
        ),
        cost_estimate=cost,
    )(x_flat, w1_mat, shift, w2_mat, b2_row)

    # un-pad / drop invalid border positions: [M_pad, NC_pad] -> [N, Ho, Wo, NC] -> NCHW
    out = out_flat[:M, :num_classes].reshape(N, H, W, num_classes)
    out = out[:, :Ho, :Wo, :]
    return jnp.transpose(out, (0, 3, 1, 2))


def _reference_forward(x, params):
    """Pure-JAX reference (lax.conv, f32) for correctness check."""
    w1, gamma, beta, mean, var = (
        params["conv1_w"], params["bn_gamma"], params["bn_beta"],
        params["bn_mean"], params["bn_var"],
    )
    w2, b2 = params["conv2_w"], params["conv2_b"]
    y = lax.conv_general_dilated(
        x, w1, (1, 1), "VALID", dimension_numbers=("NCHW", "OIHW", "NCHW"))
    scale = gamma / jnp.sqrt(var + BN_EPS)
    shift = beta - mean * scale
    y = y * scale[None, :, None, None] + shift[None, :, None, None]
    y = jnp.maximum(y, 0.0)
    z = lax.conv_general_dilated(
        y, w2, (1, 1), "VALID", dimension_numbers=("NCHW", "OIHW", "NCHW"))
    return z + b2[None, :, None, None]


def make_params(key, in_channels, num_classes):
    ks = jax.random.split(key, 6)
    return {
        "conv1_w": 0.05 * jax.random.normal(ks[0], (MID, in_channels, 3, 3), jnp.float32),
        "bn_gamma": 1.0 + 0.1 * jax.random.normal(ks[1], (MID,), jnp.float32),
        "bn_beta": 0.1 * jax.random.normal(ks[2], (MID,), jnp.float32),
        "bn_mean": 0.1 * jax.random.normal(ks[3], (MID,), jnp.float32),
        "bn_var": jnp.abs(1.0 + 0.1 * jax.random.normal(ks[4], (MID,), jnp.float32)),
        "conv2_w": 0.05 * jax.random.normal(ks[5], (num_classes, MID, 1, 1), jnp.float32),
        "conv2_b": jnp.full((num_classes,), 0.01, jnp.float32),
    }


if __name__ == "__main__":
    # Small shapes consistent with the module (in_channels scaled down from 1024).
    N, Cin, H, W = 2, 8, 16, 16
    num_classes = 1

    key = jax.random.PRNGKey(0)
    kx, kp = jax.random.split(key)
    x = jax.random.normal(kx, (N, Cin, H, W), jnp.float32)
    params = make_params(kp, Cin, num_classes)

    fwd = jax.jit(aux_loss_forward)
    out = jax.block_until_ready(fwd(x, params))

    ref = jax.block_until_ready(_reference_forward(x, params))
    assert out.shape == (N, num_classes, H - 2, W - 2), out.shape
    # bf16 matmul inputs (f32 accumulation) -> looser tolerance vs the pure-f32 reference.
    assert jnp.allclose(out, ref, atol=5e-2, rtol=5e-2), float(jnp.max(jnp.abs(out - ref)))

    print("KERNEL_OK")
</pallas_src>

<mosaic_0001>
module attributes {stable_mosaic.version = 11 : i64} {
  func.func @_aux_kernel(%arg0: i32, %arg1: i32, %arg2: memref<552x128xbf16, #tpu.memory_space<any>>, %arg3: memref<9x128x256xbf16, #tpu.memory_space<vmem>>, %arg4: memref<1x256xf32, #tpu.memory_space<vmem>>, %arg5: memref<256x128xbf16, #tpu.memory_space<vmem>>, %arg6: memref<1x128xf32, #tpu.memory_space<vmem>>, %arg7: memref<256x128xf32, #tpu.memory_space<vmem>>, %arg8: memref<2x264x128xbf16, #tpu.memory_space<vmem>>, %arg9: memref<256x256xf32, #tpu.memory_space<vmem>>, %arg10: memref<2x!tpu.dma_semaphore, #tpu.memory_space<semaphore_mem>>) attributes {dimension_semantics = [#tpu.dimension_semantics<parallel>, #tpu.dimension_semantics<arbitrary>], iteration_bounds = array<i64: 2, 3>, scalar_prefetch = 0 : i64, scratch_operands = 3 : i64, tpu.core_type = #tpu.core_type<tc>, window_params = [{}, {pipeline_mode = #tpu.pipeline_mode<synchronous>, transform_indices = @transform_1, window_bounds = array<i64: 9, 128, 256>}, {pipeline_mode = #tpu.pipeline_mode<synchronous>, transform_indices = @transform_2, window_bounds = array<i64: 1, 256>}, {pipeline_mode = #tpu.pipeline_mode<synchronous>, transform_indices = @transform_3, window_bounds = array<i64: 256, 128>}, {pipeline_mode = #tpu.pipeline_mode<synchronous>, transform_indices = @transform_4, window_bounds = array<i64: 1, 128>}, {transform_indices = @transform_5, window_bounds = array<i64: 256, 128>}]} {
    %c2_i32 = arith.constant 2 : i32
    %c0_i32 = arith.constant 0 : i32
    %0 = arith.cmpi eq, %c2_i32, %c0_i32 : i32
    %c1_i32 = arith.constant 1 : i32
    %1 = arith.select %0, %c1_i32, %c2_i32 : i32
    %2 = arith.remsi %arg1, %1 : i32
    %c0_i32_0 = arith.constant 0 : i32
    %3 = arith.cmpi ne, %2, %c0_i32_0 : i32
    %c0_i32_1 = arith.constant 0 : i32
    %4 = arith.cmpi slt, %2, %c0_i32_1 : i32
    %c0_i32_2 = arith.constant 0 : i32
    %5 = arith.cmpi slt, %1, %c0_i32_2 : i32
    %6 = arith.xori %4, %5 : i1
    %7 = arith.andi %6, %3 : i1
    %8 = arith.addi %2, %1 : i32
    %9 = arith.select %7, %8, %2 : i32
    %c0_i32_3 = arith.constant 0 : i32
    %10 = arith.cmpi eq, %arg1, %c0_i32_3 : i32
    %11 = arith.extui %10 : i1 to i32
    %c0_i32_4 = arith.constant 0 : i32
    %12 = arith.cmpi ne, %11, %c0_i32_4 : i32
    scf.if %12 {
      %c256_i32 = arith.constant 256 : i32
      %57 = arith.muli %arg0, %c256_i32 : i32
      %c0_i32_37 = arith.constant 0 : i32
      %58 = arith.addi %57, %c0_i32_37 : i32
      %c0_i32_38 = arith.constant 0 : i32
      %c0_i32_39 = arith.constant 0 : i32
      %c0_i32_40 = arith.constant 0 : i32
      %59 = tpu.memref_slice %arg2[%58, %c0_i32_40] : memref<552x128xbf16, #tpu.memory_space<any>> -> memref<264x128xbf16, #tpu.memory_space<any>>
      %c0_i32_41 = arith.constant 0 : i32
      %c0_i32_42 = arith.constant 0 : i32
      %60 = tpu.memref_slice %arg8[%c0_i32_38, %c0_i32_41, %c0_i32_42] : memref<2x264x128xbf16, #tpu.memory_space<vmem>> -> memref<1x264x128xbf16, #tpu.memory_space<vmem>>
      %61 = tpu.memref_squeeze %60 : memref<1x264x128xbf16, #tpu.memory_space<vmem>> -> memref<264x128xbf16, #tpu.memory_space<vmem>>
      %62 = tpu.memref_slice %arg10[%c0_i32_39] : memref<2x!tpu.dma_semaphore, #tpu.memory_space<semaphore_mem>> -> memref<1x!tpu.dma_semaphore, #tpu.memory_space<semaphore_mem>>
      %63 = tpu.memref_squeeze %62 : memref<1x!tpu.dma_semaphore, #tpu.memory_space<semaphore_mem>> -> memref<!tpu.dma_semaphore, #tpu.memory_space<semaphore_mem>>
      tpu.enqueue_dma source(%59 : memref<264x128xbf16, #tpu.memory_space<any>>) target(%61 : memref<264x128xbf16, #tpu.memory_space<vmem>>) target_semaphore(%63 : memref<!tpu.dma_semaphore, #tpu.memory_space<semaphore_mem>>)
    } else {
    }
    %c0_i32_5 = arith.constant 0 : i32
    %c0_i32_6 = arith.constant 0 : i32
    %13 = tpu.memref_slice %arg2[%c0_i32_5, %c0_i32_6] : memref<552x128xbf16, #tpu.memory_space<any>> -> memref<264x128xbf16, #tpu.memory_space<any>>
    %c0_i32_7 = arith.constant 0 : i32
    %c0_i32_8 = arith.constant 0 : i32
    %14 = tpu.memref_slice %arg8[%9, %c0_i32_7, %c0_i32_8] : memref<2x264x128xbf16, #tpu.memory_space<vmem>> -> memref<1x264x128xbf16, #tpu.memory_space<vmem>>
    %15 = tpu.memref_squeeze %14 : memref<1x264x128xbf16, #tpu.memory_space<vmem>> -> memref<264x128xbf16, #tpu.memory_space<vmem>>
    %16 = tpu.memref_slice %arg10[%9] : memref<2x!tpu.dma_semaphore, #tpu.memory_space<semaphore_mem>> -> memref<1x!tpu.dma_semaphore, #tpu.memory_space<semaphore_mem>>
    %17 = tpu.memref_squeeze %16 : memref<1x!tpu.dma_semaphore, #tpu.memory_space<semaphore_mem>> -> memref<!tpu.dma_semaphore, #tpu.memory_space<semaphore_mem>>
    tpu.wait_dma2 semaphore(%17 : memref<!tpu.dma_semaphore, #tpu.memory_space<semaphore_mem>>) src(%13 : memref<264x128xbf16, #tpu.memory_space<any>>) dst(%15 : memref<264x128xbf16, #tpu.memory_space<vmem>>)
    %c1_i32_9 = arith.constant 1 : i32
    %18 = arith.addi %arg1, %c1_i32_9 : i32
    %c3_i32 = arith.constant 3 : i32
    %19 = arith.cmpi slt, %18, %c3_i32 : i32
    %20 = arith.extui %19 : i1 to i32
    %c0_i32_10 = arith.constant 0 : i32
    %21 = arith.cmpi ne, %20, %c0_i32_10 : i32
    scf.if %21 {
      %c1_i32_37 = arith.constant 1 : i32
      %57 = arith.addi %arg1, %c1_i32_37 : i32
      %c1_i32_38 = arith.constant 1 : i32
      %58 = arith.subi %c1_i32_38, %9 : i32
      %c256_i32 = arith.constant 256 : i32
      %59 = arith.muli %arg0, %c256_i32 : i32
      %c16_i32 = arith.constant 16 : i32
      %60 = arith.muli %57, %c16_i32 : i32
      %61 = arith.addi %59, %60 : i32
      %c0_i32_39 = arith.constant 0 : i32
      %62 = tpu.memref_slice %arg2[%61, %c0_i32_39] : memref<552x128xbf16, #tpu.memory_space<any>> -> memref<264x128xbf16, #tpu.memory_space<any>>
      %c0_i32_40 = arith.constant 0 : i32
      %c0_i32_41 = arith.constant 0 : i32
      %63 = tpu.memref_slice %arg8[%58, %c0_i32_40, %c0_i32_41] : memref<2x264x128xbf16, #tpu.memory_space<vmem>> -> memref<1x264x128xbf16, #tpu.memory_space<vmem>>
      %64 = tpu.memref_squeeze %63 : memref<1x264x128xbf16, #tpu.memory_space<vmem>> -> memref<264x128xbf16, #tpu.memory_space<vmem>>
      %65 = tpu.memref_slice %arg10[%58] : memref<2x!tpu.dma_semaphore, #tpu.memory_space<semaphore_mem>> -> memref<1x!tpu.dma_semaphore, #tpu.memory_space<semaphore_mem>>
      %66 = tpu.memref_squeeze %65 : memref<1x!tpu.dma_semaphore, #tpu.memory_space<semaphore_mem>> -> memref<!tpu.dma_semaphore, #tpu.memory_space<semaphore_mem>>
      tpu.enqueue_dma source(%62 : memref<264x128xbf16, #tpu.memory_space<any>>) target(%64 : memref<264x128xbf16, #tpu.memory_space<vmem>>) target_semaphore(%66 : memref<!tpu.dma_semaphore, #tpu.memory_space<semaphore_mem>>)
    } else {
    }
    %22 = arith.index_cast %9 : i32 to index
    %c0 = arith.constant 0 : index
    %c0_11 = arith.constant 0 : index
    %23 = vector.load %arg8[%22, %c0, %c0_11] : memref<2x264x128xbf16, #tpu.memory_space<vmem>>, vector<1x264x128xbf16>
    %24 = vector.shape_cast %23 : vector<1x264x128xbf16> to vector<264x128xbf16>
    %c3_i32_12 = arith.constant 3 : i32
    %25 = arith.muli %arg1, %c3_i32_12 : i32
    %26 = arith.index_cast %25 : i32 to index
    %c0_13 = arith.constant 0 : index
    %c0_14 = arith.constant 0 : index
    %27 = vector.load %arg3[%26, %c0_13, %c0_14] : memref<9x128x256xbf16, #tpu.memory_space<vmem>>, vector<1x128x256xbf16>
    %28 = vector.shape_cast %27 : vector<1x128x256xbf16> to vector<128x256xbf16>
    %cst = arith.constant dense<0.000000e+00> : vector<264x256xf32>
    %29 = tpu.matmul %24, %28, %cst {dimension_numbers = #tpu.dot_dimension_numbers<[1], [0], [0], [1], [0, 0, 1, 1], [], []>} : vector<264x128xbf16>, vector<128x256xbf16>, vector<264x256xf32> -> vector<264x256xf32>
    %c0_i32_15 = arith.constant 0 : i32
    %30 = arith.cmpi eq, %arg1, %c0_i32_15 : i32
    %31 = arith.extui %30 : i1 to i32
    %c0_i32_16 = arith.constant 0 : i32
    %32 = arith.cmpi ne, %31, %c0_i32_16 : i32
    scf.if %32 {
      %57 = vector.extract_strided_slice %29 {offsets = [0, 0], sizes = [256, 256], strides = [1, 1]} : vector<264x256xf32> to vector<256x256xf32>
      %c0_37 = arith.constant 0 : index
      %c0_38 = arith.constant 0 : index
      %58 = vector.load %arg9[%c0_37, %c0_38] : memref<256x256xf32, #tpu.memory_space<vmem>>, vector<256x256xf32>
      tpu.vector_store %arg9[%c0_37, %c0_38], %57 {strides = array<i32>} : memref<256x256xf32, #tpu.memory_space<vmem>>, vector<256x256xf32>,
    } else {
    }
    %c0_i32_17 = arith.constant 0 : i32
    %33 = arith.cmpi sgt, %arg1, %c0_i32_17 : i32
    %34 = arith.extui %33 : i1 to i32
    %c0_i32_18 = arith.constant 0 : i32
    %35 = arith.cmpi ne, %34, %c0_i32_18 : i32
    scf.if %35 {
      %c0_37 = arith.constant 0 : index
      %c0_38 = arith.constant 0 : index
      %57 = vector.load %arg9[%c0_37, %c0_38] : memref<256x256xf32, #tpu.memory_space<vmem>>, vector<256x256xf32>
      %58 = vector.extract_strided_slice %29 {offsets = [0, 0], sizes = [256, 256], strides = [1, 1]} : vector<264x256xf32> to vector<256x256xf32>
      %59 = arith.addf %57, %58 : vector<256x256xf32>
      %c0_39 = arith.constant 0 : index
      %c0_40 = arith.constant 0 : index
      %60 = vector.load %arg9[%c0_39, %c0_40] : memref<256x256xf32, #tpu.memory_space<vmem>>, vector<256x256xf32>
      tpu.vector_store %arg9[%c0_39, %c0_40], %59 {strides = array<i32>} : memref<256x256xf32, #tpu.memory_space<vmem>>, vector<256x256xf32>,
    } else {
    }
    %c1_i32_19 = arith.constant 1 : i32
    %36 = arith.addi %25, %c1_i32_19 : i32
    %37 = arith.index_cast %36 : i32 to index
    %c0_20 = arith.constant 0 : index
    %c0_21 = arith.constant 0 : index
    %38 = vector.load %arg3[%37, %c0_20, %c0_21] : memref<9x128x256xbf16, #tpu.memory_space<vmem>>, vector<1x128x256xbf16>
    %39 = vector.shape_cast %38 : vector<1x128x256xbf16> to vector<128x256xbf16>
    %cst_22 = arith.constant dense<0.000000e+00> : vector<264x256xf32>
    %40 = tpu.matmul %24, %39, %cst_22 {dimension_numbers = #tpu.dot_dimension_numbers<[1], [0], [0], [1], [0, 0, 1, 1], [], []>} : vector<264x128xbf16>, vector<128x256xbf16>, vector<264x256xf32> -> vector<264x256xf32>
    %c0_23 = arith.constant 0 : index
    %c0_24 = arith.constant 0 : index
    %41 = vector.load %arg9[%c0_23, %c0_24] : memref<256x256xf32, #tpu.memory_space<vmem>>, vector<256x256xf32>
    %42 = vector.extract_strided_slice %40 {offsets = [1, 0], sizes = [256, 256], strides = [1, 1]} : vector<264x256xf32> to vector<256x256xf32>
    %43 = arith.addf %41, %42 : vector<256x256xf32>
    %c0_25 = arith.constant 0 : index
    %c0_26 = arith.constant 0 : index
    %44 = vector.load %arg9[%c0_25, %c0_26] : memref<256x256xf32, #tpu.memory_space<vmem>>, vector<256x256xf32>
    tpu.vector_store %arg9[%c0_25, %c0_26], %43 {strides = array<i32>} : memref<256x256xf32, #tpu.memory_space<vmem>>, vector<256x256xf32>,
    %c2_i32_27 = arith.constant 2 : i32
    %45 = arith.addi %25, %c2_i32_27 : i32
    %46 = arith.index_cast %45 : i32 to index
    %c0_28 = arith.constant 0 : index
    %c0_29 = arith.constant 0 : index
    %47 = vector.load %arg3[%46, %c0_28, %c0_29] : memref<9x128x256xbf16, #tpu.memory_space<vmem>>, vector<1x128x256xbf16>
    %48 = vector.shape_cast %47 : vector<1x128x256xbf16> to vector<128x256xbf16>
    %cst_30 = arith.constant dense<0.000000e+00> : vector<264x256xf32>
    %49 = tpu.matmul %24, %48, %cst_30 {dimension_numbers = #tpu.dot_dimension_numbers<[1], [0], [0], [1], [0, 0, 1, 1], [], []>} : vector<264x128xbf16>, vector<128x256xbf16>, vector<264x256xf32> -> vector<264x256xf32>
    %c0_31 = arith.constant 0 : index
    %c0_32 = arith.constant 0 : index
    %50 = vector.load %arg9[%c0_31, %c0_32] : memref<256x256xf32, #tpu.memory_space<vmem>>, vector<256x256xf32>
    %51 = vector.extract_strided_slice %49 {offsets = [2, 0], sizes = [256, 256], strides = [1, 1]} : vector<264x256xf32> to vector<256x256xf32>
    %52 = arith.addf %50, %51 : vector<256x256xf32>
    %c0_33 = arith.constant 0 : index
    %c0_34 = arith.constant 0 : index
    %53 = vector.load %arg9[%c0_33, %c0_34] : memref<256x256xf32, #tpu.memory_space<vmem>>, vector<256x256xf32>
    tpu.vector_store %arg9[%c0_33, %c0_34], %52 {strides = array<i32>} : memref<256x256xf32, #tpu.memory_space<vmem>>, vector<256x256xf32>,
    %c2_i32_35 = arith.constant 2 : i32
    %54 = arith.cmpi eq, %arg1, %c2_i32_35 : i32
    %55 = arith.extui %54 : i1 to i32
    %c0_i32_36 = arith.constant 0 : i32
    %56 = arith.cmpi ne, %55, %c0_i32_36 : i32
    scf.if %56 {
      %c0_37 = arith.constant 0 : index
      %c0_38 = arith.constant 0 : index
      %57 = vector.load %arg9[%c0_37, %c0_38] : memref<256x256xf32, #tpu.memory_space<vmem>>, vector<256x256xf32>
      %c0_39 = arith.constant 0 : index
      %c0_40 = arith.constant 0 : index
      %58 = vector.load %arg4[%c0_39, %c0_40] : memref<1x256xf32, #tpu.memory_space<vmem>>, vector<1x256xf32>
      %59 = vector.broadcast %58 : vector<1x256xf32> to vector<256x256xf32>
      %60 = arith.addf %57, %59 : vector<256x256xf32>
      %cst_41 = arith.constant 0.000000e+00 : f32
      %61 = vector.broadcast %cst_41 : f32 to vector<256x256xf32>
      %62 = arith.maximumf %60, %61 : vector<256x256xf32>
      %63 = arith.truncf %62 : vector<256x256xf32> to vector<256x256xbf16>
      %c0_42 = arith.constant 0 : index
      %c0_43 = arith.constant 0 : index
      %64 = vector.load %arg5[%c0_42, %c0_43] : memref<256x128xbf16, #tpu.memory_space<vmem>>, vector<256x128xbf16>
      %cst_44 = arith.constant dense<0.000000e+00> : vector<256x128xf32>
      %65 = tpu.matmul %63, %64, %cst_44 {dimension_numbers = #tpu.dot_dimension_numbers<[1], [0], [0], [1], [0, 0, 1, 1], [], []>} : vector<256x256xbf16>, vector<256x128xbf16>, vector<256x128xf32> -> vector<256x128xf32>
      %c0_45 = arith.constant 0 : index
      %c0_46 = arith.constant 0 : index
      %66 = vector.load %arg6[%c0_45, %c0_46] : memref<1x128xf32, #tpu.memory_space<vmem>>, vector<1x128xf32>
      %67 = vector.broadcast %66 : vector<1x128xf32> to vector<256x128xf32>
      %68 = arith.addf %65, %67 : vector<256x128xf32>
      %c0_47 = arith.constant 0 : index
      %c0_48 = arith.constant 0 : index
      %69 = vector.load %arg7[%c0_47, %c0_48] : memref<256x128xf32, #tpu.memory_space<vmem>>, vector<256x128xf32>
      tpu.vector_store %arg7[%c0_47, %c0_48], %68 {strides = array<i32>} : memref<256x128xf32, #tpu.memory_space<vmem>>, vector<256x128xf32>,
    } else {
    }
    return
  }
  func.func @transform_1(%arg0: i32, %arg1: i32) -> (i32, i32, i32) {
    %c0_i32 = arith.constant 0 : i32
    %c0_i32_0 = arith.constant 0 : i32
    %c0_i32_1 = arith.constant 0 : i32
    %c0_i32_2 = arith.constant 0 : i32
    return %c0_i32, %c0_i32_0, %c0_i32_1 : i32, i32, i32
  }
  func.func @transform_2(%arg0: i32, %arg1: i32) -> (i32, i32) {
    %c0_i32 = arith.constant 0 : i32
    %c0_i32_0 = arith.constant 0 : i32
    %c0_i32_1 = arith.constant 0 : i32
    return %c0_i32, %c0_i32_0 : i32, i32
  }
  func.func @transform_3(%arg0: i32, %arg1: i32) -> (i32, i32) {
    %c0_i32 = arith.constant 0 : i32
    %c0_i32_0 = arith.constant 0 : i32
    %c0_i32_1 = arith.constant 0 : i32
    return %c0_i32, %c0_i32_0 : i32, i32
  }
  func.func @transform_4(%arg0: i32, %arg1: i32) -> (i32, i32) {
    %c0_i32 = arith.constant 0 : i32
    %c0_i32_0 = arith.constant 0 : i32
    %c0_i32_1 = arith.constant 0 : i32
    return %c0_i32, %c0_i32_0 : i32, i32
  }
  func.func @transform_5(%arg0: i32, %arg1: i32) -> (i32, i32) {
    %c0_i32 = arith.constant 0 : i32
    %c0_i32_0 = arith.constant 0 : i32
    return %arg0, %c0_i32 : i32, i32
  }
}

</mosaic_0001>

<llo_original>
// kernel: aux_loss_forward.1
$region0: #{aux_loss_forward.1}
  #allocation0 [shape = 'u32[]', space=smem, size = 0x4, offset = 0x4, fixed_abs, tag = 'smem constant byte address 0x4 - core index']
  #allocation1 [shape = 'u32[144,128]{1,0:T(1,128)}', space=vmem, size = 0x12000, scoped, tag = 'internal scratch']
  #allocation2 [shape = 'bf16[2,264,128]{2,1,0:T(8,128)(2,1)}', space=vmem, size = 0x21000, scoped, tag = 'scratch operand']
  #allocation3 [shape = 'f32[256,256]{1,0:T(8,128)}', space=vmem, size = 0x40000, scoped, tag = 'scratch operand']
  #allocation4 [shape = 's32[2]{0}', space=sflag, size = 0x8, scoped, tag = 'scratch operand']
  #allocation5 [shape = 's32[]', space=sflag, size = 0x4, offset = 0, fixed_abs, tag = 'sflag constant byte address 0x0 - dummy sync flag']
  #allocation6 [shape = 's32[]', space=sflag, size = 0x4, offset = 0, fixed_abs, tag = 'sflag constant byte address 0x0 - dummy sync flag']
  %s0 = inlined_call_operand.vmem [shape: bf16[552,128], index: 0, kind: input, shape index: {}]
  %s1 = inlined_call_operand.vmem [shape: bf16[9,128,256], index: 1, kind: input, shape index: {}]
  %s2 = inlined_call_operand.vmem [shape: f32[1,256], index: 2, kind: input, shape index: {}]
  %s3 = inlined_call_operand.vmem [shape: bf16[256,128], index: 3, kind: input, shape index: {}]
  %s4 = inlined_call_operand.vmem [shape: f32[1,128], index: 4, kind: input, shape index: {}]
  %s5 = inlined_call_operand.vmem [shape: f32[512,128], index: 5, kind: output, shape index: {}]
  %s6 = sld [smem:[#allocation0]]
  $region143: #{aux_loss_forward.1} parent=0
    _
  %s8 = ssub.s32 1, %s6
  %s9 = scalar_select 0, %s8, %s6
  loop: start=0, step=1, limit=8
  $region2: #{aux_loss_forward.1} parent=0 // loop_pre_header
    _
  $region3: #{aux_loss_forward.1} parent=0 // loop_header
    %s11 = sphi 0, %s15
    %p12 = scmp.ge.s32.totalorder %s11, 8
    %s18 = sphi 0, %s30
    %s19 = sphi 0, %s26
    %s20 = sphi 0, %s18
    %s21 = sphi 0, %s19
    %s22 = sphi 0, %s20
    %s23 = sphi 0, %s21
    %s31 = sphi 0, %s31
    %s33 = sphi 0, %s31
    %s34 = sphi 0, %s33
    %s48 = sphi 0, %s34
    %s52 = sphi 0, %s52
    %s54 = sphi 0, %s52
    %s55 = sphi 0, %s54
    %s69 = sphi 0, %s55
    %s73 = sphi 0, %s73
    %s75 = sphi 0, %s73
    %s76 = sphi 0, %s75
    %s90 = sphi 0, %s76
    %s94 = sphi 0, %s94
    %s96 = sphi 0, %s94
    %s97 = sphi 0, %s96
    %s111 = sphi 0, %s97
    %s117 = sphi 0, %s119
    %s120 = sphi 0, %s117
    %s121 = sphi 0, %s120
    %s137 = sphi 0, %s121
  $region4: #{aux_loss_forward.1} parent=0 // loop_header_branch
    %14 = sbr.rel (%p12) target = $region8
  $region5: #{aux_loss_forward.1} parent=0 // loop_body
    %s16 = ssub.s32 %s11, 1
    %s17 = ssub.s32 %s11, 2
    %s24 = sadd.s32 1, %s19
    %p25 = scmp.ge.s32.totalorder %s24, 3
    %s26 = scalar_select %p25, 0, %s24
    %s27 = sadd.s32 1, %s18
    %s28 = scalar_select %p25, %s27, %s18
    %p29 = scmp.ge.s32.totalorder %s28, 2
    %s30 = scalar_select %p29, 0, %s28
    %s32 = sadd.s32 %s31, 1
    %p35 = scmp.eq.s32.totalorder %s11, 5
    %p36 = scmp.ne.s32.totalorder %s31, %s33
    %p37 = scmp.eq.s32.totalorder %s11, 0
    %p38 = por %p36, %p37
    %p39 = scmp.ne.s32.totalorder %s31, %s33
    %p40 = scmp.eq.s32.totalorder %s16, 5
    %p41 = por %p39, %p40
    %p42 = scmp.ne.s32.totalorder %s33, %s34
    %p43 = scmp.eq.s32.totalorder %s16, 0
    %p44 = por %p42, %p43
    %p45 = scmp.ne.s32.totalorder %s33, %s34
    %p46 = scmp.eq.s32.totalorder %s17, 5
    %p47 = por %p45, %p46
    %p49 = scmp.ne.s32.totalorder %s34, %s48
    %p50 = scmp.eq.s32.totalorder %s17, 0
    %p51 = por %p49, %p50
    %s53 = sadd.s32 %s52, 1
    %p56 = scmp.eq.s32.totalorder %s11, 5
    %p57 = scmp.ne.s32.totalorder %s52, %s54
    %p58 = scmp.eq.s32.totalorder %s11, 0
    %p59 = por %p57, %p58
    %p60 = scmp.ne.s32.totalorder %s52, %s54
    %p61 = scmp.eq.s32.totalorder %s16, 5
    %p62 = por %p60, %p61
    %p63 = scmp.ne.s32.totalorder %s54, %s55
    %p64 = scmp.eq.s32.totalorder %s16, 0
    %p65 = por %p63, %p64
    %p66 = scmp.ne.s32.totalorder %s54, %s55
    %p67 = scmp.eq.s32.totalorder %s17, 5
    %p68 = por %p66, %p67
    %p70 = scmp.ne.s32.totalorder %s55, %s69
    %p71 = scmp.eq.s32.totalorder %s17, 0
    %p72 = por %p70, %p71
    %s74 = sadd.s32 %s73, 1
    %p77 = scmp.eq.s32.totalorder %s11, 5
    %p78 = scmp.ne.s32.totalorder %s73, %s75
    %p79 = scmp.eq.s32.totalorder %s11, 0
    %p80 = por %p78, %p79
    %p81 = scmp.ne.s32.totalorder %s73, %s75
    %p82 = scmp.eq.s32.totalorder %s16, 5
    %p83 = por %p81, %p82
    %p84 = scmp.ne.s32.totalorder %s75, %s76
    %p85 = scmp.eq.s32.totalorder %s16, 0
    %p86 = por %p84, %p85
    %p87 = scmp.ne.s32.totalorder %s75, %s76
    %p88 = scmp.eq.s32.totalorder %s17, 5
    %p89 = por %p87, %p88
    %p91 = scmp.ne.s32.totalorder %s76, %s90
    %p92 = scmp.eq.s32.totalorder %s17, 0
    %p93 = por %p91, %p92
    %s95 = sadd.s32 %s94, 1
    %p98 = scmp.eq.s32.totalorder %s11, 5
    %p99 = scmp.ne.s32.totalorder %s94, %s96
    %p100 = scmp.eq.s32.totalorder %s11, 0
    %p101 = por %p99, %p100
    %p102 = scmp.ne.s32.totalorder %s94, %s96
    %p103 = scmp.eq.s32.totalorder %s16, 5
    %p104 = por %p102, %p103
    %p105 = scmp.ne.s32.totalorder %s96, %s97
    %p106 = scmp.eq.s32.totalorder %s16, 0
    %p107 = por %p105, %p106
    %p108 = scmp.ne.s32.totalorder %s96, %s97
    %p109 = scmp.eq.s32.totalorder %s17, 5
    %p110 = por %p108, %p109
    %p112 = scmp.ne.s32.totalorder %s97, %s111
    %p113 = scmp.eq.s32.totalorder %s17, 0
    %p114 = por %p112, %p113
    %s115 = ssub.s32 %s18, %s30
    %p116 = scmp.eq.s32.totalorder %s115, 0
    %s118 = sadd.s32 %s117, 1
    %s119 = scalar_select %p116, %s117, %s118
    %p122 = pneg %p116
    %p123 = scmp.eq.s32.totalorder %s11, 5
    %p124 = por %p122, %p123
    %p125 = scmp.ne.s32.totalorder %s117, %s120
    %p126 = scmp.eq.s32.totalorder %s11, 0
    %p127 = por %p125, %p126
    %p128 = scmp.ne.s32.totalorder %s117, %s120
    %p129 = scmp.eq.s32.totalorder %s16, 5
    %p130 = por %p128, %p129
    %p131 = scmp.ne.s32.totalorder %s120, %s121
    %p132 = scmp.eq.s32.totalorder %s16, 0
    %p133 = por %p131, %p132
    %p134 = scmp.ne.s32.totalorder %s120, %s121
    %p135 = scmp.eq.s32.totalorder %s17, 5
    %p136 = por %p134, %p135
    %p138 = scmp.ne.s32.totalorder %s121, %s137
    %p139 = scmp.eq.s32.totalorder %s17, 0
    %p140 = por %p138, %p139
    %p141 = scmp.le.s32.totalorder 1, %s11
    %p142 = scmp.lt.s32.totalorder %s11, 7
    %p143 = pnand %p141, %p142
    %p144 = pneg %p143
    // Predicated region
    $region9: #{aux_loss_forward.1} parent=5 // pred_check
      _
    $region10: #{aux_loss_forward.1} parent=5 // pred_check_branch
      %146 = sbr.rel (%p143) target = $region12
    $region11: #{aux_loss_forward.1} parent=5 // pred_region
      %s147 = ssub.s32 %s11, 1
      // Predicated region
      $region13: #{aux_loss_forward.1} parent=11 // pred_check
        %p148 = pneg %p44
      $region14: #{aux_loss_forward.1} parent=11 // pred_check_branch
        %150 = sbr.rel (%p148) target = $region16
      $region15: #{aux_loss_forward.1} parent=11 // pred_region
        _
      $region16: #{aux_loss_forward.1} parent=11 // pred_fallthru
        _
      // Predicated region
      $region17: #{aux_loss_forward.1} parent=11 // pred_check
        %p151 = pneg %p65
      $region18: #{aux_loss_forward.1} parent=11 // pred_check_branch
        %153 = sbr.rel (%p151) target = $region20
      $region19: #{aux_loss_forward.1} parent=11 // pred_region
        _
      $region20: #{aux_loss_forward.1} parent=11 // pred_fallthru
        _
      // Predicated region
      $region21: #{aux_loss_forward.1} parent=11 // pred_check
        %p154 = pneg %p86
      $region22: #{aux_loss_forward.1} parent=11 // pred_check_branch
        %156 = sbr.rel (%p154) target = $region24
      $region23: #{aux_loss_forward.1} parent=11 // pred_region
        _
      $region24: #{aux_loss_forward.1} parent=11 // pred_fallthru
        _
      // Predicated region
      $region25: #{aux_loss_forward.1} parent=11 // pred_check
        %p157 = pneg %p107
      $region26: #{aux_loss_forward.1} parent=11 // pred_check_branch
        %159 = sbr.rel (%p157) target = $region28
      $region27: #{aux_loss_forward.1} parent=11 // pred_region
        _
      $region28: #{aux_loss_forward.1} parent=11 // pred_fallthru
        _
    $region12: #{aux_loss_forward.1} parent=5 // pred_fallthru
      _
    %p160 = scmp.lt.s32.totalorder %s11, 6
    // Predicated region
    $region29: #{aux_loss_forward.1} parent=5 // pred_check
      %p161 = pneg %p160
    $region30: #{aux_loss_forward.1} parent=5 // pred_check_branch
      %163 = sbr.rel (%p161) target = $region32
    $region31: #{aux_loss_forward.1} parent=5 // pred_region
      _
    $region32: #{aux_loss_forward.1} parent=5 // pred_fallthru
      _
    %p164 = scmp.le.s32.totalorder 1, %s11
    %p165 = scmp.lt.s32.totalorder %s11, 7
    %p166 = pnand %p164, %p165
    %p167 = pneg %p166
    // Predicated region
    $region33: #{aux_loss_forward.1} parent=5 // pred_check
      _
    $region34: #{aux_loss_forward.1} parent=5 // pred_check_branch
      %169 = sbr.rel (%p166) target = $region36
    $region35: #{aux_loss_forward.1} parent=5 // pred_region
      %s170 = ssub.s32 %s11, 1
      %p171 = pneg %p44
      %p172 = pneg %p41
      %p173 = pneg %p65
      %p174 = pneg %p62
      %p175 = pneg %p86
      %p176 = pneg %p83
      %p177 = pneg %p107
      %p178 = pneg %p104
      %p179 = pneg %p133
      %p180 = pneg %p130
      %s181 = smul.u32 32, %s20
      %p182 = scmp.lt.s32.totalorder %s181, 63
      %s183 = scalar_select %p182, %s181, 63
      %s184 = smul.addr %s183, 8
      %s185 = scalar_lea.vmem %s5, %s184
      %s186 = smul.u32 32, %s20
      %p187 = scmp.lt.s32.totalorder %s186, 63
      %s188 = scalar_select %p187, %s186, 63
      %s189 = smul.addr %s188, 8
      %s190 = scalar_lea.vmem %s5, %s189
      %s191 = smul.u32 32, %s20
      %p193 = scmp.lt.s32.totalorder %s21, 0
      %s194 = ssub.s32 0, %s21
      %s195 = scalar_select %p193, %s194, %s21
      %s196 = sand.u32 %s195, 1
      %s197 = ssub.s32 0, %s196
      %s198 = scalar_select %p193, %s197, %s196
      %p199 = scmp.ne.s32.totalorder %s198, 0
      %p200 = scmp.lt.s32.totalorder %s198, 0
      %p201 = pnand %p200, %p199
      %p202 = pneg %p201
      %s203 = sadd.s32 %s198, 2
      %s204 = scalar_select %p202, %s203, %s198
      %p205 = scmp.eq.s32.totalorder %s21, 0
      // Predicated region
      $region37: #{aux_loss_forward.1} parent=35 // pred_check
        %p206 = pneg %p205
      $region38: #{aux_loss_forward.1} parent=35 // pred_check_branch
        %208 = sbr.rel (%p206) target = $region40
      $region39: #{aux_loss_forward.1} parent=35 // pred_region
        %s209 = smul.u32 %s20, 256
        %s210 = sshra.s32 %s209, 3
        %s211 = sand.u32 %s209, 7
        %s212 = smul.addr %s210, 4
        %s213 = scalar_lea.vmem %s0, %s212
        %p215 = scmp.lt.u32.totalorder 132, 8
        %p216 = pneg %p215
        // Predicated region
        $region41: #{aux_loss_forward.1} parent=39 // pred_check
          _
        $region42: #{aux_loss_forward.1} parent=39 // pred_check_branch
          %218 = sbr.rel (%p215) target = $region44
        $region43: #{aux_loss_forward.1} parent=39 // pred_region
          %s234 = sand.u32 132, 7
          %p235 = scmp.eq.s32.totalorder %s234, 0
          %p236 = pneg %p235
          // Predicated region
          $region56: #{aux_loss_forward.1} parent=43 // pred_check
            _
          $region57: #{aux_loss_forward.1} parent=43 // pred_check_branch
            %238 = sbr.rel (%p235) target = $region59
          $region58: #{aux_loss_forward.1} parent=43 // pred_region
            %s239 = sand.u32 132, 7
            %s240 = ssub.s32 132, %s239
            %s241 = scalar_lea.vmem %s213, %s240
            %s242 = ssub.s32 132, %s239
            %s243 = scalar_lea.vmem [#allocation2], %s242
            loop: start=0, step=1, limit=1
            $region60: #{aux_loss_forward.1} parent=58 // loop_pre_header
              _
            $region61: #{aux_loss_forward.1} parent=58 // loop_header
              %s245 = sphi 0, %s249
              %p246 = scmp.ge.s32.totalorder %s245, 1
              %s250 = sphi %s213, %s213
              %s251 = sphi [#allocation2], [#allocation2]
            $region62: #{aux_loss_forward.1} parent=58 // loop_header_branch
              %248 = sbr.rel (%p246) target = $region66
            $region63: #{aux_loss_forward.1} parent=58 // loop_body
              %v252 = vld [vmem:[%s250] sm:$0xff]
              %253 = vst [vmem:[%s251] sm:$0xff] %v252
              %v254 = vld [vmem:[%s250 + $0x8] sm:$0xff]
              %255 = vst [vmem:[%s251 + $0x8] sm:$0xff] %v254
              %v256 = vld [vmem:[%s250 + $0x10] sm:$0xff]
              %257 = vst [vmem:[%s251 + $0x10] sm:$0xff] %v256
              %v258 = vld [vmem:[%s250 + $0x18] sm:$0xff]
              %259 = vst [vmem:[%s251 + $0x18] sm:$0xff] %v258
              %v260 = vld [vmem:[%s250 + $0x20] sm:$0xff]
              %261 = vst [vmem:[%s251 + $0x20] sm:$0xff] %v260
              %v262 = vld [vmem:[%s250 + $0x28] sm:$0xff]
              %263 = vst [vmem:[%s251 + $0x28] sm:$0xff] %v262
              %v264 = vld [vmem:[%s250 + $0x30] sm:$0xff]
              %265 = vst [vmem:[%s251 + $0x30] sm:$0xff] %v264
              %v266 = vld [vmem:[%s250 + $0x38] sm:$0xff]
              %267 = vst [vmem:[%s251 + $0x38] sm:$0xff] %v266
              %v268 = vld [vmem:[%s250 + $0x40] sm:$0xff]
              %269 = vst [vmem:[%s251 + $0x40] sm:$0xff] %v268
              %v270 = vld [vmem:[%s250 + $0x48] sm:$0xff]
              %271 = vst [vmem:[%s251 + $0x48] sm:$0xff] %v270
              %v272 = vld [vmem:[%s250 + $0x50] sm:$0xff]
              %273 = vst [vmem:[%s251 + $0x50] sm:$0xff] %v272
              %v274 = vld [vmem:[%s250 + $0x58] sm:$0xff]
              %275 = vst [vmem:[%s251 + $0x58] sm:$0xff] %v274
              %v276 = vld [vmem:[%s250 + $0x60] sm:$0xff]
              %277 = vst [vmem:[%s251 + $0x60] sm:$0xff] %v276
              %v278 = vld [vmem:[%s250 + $0x68] sm:$0xff]
              %279 = vst [vmem:[%s251 + $0x68] sm:$0xff] %v278
              %v280 = vld [vmem:[%s250 + $0x70] sm:$0xff]
              %281 = vst [vmem:[%s251 + $0x70] sm:$0xff] %v280
              %v282 = vld [vmem:[%s250 + $0x78] sm:$0xff]
              %283 = vst [vmem:[%s251 + $0x78] sm:$0xff] %v282
            $region64: #{aux_loss_forward.1} parent=58 // loop_footer
              %s249 = sadd.s32 1, %s245
            $region65: #{aux_loss_forward.1} parent=58 // loop_footer_branch
              %244 = sbr.rel target = $region61
            $region66: #{aux_loss_forward.1} parent=58 // loop_exit
              _
            %s284 = sshll.u32 1, %s239
            %s285 = ssub.s32 %s284, 1
            loop: start=0, step=1, limit=1
            $region67: #{aux_loss_forward.1} parent=58 // loop_pre_header
              _
            $region68: #{aux_loss_forward.1} parent=58 // loop_header
              %s287 = sphi 0, %s291
              %p288 = scmp.ge.s32.totalorder %s287, 1
              %s292 = sphi %s241, %s241
              %s293 = sphi %s243, %s243
            $region69: #{aux_loss_forward.1} parent=58 // loop_header_branch
              %290 = sbr.rel (%p288) target = $region73
            $region70: #{aux_loss_forward.1} parent=58 // loop_body
              %v294 = vld [vmem:[%s292] sm:%s285]
              %295 = vst [vmem:[%s293] sm:%s285] %v294
            $region71: #{aux_loss_forward.1} parent=58 // loop_footer
              %s291 = sadd.s32 1, %s287
            $region72: #{aux_loss_forward.1} parent=58 // loop_footer_branch
              %286 = sbr.rel target = $region68
            $region73: #{aux_loss_forward.1} parent=58 // loop_exit
              _
          $region59: #{aux_loss_forward.1} parent=43 // pred_fallthru
            _
        $region44: #{aux_loss_forward.1} parent=39 // pred_fallthru
          _
        // Predicated region
        $region45: #{aux_loss_forward.1} parent=39 // pred_check
          %p219 = pneg %p215
        $region46: #{aux_loss_forward.1} parent=39 // pred_check_branch
          %221 = sbr.rel (%p219) target = $region48
        $region47: #{aux_loss_forward.1} parent=39 // pred_region
          %s222 = sshll.u32 1, 132
          %s223 = ssub.s32 %s222, 1
          loop: start=0, step=1, limit=1
          $region49: #{aux_loss_forward.1} parent=47 // loop_pre_header
            _
          $region50: #{aux_loss_forward.1} parent=47 // loop_header
            %s225 = sphi 0, %s229
            %p226 = scmp.ge.s32.totalorder %s225, 1
            %s230 = sphi %s213, %s213
            %s231 = sphi [#allocation2], [#allocation2]
          $region51: #{aux_loss_forward.1} parent=47 // loop_header_branch
            %228 = sbr.rel (%p226) target = $region55
          $region52: #{aux_loss_forward.1} parent=47 // loop_body
            %v232 = vld [vmem:[%s230] sm:%s223]
            %233 = vst [vmem:[%s231] sm:%s223] %v232
          $region53: #{aux_loss_forward.1} parent=47 // loop_footer
            %s229 = sadd.s32 1, %s225
          $region54: #{aux_loss_forward.1} parent=47 // loop_footer_branch
            %224 = sbr.rel target = $region50
          $region55: #{aux_loss_forward.1} parent=47 // loop_exit
            _
        $region48: #{aux_loss_forward.1} parent=39 // pred_fallthru
          _
        // Predicated region
        $region74: #{aux_loss_forward.1} parent=39 // pred_check
          _
        $region75: #{aux_loss_forward.1} parent=39 // pred_check_branch
          %298 = sbr.rel (0) target = $region77
        $region76: #{aux_loss_forward.1} parent=39 // pred_region
          %299 = vsyncadd [#allocation4], 2112
        $region77: #{aux_loss_forward.1} parent=39 // pred_fallthru
          _
      $region40: #{aux_loss_forward.1} parent=35 // pred_fallthru
        _
      %s300 = smul.u32 %s204, 33
      %s301 = smul.addr %s300, 4
      %s302 = scalar_lea.vmem [#allocation2], %s301
      %s303 = scalar_lea.sflag [#allocation4], %s204
      %s304 = smul.u32 4, 33
      %s305 = smul.u32 %s304, 1
      %s306 = sshll.u32 %s305, 4
      %307 = dma.done %s303, %s306
      %s308 = sadd.s32 %s21, 1
      %p309 = scmp.lt.s32.totalorder %s308, 3
      // Predicated region
      $region78: #{aux_loss_forward.1} parent=35 // pred_check
        %p310 = pneg %p309
      $region79: #{aux_loss_forward.1} parent=35 // pred_check_branch
        %312 = sbr.rel (%p310) target = $region81
      $region80: #{aux_loss_forward.1} parent=35 // pred_region
        %s313 = ssub.s32 1, %s204
        %s314 = smul.u32 %s20, 256
        %s315 = smul.u32 %s308, 16
        %s316 = sadd.s32 %s314, %s315
        %s317 = sshra.s32 %s316, 3
        %s318 = sand.u32 %s316, 7
        %s319 = smul.addr %s317, 4
        %s320 = scalar_lea.vmem %s0, %s319
        %s321 = smul.u32 %s313, 33
        %s322 = smul.addr %s321, 4
        %s323 = scalar_lea.vmem [#allocation2], %s322
        %s324 = scalar_lea.sflag [#allocation4], %s313
        %p326 = scmp.lt.u32.totalorder 132, 8
        %p327 = pneg %p326
        // Predicated region
        $region82: #{aux_loss_forward.1} parent=80 // pred_check
          _
        $region83: #{aux_loss_forward.1} parent=80 // pred_check_branch
          %329 = sbr.rel (%p326) target = $region85
        $region84: #{aux_loss_forward.1} parent=80 // pred_region
          %s345 = sand.u32 132, 7
          %p346 = scmp.eq.s32.totalorder %s345, 0
          %p347 = pneg %p346
          // Predicated region
          $region97: #{aux_loss_forward.1} parent=84 // pred_check
            _
          $region98: #{aux_loss_forward.1} parent=84 // pred_check_branch
            %349 = sbr.rel (%p346) target = $region100
          $region99: #{aux_loss_forward.1} parent=84 // pred_region
            %s350 = sand.u32 132, 7
            %s351 = ssub.s32 132, %s350
            %s352 = scalar_lea.vmem %s320, %s351
            %s353 = ssub.s32 132, %s350
            %s354 = scalar_lea.vmem %s323, %s353 [#allocation2]
            loop: start=0, step=1, limit=1
            $region101: #{aux_loss_forward.1} parent=99 // loop_pre_header
              _
            $region102: #{aux_loss_forward.1} parent=99 // loop_header
              %s356 = sphi 0, %s360
              %p357 = scmp.ge.s32.totalorder %s356, 1
              %s361 = sphi %s320, %s320
              %s362 = sphi %s323, %s323
            $region103: #{aux_loss_forward.1} parent=99 // loop_header_branch
              %359 = sbr.rel (%p357) target = $region107
            $region104: #{aux_loss_forward.1} parent=99 // loop_body
              %v363 = vld [vmem:[%s361] sm:$0xff]
              %364 = vst [vmem:[%s362] sm:$0xff] %v363
              %v365 = vld [vmem:[%s361 + $0x8] sm:$0xff]
              %366 = vst [vmem:[%s362 + $0x8] sm:$0xff] %v365
              %v367 = vld [vmem:[%s361 + $0x10] sm:$0xff]
              %368 = vst [vmem:[%s362 + $0x10] sm:$0xff] %v367
              %v369 = vld [vmem:[%s361 + $0x18] sm:$0xff]
              %370 = vst [vmem:[%s362 + $0x18] sm:$0xff] %v369
              %v371 = vld [vmem:[%s361 + $0x20] sm:$0xff]
              %372 = vst [vmem:[%s362 + $0x20] sm:$0xff] %v371
              %v373 = vld [vmem:[%s361 + $0x28] sm:$0xff]
              %374 = vst [vmem:[%s362 + $0x28] sm:$0xff] %v373
              %v375 = vld [vmem:[%s361 + $0x30] sm:$0xff]
              %376 = vst [vmem:[%s362 + $0x30] sm:$0xff] %v375
              %v377 = vld [vmem:[%s361 + $0x38] sm:$0xff]
              %378 = vst [vmem:[%s362 + $0x38] sm:$0xff] %v377
              %v379 = vld [vmem:[%s361 + $0x40] sm:$0xff]
              %380 = vst [vmem:[%s362 + $0x40] sm:$0xff] %v379
              %v381 = vld [vmem:[%s361 + $0x48] sm:$0xff]
              %382 = vst [vmem:[%s362 + $0x48] sm:$0xff] %v381
              %v383 = vld [vmem:[%s361 + $0x50] sm:$0xff]
              %384 = vst [vmem:[%s362 + $0x50] sm:$0xff] %v383
              %v385 = vld [vmem:[%s361 + $0x58] sm:$0xff]
              %386 = vst [vmem:[%s362 + $0x58] sm:$0xff] %v385
              %v387 = vld [vmem:[%s361 + $0x60] sm:$0xff]
              %388 = vst [vmem:[%s362 + $0x60] sm:$0xff] %v387
              %v389 = vld [vmem:[%s361 + $0x68] sm:$0xff]
              %390 = vst [vmem:[%s362 + $0x68] sm:$0xff] %v389
              %v391 = vld [vmem:[%s361 + $0x70] sm:$0xff]
              %392 = vst [vmem:[%s362 + $0x70] sm:$0xff] %v391
              %v393 = vld [vmem:[%s361 + $0x78] sm:$0xff]
              %394 = vst [vmem:[%s362 + $0x78] sm:$0xff] %v393
            $region105: #{aux_loss_forward.1} parent=99 // loop_footer
              %s360 = sadd.s32 1, %s356
            $region106: #{aux_loss_forward.1} parent=99 // loop_footer_branch
              %355 = sbr.rel target = $region102
            $region107: #{aux_loss_forward.1} parent=99 // loop_exit
              _
            %s395 = sshll.u32 1, %s350
            %s396 = ssub.s32 %s395, 1
            loop: start=0, step=1, limit=1
            $region108: #{aux_loss_forward.1} parent=99 // loop_pre_header
              _
            $region109: #{aux_loss_forward.1} parent=99 // loop_header
              %s398 = sphi 0, %s402
              %p399 = scmp.ge.s32.totalorder %s398, 1
              %s403 = sphi %s352, %s352
              %s404 = sphi %s354, %s354
            $region110: #{aux_loss_forward.1} parent=99 // loop_header_branch
              %401 = sbr.rel (%p399) target = $region114
            $region111: #{aux_loss_forward.1} parent=99 // loop_body
              %v405 = vld [vmem:[%s403] sm:%s396]
              %406 = vst [vmem:[%s404] sm:%s396] %v405
            $region112: #{aux_loss_forward.1} parent=99 // loop_footer
              %s402 = sadd.s32 1, %s398
            $region113: #{aux_loss_forward.1} parent=99 // loop_footer_branch
              %397 = sbr.rel target = $region109
            $region114: #{aux_loss_forward.1} parent=99 // loop_exit
              _
          $region100: #{aux_loss_forward.1} parent=84 // pred_fallthru
            _
        $region85: #{aux_loss_forward.1} parent=80 // pred_fallthru
          _
        // Predicated region
        $region86: #{aux_loss_forward.1} parent=80 // pred_check
          %p330 = pneg %p326
        $region87: #{aux_loss_forward.1} parent=80 // pred_check_branch
          %332 = sbr.rel (%p330) target = $region89
        $region88: #{aux_loss_forward.1} parent=80 // pred_region
          %s333 = sshll.u32 1, 132
          %s334 = ssub.s32 %s333, 1
          loop: start=0, step=1, limit=1
          $region90: #{aux_loss_forward.1} parent=88 // loop_pre_header
            _
          $region91: #{aux_loss_forward.1} parent=88 // loop_header
            %s336 = sphi 0, %s340
            %p337 = scmp.ge.s32.totalorder %s336, 1
            %s341 = sphi %s320, %s320
            %s342 = sphi %s323, %s323
          $region92: #{aux_loss_forward.1} parent=88 // loop_header_branch
            %339 = sbr.rel (%p337) target = $region96
          $region93: #{aux_loss_forward.1} parent=88 // loop_body
            %v343 = vld [vmem:[%s341] sm:%s334]
            %344 = vst [vmem:[%s342] sm:%s334] %v343
          $region94: #{aux_loss_forward.1} parent=88 // loop_footer
            %s340 = sadd.s32 1, %s336
          $region95: #{aux_loss_forward.1} parent=88 // loop_footer_branch
            %335 = sbr.rel target = $region91
          $region96: #{aux_loss_forward.1} parent=88 // loop_exit
            _
        $region89: #{aux_loss_forward.1} parent=80 // pred_fallthru
          _
        // Predicated region
        $region115: #{aux_loss_forward.1} parent=80 // pred_check
          _
        $region116: #{aux_loss_forward.1} parent=80 // pred_check_branch
          %409 = sbr.rel (0) target = $region118
        $region117: #{aux_loss_forward.1} parent=80 // pred_region
          %410 = vsyncadd %s324, 2112
        $region118: #{aux_loss_forward.1} parent=80 // pred_fallthru
          _
      $region81: #{aux_loss_forward.1} parent=35 // pred_fallthru
        _
      %v411 = vld [vmem:[%s302] sm:$0xf]
      %v412 = vld [vmem:[%s302 + $0x4] sm:$0xf]
      %v413 = vld [vmem:[%s302 + $0x8] sm:$0xf]
      %v414 = vld [vmem:[%s302 + $0xc] sm:$0xf]
      %v415 = vld [vmem:[%s302 + $0x10] sm:$0xf]
      %v416 = vld [vmem:[%s302 + $0x14] sm:$0xf]
      %v417 = vld [vmem:[%s302 + $0x18] sm:$0xf]
      %v418 = vld [vmem:[%s302 + $0x1c] sm:$0xf]
      %v419 = vld [vmem:[%s302 + $0x20] sm:$0xf]
      %v420 = vld [vmem:[%s302 + $0x24] sm:$0xf]
      %v421 = vld [vmem:[%s302 + $0x28] sm:$0xf]
      %v422 = vld [vmem:[%s302 + $0x2c] sm:$0xf]
      %v423 = vld [vmem:[%s302 + $0x30] sm:$0xf]
      %v424 = vld [vmem:[%s302 + $0x34] sm:$0xf]
      %v425 = vld [vmem:[%s302 + $0x38] sm:$0xf]
      %v426 = vld [vmem:[%s302 + $0x3c] sm:$0xf]
      %v427 = vld [vmem:[%s302 + $0x40] sm:$0xf]
      %v428 = vld [vmem:[%s302 + $0x44] sm:$0xf]
      %v429 = vld [vmem:[%s302 + $0x48] sm:$0xf]
      %v430 = vld [vmem:[%s302 + $0x4c] sm:$0xf]
      %v431 = vld [vmem:[%s302 + $0x50] sm:$0xf]
      %v432 = vld [vmem:[%s302 + $0x54] sm:$0xf]
      %v433 = vld [vmem:[%s302 + $0x58] sm:$0xf]
      %v434 = vld [vmem:[%s302 + $0x5c] sm:$0xf]
      %v435 = vld [vmem:[%s302 + $0x60] sm:$0xf]
      %v436 = vld [vmem:[%s302 + $0x64] sm:$0xf]
      %v437 = vld [vmem:[%s302 + $0x68] sm:$0xf]
      %v438 = vld [vmem:[%s302 + $0x6c] sm:$0xf]
      %v439 = vld [vmem:[%s302 + $0x70] sm:$0xf]
      %v440 = vld [vmem:[%s302 + $0x74] sm:$0xf]
      %v441 = vld [vmem:[%s302 + $0x78] sm:$0xf]
      %v442 = vld [vmem:[%s302 + $0x7c] sm:$0xf]
      %v443 = vld [vmem:[%s302 + $0x80] sm:$0xf]
      %s444 = smul.u32 %s21, 3
      %s445 = smul.u32 %s444, 32
      %s446 = smul.addr %s445, 4
      %s447 = scalar_lea.vmem %s1, %s446
      %v448 = vld [vmem:[%s447] sm:$0xff]
      %v449 = vld [vmem:[%s447 + $0x8] sm:$0xff]
      %v450 = vld [vmem:[%s447 + $0x10] sm:$0xff]
      %v451 = vld [vmem:[%s447 + $0x18] sm:$0xff]
      %v452 = vld [vmem:[%s447 + $0x20] sm:$0xff]
      %v453 = vld [vmem:[%s447 + $0x28] sm:$0xff]
      %v454 = vld [vmem:[%s447 + $0x30] sm:$0xff]
      %v455 = vld [vmem:[%s447 + $0x38] sm:$0xff]
      %v456 = vld [vmem:[%s447 + $0x40] sm:$0xff]
      %v457 = vld [vmem:[%s447 + $0x48] sm:$0xff]
      %v458 = vld [vmem:[%s447 + $0x50] sm:$0xff]
      %v459 = vld [vmem:[%s447 + $0x58] sm:$0xff]
      %v460 = vld [vmem:[%s447 + $0x60] sm:$0xff]
      %v461 = vld [vmem:[%s447 + $0x68] sm:$0xff]
      %v462 = vld [vmem:[%s447 + $0x70] sm:$0xff]
      %v463 = vld [vmem:[%s447 + $0x78] sm:$0xff]
      %v497 = vunpack.c.l.b16 %v411
      %v498 = vunpack.c.l.b16 %v412
      %v499 = vunpack.c.l.b16 %v413
      %v500 = vunpack.c.l.b16 %v414
      %v501 = vunpack.c.l.b16 %v415
      %v502 = vunpack.c.l.b16 %v416
      %v503 = vunpack.c.l.b16 %v417
      %v504 = vunpack.c.l.b16 %v418
      %v505 = vunpack.c.l.b16 %v419
      %v506 = vunpack.c.l.b16 %v420
      %v507 = vunpack.c.l.b16 %v421
      %v508 = vunpack.c.l.b16 %v422
      %v509 = vunpack.c.l.b16 %v423
      %v510 = vunpack.c.l.b16 %v424
      %v511 = vunpack.c.l.b16 %v425
      %v512 = vunpack.c.l.b16 %v426
      %v513 = vunpack.c.l.b16 %v427
      %v514 = vunpack.c.l.b16 %v428
      %v515 = vunpack.c.l.b16 %v429
      %v516 = vunpack.c.l.b16 %v430
      %v517 = vunpack.c.l.b16 %v431
      %v518 = vunpack.c.l.b16 %v432
      %v519 = vunpack.c.l.b16 %v433
      %v520 = vunpack.c.l.b16 %v434
      %v521 = vunpack.c.l.b16 %v435
      %v522 = vunpack.c.l.b16 %v436
      %v523 = vunpack.c.l.b16 %v437
      %v524 = vunpack.c.l.b16 %v438
      %v525 = vunpack.c.l.b16 %v439
      %v526 = vunpack.c.l.b16 %v440
      %v527 = vunpack.c.l.b16 %v441
      %v528 = vunpack.c.l.b16 %v442
      %v529 = vunpack.c.l.b16 %v443
      %v530 = vpack.c.b16 %v498, %v497
      %v531 = vpack.c.b16 %v500, %v499
      %v532 = vpack.c.b16 %v502, %v501
      %v533 = vpack.c.b16 %v504, %v503
      %v534 = vpack.c.b16 %v506, %v505
      %v535 = vpack.c.b16 %v508, %v507
      %v536 = vpack.c.b16 %v510, %v509
      %v537 = vpack.c.b16 %v512, %v511
      %v538 = vpack.c.b16 %v514, %v513
      %v539 = vpack.c.b16 %v516, %v515
      %v540 = vpack.c.b16 %v518, %v517
      %v541 = vpack.c.b16 %v520, %v519
      %v542 = vpack.c.b16 %v522, %v521
      %v543 = vpack.c.b16 %v524, %v523
      %v544 = vpack.c.b16 %v526, %v525
      %v545 = vpack.c.b16 %v528, %v527
      %v546 = vpack.c.b16 %v529, %v529
      %v580 = vunpack.c.l.b16 %v448
      %v581 = vunpack.c.h.b16 %v448
      %v582 = vunpack.c.l.b16 %v449
      %v583 = vunpack.c.h.b16 %v449
      %v584 = vunpack.c.l.b16 %v450
      %v585 = vunpack.c.h.b16 %v450
      %v586 = vunpack.c.l.b16 %v451
      %v587 = vunpack.c.h.b16 %v451
      %v588 = vunpack.c.l.b16 %v452
      %v589 = vunpack.c.h.b16 %v452
      %v590 = vunpack.c.l.b16 %v453
      %v591 = vunpack.c.h.b16 %v453
      %v592 = vunpack.c.l.b16 %v454
      %v593 = vunpack.c.h.b16 %v454
      %v594 = vunpack.c.l.b16 %v455
      %v595 = vunpack.c.h.b16 %v455
      %v596 = vunpack.c.l.b16 %v456
      %v597 = vunpack.c.h.b16 %v456
      %v598 = vunpack.c.l.b16 %v457
      %v599 = vunpack.c.h.b16 %v457
      %v600 = vunpack.c.l.b16 %v458
      %v601 = vunpack.c.h.b16 %v458
      %v602 = vunpack.c.l.b16 %v459
      %v603 = vunpack.c.h.b16 %v459
      %v604 = vunpack.c.l.b16 %v460
      %v605 = vunpack.c.h.b16 %v460
      %v606 = vunpack.c.l.b16 %v461
      %v607 = vunpack.c.h.b16 %v461
      %v608 = vunpack.c.l.b16 %v462
      %v609 = vunpack.c.h.b16 %v462
      %v610 = vunpack.c.l.b16 %v463
      %v611 = vunpack.c.h.b16 %v463
      %v612 = vpack.c.b16 %v582, %v580
      %v613 = vpack.c.b16 %v583, %v581
      %v614 = vpack.c.b16 %v586, %v584
      %v615 = vpack.c.b16 %v587, %v585
      %v616 = vpack.c.b16 %v590, %v588
      %v617 = vpack.c.b16 %v591, %v589
      %v618 = vpack.c.b16 %v594, %v592
      %v619 = vpack.c.b16 %v595, %v593
      %v620 = vpack.c.b16 %v598, %v596
      %v621 = vpack.c.b16 %v599, %v597
      %v622 = vpack.c.b16 %v602, %v600
      %v623 = vpack.c.b16 %v603, %v601
      %v624 = vpack.c.b16 %v606, %v604
      %v625 = vpack.c.b16 %v607, %v605
      %v626 = vpack.c.b16 %v610, %v608
      %v627 = vpack.c.b16 %v611, %v609
      %644 = vmatprep.subr.bf16.mxu0 %v627
      %645 = vmatpush1.bf16.msra.mxu0 %v626
      %646 = vmatprep.subr.bf16.mxu0 %v625
      %647 = vmatpush1.bf16.msra.mxu0 %v624
      %648 = vmatprep.subr.bf16.mxu0 %v623
      %649 = vmatpush1.bf16.msra.mxu0 %v622
      %650 = vmatprep.subr.bf16.mxu0 %v621
      %651 = vmatpush1.bf16.msra.mxu0 %v620
      %652 = vmatprep.subr.bf16.mxu0 %v619
      %653 = vmatpush1.bf16.msra.mxu0 %v618
      %654 = vmatprep.subr.bf16.mxu0 %v617
      %655 = vmatpush1.bf16.msra.mxu0 %v616
      %656 = vmatprep.subr.bf16.mxu0 %v615
      %657 = vmatpush1.bf16.msra.mxu0 %v614
      %658 = vmatprep.subr.bf16.mxu0 %v613
      %659 = vmatpush1.bf16.msra.mxu0 %v612
      %660 = vmatprep.subr.bf16.mxu0 0
      %661 = vmatpush2.bf16.msra.mxu0 0
      %662 = vmatprep.subr.bf16.mxu0 0
      %663 = vmatpush2.bf16.msra.mxu0 0
      %664 = vmatprep.subr.bf16.mxu0 0
      %665 = vmatpush2.bf16.msra.mxu0 0
      %666 = vmatprep.subr.bf16.mxu0 0
      %667 = vmatpush2.bf16.msra.mxu0 0
      %668 = vmatprep.subr.bf16.mxu0 0
      %669 = vmatpush2.bf16.msra.mxu0 0
      %670 = vmatprep.subr.bf16.mxu0 0
      %671 = vmatpush2.bf16.msra.mxu0 0
      %672 = vmatprep.subr.bf16.mxu0 0
      %673 = vmatpush2.bf16.msra.mxu0 0
      %674 = vmatprep.subr.bf16.mxu0 0
      %675 = vmatpush2.bf16.msra.mxu0 0
      %676 = vmatprep.mubr.bf16.mxu0 0
      %677 = vmatmul.mubr.bf16.gmra.mxu0 %v530
      %v678 = vpop.f32.mrf.mxu0
      %v679 = vadd.f32 0.0, %v678
      %v680 = vpop.f32.mrf.mxu0
      %v681 = vadd.f32 0.0, %v680
      %v682 = vpop.f32.mrf.mxu0
      %v683 = vadd.f32 0.0, %v682
      %v684 = vpop.f32.mrf.mxu0
      %v685 = vadd.f32 0.0, %v684
      %686 = vmatprep.mubr.bf16.mxu0 0
      %687 = vmatmul.mubr.bf16.gmra.mxu0 %v531
      %v688 = vpop.f32.mrf.mxu0
      %v689 = vadd.f32 0.0, %v688
      %v690 = vpop.f32.mrf.mxu0
      %v691 = vadd.f32 0.0, %v690
      %v692 = vpop.f32.mrf.mxu0
      %v693 = vadd.f32 0.0, %v692
      %v694 = vpop.f32.mrf.mxu0
      %v695 = vadd.f32 0.0, %v694
      %696 = vmatprep.mubr.bf16.mxu0 0
      %697 = vmatmul.mubr.bf16.gmra.mxu0 %v532
      %v698 = vpop.f32.mrf.mxu0
      %v699 = vadd.f32 0.0, %v698
      %v700 = vpop.f32.mrf.mxu0
      %v701 = vadd.f32 0.0, %v700
      %v702 = vpop.f32.mrf.mxu0
      %v703 = vadd.f32 0.0, %v702
      %v704 = vpop.f32.mrf.mxu0
      %v705 = vadd.f32 0.0, %v704
      %706 = vmatprep.mubr.bf16.mxu0 0
      %707 = vmatmul.mubr.bf16.gmra.mxu0 %v533
      %v708 = vpop.f32.mrf.mxu0
      %v709 = vadd.f32 0.0, %v708
      %v710 = vpop.f32.mrf.mxu0
      %v711 = vadd.f32 0.0, %v710
      %v712 = vpop.f32.mrf.mxu0
      %v713 = vadd.f32 0.0, %v712
      %v714 = vpop.f32.mrf.mxu0
      %v715 = vadd.f32 0.0, %v714
      %716 = vmatprep.mubr.bf16.mxu0 0
      %717 = vmatmul.mubr.bf16.gmra.mxu0 %v534
      %v718 = vpop.f32.mrf.mxu0
      %v719 = vadd.f32 0.0, %v718
      %v720 = vpop.f32.mrf.mxu0
      %v721 = vadd.f32 0.0, %v720
      %v722 = vpop.f32.mrf.mxu0
      %v723 = vadd.f32 0.0, %v722
      %v724 = vpop.f32.mrf.mxu0
      %v725 = vadd.f32 0.0, %v724
      %726 = vmatprep.mubr.bf16.mxu0 0
      %727 = vmatmul.mubr.bf16.gmra.mxu0 %v535
      %v728 = vpop.f32.mrf.mxu0
      %v729 = vadd.f32 0.0, %v728
      %v730 = vpop.f32.mrf.mxu0
      %v731 = vadd.f32 0.0, %v730
      %v732 = vpop.f32.mrf.mxu0
      %v733 = vadd.f32 0.0, %v732
      %v734 = vpop.f32.mrf.mxu0
      %v735 = vadd.f32 0.0, %v734
      %736 = vmatprep.mubr.bf16.mxu0 0
      %737 = vmatmul.mubr.bf16.gmra.mxu0 %v536
      %v738 = vpop.f32.mrf.mxu0
      %v739 = vadd.f32 0.0, %v738
      %v740 = vpop.f32.mrf.mxu0
      %v741 = vadd.f32 0.0, %v740
      %v742 = vpop.f32.mrf.mxu0
      %v743 = vadd.f32 0.0, %v742
      %v744 = vpop.f32.mrf.mxu0
      %v745 = vadd.f32 0.0, %v744
      %746 = vmatprep.mubr.bf16.mxu0 0
      %747 = vmatmul.mubr.bf16.gmra.mxu0 %v537
      %v748 = vpop.f32.mrf.mxu0
      %v749 = vadd.f32 0.0, %v748
      %v750 = vpop.f32.mrf.mxu0
      %v751 = vadd.f32 0.0, %v750
      %v752 = vpop.f32.mrf.mxu0
      %v753 = vadd.f32 0.0, %v752
      %v754 = vpop.f32.mrf.mxu0
      %v755 = vadd.f32 0.0, %v754
      %756 = vmatprep.mubr.bf16.mxu0 0
      %757 = vmatmul.mubr.bf16.gmra.mxu0 %v538
      %v758 = vpop.f32.mrf.mxu0
      %v759 = vadd.f32 0.0, %v758
      %v760 = vpop.f32.mrf.mxu0
      %v761 = vadd.f32 0.0, %v760
      %v762 = vpop.f32.mrf.mxu0
      %v763 = vadd.f32 0.0, %v762
      %v764 = vpop.f32.mrf.mxu0
      %v765 = vadd.f32 0.0, %v764
      %766 = vmatprep.mubr.bf16.mxu0 0
      %767 = vmatmul.mubr.bf16.gmra.mxu0 %v539
      %v768 = vpop.f32.mrf.mxu0
      %v769 = vadd.f32 0.0, %v768
      %v770 = vpop.f32.mrf.mxu0
      %v771 = vadd.f32 0.0, %v770
      %v772 = vpop.f32.mrf.mxu0
      %v773 = vadd.f32 0.0, %v772
      %v774 = vpop.f32.mrf.mxu0
      %v775 = vadd.f32 0.0, %v774
      %776 = vmatprep.mubr.bf16.mxu0 0
      %777 = vmatmul.mubr.bf16.gmra.mxu0 %v540
      %v778 = vpop.f32.mrf.mxu0
      %v779 = vadd.f32 0.0, %v778
      %v780 = vpop.f32.mrf.mxu0
      %v781 = vadd.f32 0.0, %v780
      %v782 = vpop.f32.mrf.mxu0
      %v783 = vadd.f32 0.0, %v782
      %v784 = vpop.f32.mrf.mxu0
      %v785 = vadd.f32 0.0, %v784
      %786 = vmatprep.mubr.bf16.mxu0 0
      %787 = vmatmul.mubr.bf16.gmra.mxu0 %v541
      %v788 = vpop.f32.mrf.mxu0
      %v789 = vadd.f32 0.0, %v788
      %v790 = vpop.f32.mrf.mxu0
      %v791 = vadd.f32 0.0, %v790
      %v792 = vpop.f32.mrf.mxu0
      %v793 = vadd.f32 0.0, %v792
      %v794 = vpop.f32.mrf.mxu0
      %v795 = vadd.f32 0.0, %v794
      %796 = vmatprep.mubr.bf16.mxu0 0
      %797 = vmatmul.mubr.bf16.gmra.mxu0 %v542
      %v798 = vpop.f32.mrf.mxu0
      %v799 = vadd.f32 0.0, %v798
      %v800 = vpop.f32.mrf.mxu0
      %v801 = vadd.f32 0.0, %v800
      %v802 = vpop.f32.mrf.mxu0
      %v803 = vadd.f32 0.0, %v802
      %v804 = vpop.f32.mrf.mxu0
      %v805 = vadd.f32 0.0, %v804
      %806 = vmatprep.mubr.bf16.mxu0 0
      %807 = vmatmul.mubr.bf16.gmra.mxu0 %v543
      %v808 = vpop.f32.mrf.mxu0
      %v809 = vadd.f32 0.0, %v808
      %v810 = vpop.f32.mrf.mxu0
      %v811 = vadd.f32 0.0, %v810
      %v812 = vpop.f32.mrf.mxu0
      %v813 = vadd.f32 0.0, %v812
      %v814 = vpop.f32.mrf.mxu0
      %v815 = vadd.f32 0.0, %v814
      %816 = vmatprep.mubr.bf16.mxu0 0
      %817 = vmatmul.mubr.bf16.gmra.mxu0 %v544
      %v818 = vpop.f32.mrf.mxu0
      %v819 = vadd.f32 0.0, %v818
      %v820 = vpop.f32.mrf.mxu0
      %v821 = vadd.f32 0.0, %v820
      %v822 = vpop.f32.mrf.mxu0
      %v823 = vadd.f32 0.0, %v822
      %v824 = vpop.f32.mrf.mxu0
      %v825 = vadd.f32 0.0, %v824
      %826 = vmatprep.mubr.bf16.mxu0 0
      %827 = vmatmul.mubr.bf16.gmra.mxu0 %v545
      %v828 = vpop.f32.mrf.mxu0
      %v829 = vadd.f32 0.0, %v828
      %v830 = vpop.f32.mrf.mxu0
      %v831 = vadd.f32 0.0, %v830
      %v832 = vpop.f32.mrf.mxu0
      %v833 = vadd.f32 0.0, %v832
      %v834 = vpop.f32.mrf.mxu0
      %v835 = vadd.f32 0.0, %v834
      %836 = vmatprep.mubr.bf16.mxu0 0
      %837 = vmatmul.mubr.bf16.gmra.mxu0 %v546
      %v838 = vpop.f32.mrf.mxu0
      %v839 = vpop.f32.mrf.mxu0
      %v840 = vpop.f32.mrf.mxu0
      %v841 = vpop.f32.mrf.mxu0
      %842 = vdwg.mxu0
      // Predicated region
      $region119: #{aux_loss_forward.1} parent=35 // pred_check
        %p843 = pneg %p205
      $region120: #{aux_loss_forward.1} parent=35 // pred_check_branch
        %845 = sbr.rel (%p843) target = $region122
      $region121: #{aux_loss_forward.1} parent=35 // pred_region
        %846 = vst [vmem:[#allocation3] sm:$0xff] %v679
        %847 = vst [vmem:[#allocation3 + $0x8] sm:$0xff] %v681
        %848 = vst [vmem:[#allocation3 + $0x10] sm:$0xff] %v683
        %849 = vst [vmem:[#allocation3 + $0x18] sm:$0xff] %v685
        %850 = vst [vmem:[#allocation3 + $0x20] sm:$0xff] %v689
        %851 = vst [vmem:[#allocation3 + $0x28] sm:$0xff] %v691
        %852 = vst [vmem:[#allocation3 + $0x30] sm:$0xff] %v693
        %853 = vst [vmem:[#allocation3 + $0x38] sm:$0xff] %v695
        %854 = vst [vmem:[#allocation3 + $0x40] sm:$0xff] %v699
        %855 = vst [vmem:[#allocation3 + $0x48] sm:$0xff] %v701
        %856 = vst [vmem:[#allocation3 + $0x50] sm:$0xff] %v703
        %857 = vst [vmem:[#allocation3 + $0x58] sm:$0xff] %v705
        %858 = vst [vmem:[#allocation3 + $0x60] sm:$0xff] %v709
        %859 = vst [vmem:[#allocation3 + $0x68] sm:$0xff] %v711
        %860 = vst [vmem:[#allocation3 + $0x70] sm:$0xff] %v713
        %861 = vst [vmem:[#allocation3 + $0x78] sm:$0xff] %v715
        %862 = vst [vmem:[#allocation3 + $0x80] sm:$0xff] %v719
        %863 = vst [vmem:[#allocation3 + $0x88] sm:$0xff] %v721
        %864 = vst [vmem:[#allocation3 + $0x90] sm:$0xff] %v723
        %865 = vst [vmem:[#allocation3 + $0x98] sm:$0xff] %v725
        %866 = vst [vmem:[#allocation3 + $0xa0] sm:$0xff] %v729
        %867 = vst [vmem:[#allocation3 + $0xa8] sm:$0xff] %v731
        %868 = vst [vmem:[#allocation3 + $0xb0] sm:$0xff] %v733
        %869 = vst [vmem:[#allocation3 + $0xb8] sm:$0xff] %v735
        %870 = vst [vmem:[#allocation3 + $0xc0] sm:$0xff] %v739
        %871 = vst [vmem:[#allocation3 + $0xc8] sm:$0xff] %v741
        %872 = vst [vmem:[#allocation3 + $0xd0] sm:$0xff] %v743
        %873 = vst [vmem:[#allocation3 + $0xd8] sm:$0xff] %v745
        %874 = vst [vmem:[#allocation3 + $0xe0] sm:$0xff] %v749
        %875 = vst [vmem:[#allocation3 + $0xe8] sm:$0xff] %v751
        %876 = vst [vmem:[#allocation3 + $0xf0] sm:$0xff] %v753
        %877 = vst [vmem:[#allocation3 + $0xf8] sm:$0xff] %v755
        %878 = vst [vmem:[#allocation3 + $0x100] sm:$0xff] %v759
        %879 = vst [vmem:[#allocation3 + $0x108] sm:$0xff] %v761
        %880 = vst [vmem:[#allocation3 + $0x110] sm:$0xff] %v763
        %881 = vst [vmem:[#allocation3 + $0x118] sm:$0xff] %v765
        %882 = vst [vmem:[#allocation3 + $0x120] sm:$0xff] %v769
        %883 = vst [vmem:[#allocation3 + $0x128] sm:$0xff] %v771
        %884 = vst [vmem:[#allocation3 + $0x130] sm:$0xff] %v773
        %885 = vst [vmem:[#allocation3 + $0x138] sm:$0xff] %v775
        %886 = vst [vmem:[#allocation3 + $0x140] sm:$0xff] %v779
        %887 = vst [vmem:[#allocation3 + $0x148] sm:$0xff] %v781
        %888 = vst [vmem:[#allocation3 + $0x150] sm:$0xff] %v783
        %889 = vst [vmem:[#allocation3 + $0x158] sm:$0xff] %v785
        %890 = vst [vmem:[#allocation3 + $0x160] sm:$0xff] %v789
        %891 = vst [vmem:[#allocation3 + $0x168] sm:$0xff] %v791
        %892 = vst [vmem:[#allocation3 + $0x170] sm:$0xff] %v793
        %893 = vst [vmem:[#allocation3 + $0x178] sm:$0xff] %v795
        %894 = vst [vmem:[#allocation3 + $0x180] sm:$0xff] %v799
        %895 = vst [vmem:[#allocation3 + $0x188] sm:$0xff] %v801
        %896 = vst [vmem:[#allocation3 + $0x190] sm:$0xff] %v803
        %897 = vst [vmem:[#allocation3 + $0x198] sm:$0xff] %v805
        %898 = vst [vmem:[#allocation3 + $0x1a0] sm:$0xff] %v809
        %899 = vst [vmem:[#allocation3 + $0x1a8] sm:$0xff] %v811
        %900 = vst [vmem:[#allocation3 + $0x1b0] sm:$0xff] %v813
        %901 = vst [vmem:[#allocation3 + $0x1b8] sm:$0xff] %v815
        %902 = vst [vmem:[#allocation3 + $0x1c0] sm:$0xff] %v819
        %903 = vst [vmem:[#allocation3 + $0x1c8] sm:$0xff] %v821
        %904 = vst [vmem:[#allocation3 + $0x1d0] sm:$0xff] %v823
        %905 = vst [vmem:[#allocation3 + $0x1d8] sm:$0xff] %v825
        %906 = vst [vmem:[#allocation3 + $0x1e0] sm:$0xff] %v829
        %907 = vst [vmem:[#allocation3 + $0x1e8] sm:$0xff] %v831
        %908 = vst [vmem:[#allocation3 + $0x1f0] sm:$0xff] %v833
        %909 = vst [vmem:[#allocation3 + $0x1f8] sm:$0xff] %v835
      $region122: #{aux_loss_forward.1} parent=35 // pred_fallthru
        _
      %p910 = scmp.gt.s32.totalorder %s21, 0
      // Predicated region
      $region123: #{aux_loss_forward.1} parent=35 // pred_check
        %p911 = pneg %p910
      $region124: #{aux_loss_forward.1} parent=35 // pred_check_branch
        %913 = sbr.rel (%p911) target = $region126
      $region125: #{aux_loss_forward.1} parent=35 // pred_region
        %v914 = vld [vmem:[#allocation3] sm:$0xff]
        %v915 = vld [vmem:[#allocation3 + $0x8] sm:$0xff]
        %v916 = vld [vmem:[#allocation3 + $0x10] sm:$0xff]
        %v917 = vld [vmem:[#allocation3 + $0x18] sm:$0xff]
        %v918 = vld [vmem:[#allocation3 + $0x20] sm:$0xff]
        %v919 = vld [vmem:[#allocation3 + $0x28] sm:$0xff]
        %v920 = vld [vmem:[#allocation3 + $0x30] sm:$0xff]
        %v921 = vld [vmem:[#allocation3 + $0x38] sm:$0xff]
        %v922 = vld [vmem:[#allocation3 + $0x40] sm:$0xff]
        %v923 = vld [vmem:[#allocation3 + $0x48] sm:$0xff]
        %v924 = vld [vmem:[#allocation3 + $0x50] sm:$0xff]
        %v925 = vld [vmem:[#allocation3 + $0x58] sm:$0xff]
        %v926 = vld [vmem:[#allocation3 + $0x60] sm:$0xff]
        %v927 = vld [vmem:[#allocation3 + $0x68] sm:$0xff]
        %v928 = vld [vmem:[#allocation3 + $0x70] sm:$0xff]
        %v929 = vld [vmem:[#allocation3 + $0x78] sm:$0xff]
        %v930 = vld [vmem:[#allocation3 + $0x80] sm:$0xff]
        %v931 = vld [vmem:[#allocation3 + $0x88] sm:$0xff]
        %v932 = vld [vmem:[#allocation3 + $0x90] sm:$0xff]
        %v933 = vld [vmem:[#allocation3 + $0x98] sm:$0xff]
        %v934 = vld [vmem:[#allocation3 + $0xa0] sm:$0xff]
        %v935 = vld [vmem:[#allocation3 + $0xa8] sm:$0xff]
        %v936 = vld [vmem:[#allocation3 + $0xb0] sm:$0xff]
        %v937 = vld [vmem:[#allocation3 + $0xb8] sm:$0xff]
        %v938 = vld [vmem:[#allocation3 + $0xc0] sm:$0xff]
        %v939 = vld [vmem:[#allocation3 + $0xc8] sm:$0xff]
        %v940 = vld [vmem:[#allocation3 + $0xd0] sm:$0xff]
        %v941 = vld [vmem:[#allocation3 + $0xd8] sm:$0xff]
        %v942 = vld [vmem:[#allocation3 + $0xe0] sm:$0xff]
        %v943 = vld [vmem:[#allocation3 + $0xe8] sm:$0xff]
        %v944 = vld [vmem:[#allocation3 + $0xf0] sm:$0xff]
        %v945 = vld [vmem:[#allocation3 + $0xf8] sm:$0xff]
        %v946 = vld [vmem:[#allocation3 + $0x100] sm:$0xff]
        %v947 = vld [vmem:[#allocation3 + $0x108] sm:$0xff]
        %v948 = vld [vmem:[#allocation3 + $0x110] sm:$0xff]
        %v949 = vld [vmem:[#allocation3 + $0x118] sm:$0xff]
        %v950 = vld [vmem:[#allocation3 + $0x120] sm:$0xff]
        %v951 = vld [vmem:[#allocation3 + $0x128] sm:$0xff]
        %v952 = vld [vmem:[#allocation3 + $0x130] sm:$0xff]
        %v953 = vld [vmem:[#allocation3 + $0x138] sm:$0xff]
        %v954 = vld [vmem:[#allocation3 + $0x140] sm:$0xff]
        %v955 = vld [vmem:[#allocation3 + $0x148] sm:$0xff]
        %v956 = vld [vmem:[#allocation3 + $0x150] sm:$0xff]
        %v957 = vld [vmem:[#allocation3 + $0x158] sm:$0xff]
        %v958 = vld [vmem:[#allocation3 + $0x160] sm:$0xff]
        %v959 = vld [vmem:[#allocation3 + $0x168] sm:$0xff]
        %v960 = vld [vmem:[#allocation3 + $0x170] sm:$0xff]
        %v961 = vld [vmem:[#allocation3 + $0x178] sm:$0xff]
        %v962 = vld [vmem:[#allocation3 + $0x180] sm:$0xff]
        %v963 = vld [vmem:[#allocation3 + $0x188] sm:$0xff]
        %v964 = vld [vmem:[#allocation3 + $0x190] sm:$0xff]
        %v965 = vld [vmem:[#allocation3 + $0x198] sm:$0xff]
        %v966 = vld [vmem:[#allocation3 + $0x1a0] sm:$0xff]
        %v967 = vld [vmem:[#allocation3 + $0x1a8] sm:$0xff]
        %v968 = vld [vmem:[#allocation3 + $0x1b0] sm:$0xff]
        %v969 = vld [vmem:[#allocation3 + $0x1b8] sm:$0xff]
        %v970 = vld [vmem:[#allocation3 + $0x1c0] sm:$0xff]
        %v971 = vld [vmem:[#allocation3 + $0x1c8] sm:$0xff]
        %v972 = vld [vmem:[#allocation3 + $0x1d0] sm:$0xff]
        %v973 = vld [vmem:[#allocation3 + $0x1d8] sm:$0xff]
        %v974 = vld [vmem:[#allocation3 + $0x1e0] sm:$0xff]
        %v975 = vld [vmem:[#allocation3 + $0x1e8] sm:$0xff]
        %v976 = vld [vmem:[#allocation3 + $0x1f0] sm:$0xff]
        %v977 = vld [vmem:[#allocation3 + $0x1f8] sm:$0xff]
        %v978 = vadd.f32 %v914, %v679
        %v979 = vadd.f32 %v915, %v681
        %v980 = vadd.f32 %v916, %v683
        %v981 = vadd.f32 %v917, %v685
        %v982 = vadd.f32 %v918, %v689
        %v983 = vadd.f32 %v919, %v691
        %v984 = vadd.f32 %v920, %v693
        %v985 = vadd.f32 %v921, %v695
        %v986 = vadd.f32 %v922, %v699
        %v987 = vadd.f32 %v923, %v701
        %v988 = vadd.f32 %v924, %v703
        %v989 = vadd.f32 %v925, %v705
        %v990 = vadd.f32 %v926, %v709
        %v991 = vadd.f32 %v927, %v711
        %v992 = vadd.f32 %v928, %v713
        %v993 = vadd.f32 %v929, %v715
        %v994 = vadd.f32 %v930, %v719
        %v995 = vadd.f32 %v931, %v721
        %v996 = vadd.f32 %v932, %v723
        %v997 = vadd.f32 %v933, %v725
        %v998 = vadd.f32 %v934, %v729
        %v999 = vadd.f32 %v935, %v731
        %v1000 = vadd.f32 %v936, %v733
        %v1001 = vadd.f32 %v937, %v735
        %v1002 = vadd.f32 %v938, %v739
        %v1003 = vadd.f32 %v939, %v741
        %v1004 = vadd.f32 %v940, %v743
        %v1005 = vadd.f32 %v941, %v745
        %v1006 = vadd.f32 %v942, %v749
        %v1007 = vadd.f32 %v943, %v751
        %v1008 = vadd.f32 %v944, %v753
        %v1009 = vadd.f32 %v945, %v755
        %v1010 = vadd.f32 %v946, %v759
        %v1011 = vadd.f32 %v947, %v761
        %v1012 = vadd.f32 %v948, %v763
        %v1013 = vadd.f32 %v949, %v765
        %v1014 = vadd.f32 %v950, %v769
        %v1015 = vadd.f32 %v951, %v771
        %v1016 = vadd.f32 %v952, %v773
        %v1017 = vadd.f32 %v953, %v775
        %v1018 = vadd.f32 %v954, %v779
        %v1019 = vadd.f32 %v955, %v781
        %v1020 = vadd.f32 %v956, %v783
        %v1021 = vadd.f32 %v957, %v785
        %v1022 = vadd.f32 %v958, %v789
        %v1023 = vadd.f32 %v959, %v791
        %v1024 = vadd.f32 %v960, %v793
        %v1025 = vadd.f32 %v961, %v795
        %v1026 = vadd.f32 %v962, %v799
        %v1027 = vadd.f32 %v963, %v801
        %v1028 = vadd.f32 %v964, %v803
        %v1029 = vadd.f32 %v965, %v805
        %v1030 = vadd.f32 %v966, %v809
        %v1031 = vadd.f32 %v967, %v811
        %v1032 = vadd.f32 %v968, %v813
        %v1033 = vadd.f32 %v969, %v815
        %v1034 = vadd.f32 %v970, %v819
        %v1035 = vadd.f32 %v971, %v821
        %v1036 = vadd.f32 %v972, %v823
        %v1037 = vadd.f32 %v973, %v825
        %v1038 = vadd.f32 %v974, %v829
        %v1039 = vadd.f32 %v975, %v831
        %v1040 = vadd.f32 %v976, %v833
        %v1041 = vadd.f32 %v977, %v835
        %1042 = vst [vmem:[#allocation3] sm:$0xff] %v978
        %1043 = vst [vmem:[#allocation3 + $0x8] sm:$0xff] %v979
        %1044 = vst [vmem:[#allocation3 + $0x10] sm:$0xff] %v980
        %1045 = vst [vmem:[#allocation3 + $0x18] sm:$0xff] %v981
        %1046 = vst [vmem:[#allocation3 + $0x20] sm:$0xff] %v982
        %1047 = vst [vmem:[#allocation3 + $0x28] sm:$0xff] %v983
        %1048 = vst [vmem:[#allocation3 + $0x30] sm:$0xff] %v984
        %1049 = vst [vmem:[#allocation3 + $0x38] sm:$0xff] %v985
        %1050 = vst [vmem:[#allocation3 + $0x40] sm:$0xff] %v986
        %1051 = vst [vmem:[#allocation3 + $0x48] sm:$0xff] %v987
        %1052 = vst [vmem:[#allocation3 + $0x50] sm:$0xff] %v988
        %1053 = vst [vmem:[#allocation3 + $0x58] sm:$0xff] %v989
        %1054 = vst [vmem:[#allocation3 + $0x60] sm:$0xff] %v990
        %1055 = vst [vmem:[#allocation3 + $0x68] sm:$0xff] %v991
        %1056 = vst [vmem:[#allocation3 + $0x70] sm:$0xff] %v992
        %1057 = vst [vmem:[#allocation3 + $0x78] sm:$0xff] %v993
        %1058 = vst [vmem:[#allocation3 + $0x80] sm:$0xff] %v994
        %1059 = vst [vmem:[#allocation3 + $0x88] sm:$0xff] %v995
        %1060 = vst [vmem:[#allocation3 + $0x90] sm:$0xff] %v996
        %1061 = vst [vmem:[#allocation3 + $0x98] sm:$0xff] %v997
        %1062 = vst [vmem:[#allocation3 + $0xa0] sm:$0xff] %v998
        %1063 = vst [vmem:[#allocation3 + $0xa8] sm:$0xff] %v999
        %1064 = vst [vmem:[#allocation3 + $0xb0] sm:$0xff] %v1000
        %1065 = vst [vmem:[#allocation3 + $0xb8] sm:$0xff] %v1001
        %1066 = vst [vmem:[#allocation3 + $0xc0] sm:$0xff] %v1002
        %1067 = vst [vmem:[#allocation3 + $0xc8] sm:$0xff] %v1003
        %1068 = vst [vmem:[#allocation3 + $0xd0] sm:$0xff] %v1004
        %1069 = vst [vmem:[#allocation3 + $0xd8] sm:$0xff] %v1005
        %1070 = vst [vmem:[#allocation3 + $0xe0] sm:$0xff] %v1006
        %1071 = vst [vmem:[#allocation3 + $0xe8] sm:$0xff] %v1007
        %1072 = vst [vmem:[#allocation3 + $0xf0] sm:$0xff] %v1008
        %1073 = vst [vmem:[#allocation3 + $0xf8] sm:$0xff] %v1009
        %1074 = vst [vmem:[#allocation3 + $0x100] sm:$0xff] %v1010
        %1075 = vst [vmem:[#allocation3 + $0x108] sm:$0xff] %v1011
        %1076 = vst [vmem:[#allocation3 + $0x110] sm:$0xff] %v1012
        %1077 = vst [vmem:[#allocation3 + $0x118] sm:$0xff] %v1013
        %1078 = vst [vmem:[#allocation3 + $0x120] sm:$0xff] %v1014
        %1079 = vst [vmem:[#allocation3 + $0x128] sm:$0xff] %v1015
        %1080 = vst [vmem:[#allocation3 + $0x130] sm:$0xff] %v1016
        %1081 = vst [vmem:[#allocation3 + $0x138] sm:$0xff] %v1017
        %1082 = vst [vmem:[#allocation3 + $0x140] sm:$0xff] %v1018
        %1083 = vst [vmem:[#allocation3 + $0x148] sm:$0xff] %v1019
        %1084 = vst [vmem:[#allocation3 + $0x150] sm:$0xff] %v1020
        %1085 = vst [vmem:[#allocation3 + $0x158] sm:$0xff] %v1021
        %1086 = vst [vmem:[#allocation3 + $0x160] sm:$0xff] %v1022
        %1087 = vst [vmem:[#allocation3 + $0x168] sm:$0xff] %v1023
        %1088 = vst [vmem:[#allocation3 + $0x170] sm:$0xff] %v1024
        %1089 = vst [vmem:[#allocation3 + $0x178] sm:$0xff] %v1025
        %1090 = vst [vmem:[#allocation3 + $0x180] sm:$0xff] %v1026
        %1091 = vst [vmem:[#allocation3 + $0x188] sm:$0xff] %v1027
        %1092 = vst [vmem:[#allocation3 + $0x190] sm:$0xff] %v1028
        %1093 = vst [vmem:[#allocation3 + $0x198] sm:$0xff] %v1029
        %1094 = vst [vmem:[#allocation3 + $0x1a0] sm:$0xff] %v1030
        %1095 = vst [vmem:[#allocation3 + $0x1a8] sm:$0xff] %v1031
        %1096 = vst [vmem:[#allocation3 + $0x1b0] sm:$0xff] %v1032
        %1097 = vst [vmem:[#allocation3 + $0x1b8] sm:$0xff] %v1033
        %1098 = vst [vmem:[#allocation3 + $0x1c0] sm:$0xff] %v1034
        %1099 = vst [vmem:[#allocation3 + $0x1c8] sm:$0xff] %v1035
        %1100 = vst [vmem:[#allocation3 + $0x1d0] sm:$0xff] %v1036
        %1101 = vst [vmem:[#allocation3 + $0x1d8] sm:$0xff] %v1037
        %1102 = vst [vmem:[#allocation3 + $0x1e0] sm:$0xff] %v1038
        %1103 = vst [vmem:[#allocation3 + $0x1e8] sm:$0xff] %v1039
        %1104 = vst [vmem:[#allocation3 + $0x1f0] sm:$0xff] %v1040
        %1105 = vst [vmem:[#allocation3 + $0x1f8] sm:$0xff] %v1041
      $region126: #{aux_loss_forward.1} parent=35 // pred_fallthru
        _
      %s1106 = sadd.s32 %s444, 1
      %s1107 = smul.u32 %s1106, 32
      %s1108 = smul.addr %s1107, 4
      %s1109 = scalar_lea.vmem %s1, %s1108
      %v1110 = vld [vmem:[%s1109] sm:$0xff]
      %v1111 = vld [vmem:[%s1109 + $0x8] sm:$0xff]
      %v1112 = vld [vmem:[%s1109 + $0x10] sm:$0xff]
      %v1113 = vld [vmem:[%s1109 + $0x18] sm:$0xff]
      %v1114 = vld [vmem:[%s1109 + $0x20] sm:$0xff]
      %v1115 = vld [vmem:[%s1109 + $0x28] sm:$0xff]
      %v1116 = vld [vmem:[%s1109 + $0x30] sm:$0xff]
      %v1117 = vld [vmem:[%s1109 + $0x38] sm:$0xff]
      %v1118 = vld [vmem:[%s1109 + $0x40] sm:$0xff]
      %v1119 = vld [vmem:[%s1109 + $0x48] sm:$0xff]
      %v1120 = vld [vmem:[%s1109 + $0x50] sm:$0xff]
      %v1121 = vld [vmem:[%s1109 + $0x58] sm:$0xff]
      %v1122 = vld [vmem:[%s1109 + $0x60] sm:$0xff]
      %v1123 = vld [vmem:[%s1109 + $0x68] sm:$0xff]
      %v1124 = vld [vmem:[%s1109 + $0x70] sm:$0xff]
      %v1125 = vld [vmem:[%s1109 + $0x78] sm:$0xff]
      %v1142 = vunpack.c.l.b16 %v1110
      %v1143 = vunpack.c.h.b16 %v1110
      %v1144 = vunpack.c.l.b16 %v1111
      %v1145 = vunpack.c.h.b16 %v1111
      %v1146 = vunpack.c.l.b16 %v1112
      %v1147 = vunpack.c.h.b16 %v1112
      %v1148 = vunpack.c.l.b16 %v1113
      %v1149 = vunpack.c.h.b16 %v1113
      %v1150 = vunpack.c.l.b16 %v1114
      %v1151 = vunpack.c.h.b16 %v1114
      %v1152 = vunpack.c.l.b16 %v1115
      %v1153 = vunpack.c.h.b16 %v1115
      %v1154 = vunpack.c.l.b16 %v1116
      %v1155 = vunpack.c.h.b16 %v1116
      %v1156 = vunpack.c.l.b16 %v1117
      %v1157 = vunpack.c.h.b16 %v1117
      %v1158 = vunpack.c.l.b16 %v1118
      %v1159 = vunpack.c.h.b16 %v1118
      %v1160 = vunpack.c.l.b16 %v1119
      %v1161 = vunpack.c.h.b16 %v1119
      %v1162 = vunpack.c.l.b16 %v1120
      %v1163 = vunpack.c.h.b16 %v1120
      %v1164 = vunpack.c.l.b16 %v1121
      %v1165 = vunpack.c.h.b16 %v1121
      %v1166 = vunpack.c.l.b16 %v1122
      %v1167 = vunpack.c.h.b16 %v1122
      %v1168 = vunpack.c.l.b16 %v1123
      %v1169 = vunpack.c.h.b16 %v1123
      %v1170 = vunpack.c.l.b16 %v1124
      %v1171 = vunpack.c.h.b16 %v1124
      %v1172 = vunpack.c.l.b16 %v1125
      %v1173 = vunpack.c.h.b16 %v1125
      %v1174 = vpack.c.b16 %v1144, %v1142
      %v1175 = vpack.c.b16 %v1145, %v1143
      %v1176 = vpack.c.b16 %v1148, %v1146
      %v1177 = vpack.c.b16 %v1149, %v1147
      %v1178 = vpack.c.b16 %v1152, %v1150
      %v1179 = vpack.c.b16 %v1153, %v1151
      %v1180 = vpack.c.b16 %v1156, %v1154
      %v1181 = vpack.c.b16 %v1157, %v1155
      %v1182 = vpack.c.b16 %v1160, %v1158
      %v1183 = vpack.c.b16 %v1161, %v1159
      %v1184 = vpack.c.b16 %v1164, %v1162
      %v1185 = vpack.c.b16 %v1165, %v1163
      %v1186 = vpack.c.b16 %v1168, %v1166
      %v1187 = vpack.c.b16 %v1169, %v1167
      %v1188 = vpack.c.b16 %v1172, %v1170
      %v1189 = vpack.c.b16 %v1173, %v1171
      %1206 = vmatprep.subr.bf16.mxu0 %v1189
      %1207 = vmatpush1.bf16.msra.mxu0 %v1188
      %1208 = vmatprep.subr.bf16.mxu0 %v1187
      %1209 = vmatpush1.bf16.msra.mxu0 %v1186
      %1210 = vmatprep.subr.bf16.mxu0 %v1185
      %1211 = vmatpush1.bf16.msra.mxu0 %v1184
      %1212 = vmatprep.subr.bf16.mxu0 %v1183
      %1213 = vmatpush1.bf16.msra.mxu0 %v1182
      %1214 = vmatprep.subr.bf16.mxu0 %v1181
      %1215 = vmatpush1.bf16.msra.mxu0 %v1180
      %1216 = vmatprep.subr.bf16.mxu0 %v1179
      %1217 = vmatpush1.bf16.msra.mxu0 %v1178
      %1218 = vmatprep.subr.bf16.mxu0 %v1177
      %1219 = vmatpush1.bf16.msra.mxu0 %v1176
      %1220 = vmatprep.subr.bf16.mxu0 %v1175
      %1221 = vmatpush1.bf16.msra.mxu0 %v1174
      %1222 = vmatprep.subr.bf16.mxu0 0
      %1223 = vmatpush2.bf16.msra.mxu0 0
      %1224 = vmatprep.subr.bf16.mxu0 0
      %1225 = vmatpush2.bf16.msra.mxu0 0
      %1226 = vmatprep.subr.bf16.mxu0 0
      %1227 = vmatpush2.bf16.msra.mxu0 0
      %1228 = vmatprep.subr.bf16.mxu0 0
      %1229 = vmatpush2.bf16.msra.mxu0 0
      %1230 = vmatprep.subr.bf16.mxu0 0
      %1231 = vmatpush2.bf16.msra.mxu0 0
      %1232 = vmatprep.subr.bf16.mxu0 0
      %1233 = vmatpush2.bf16.msra.mxu0 0
      %1234 = vmatprep.subr.bf16.mxu0 0
      %1235 = vmatpush2.bf16.msra.mxu0 0
      %1236 = vmatprep.subr.bf16.mxu0 0
      %1237 = vmatpush2.bf16.msra.mxu0 0
      %1238 = vmatprep.mubr.bf16.mxu0 0
      %1239 = vmatmul.mubr.bf16.gmra.mxu0 %v530
      %v1240 = vpop.f32.mrf.mxu0
      %v1241 = vadd.f32 0.0, %v1240
      %v1242 = vpop.f32.mrf.mxu0
      %v1243 = vadd.f32 0.0, %v1242
      %v1244 = vpop.f32.mrf.mxu0
      %v1245 = vadd.f32 0.0, %v1244
      %v1246 = vpop.f32.mrf.mxu0
      %v1247 = vadd.f32 0.0, %v1246
      %1248 = vmatprep.mubr.bf16.mxu0 0
      %1249 = vmatmul.mubr.bf16.gmra.mxu0 %v531
      %v1250 = vpop.f32.mrf.mxu0
      %v1251 = vadd.f32 0.0, %v1250
      %v1252 = vpop.f32.mrf.mxu0
      %v1253 = vadd.f32 0.0, %v1252
      %v1254 = vpop.f32.mrf.mxu0
      %v1255 = vadd.f32 0.0, %v1254
      %v1256 = vpop.f32.mrf.mxu0
      %v1257 = vadd.f32 0.0, %v1256
      %1258 = vmatprep.mubr.bf16.mxu0 0
      %1259 = vmatmul.mubr.bf16.gmra.mxu0 %v532
      %v1260 = vpop.f32.mrf.mxu0
      %v1261 = vadd.f32 0.0, %v1260
      %v1262 = vpop.f32.mrf.mxu0
      %v1263 = vadd.f32 0.0, %v1262
      %v1264 = vpop.f32.mrf.mxu0
      %v1265 = vadd.f32 0.0, %v1264
      %v1266 = vpop.f32.mrf.mxu0
      %v1267 = vadd.f32 0.0, %v1266
      %1268 = vmatprep.mubr.bf16.mxu0 0
      %1269 = vmatmul.mubr.bf16.gmra.mxu0 %v533
      %v1270 = vpop.f32.mrf.mxu0
      %v1271 = vadd.f32 0.0, %v1270
      %v1272 = vpop.f32.mrf.mxu0
      %v1273 = vadd.f32 0.0, %v1272
      %v1274 = vpop.f32.mrf.mxu0
      %v1275 = vadd.f32 0.0, %v1274
      %v1276 = vpop.f32.mrf.mxu0
      %v1277 = vadd.f32 0.0, %v1276
      %1278 = vmatprep.mubr.bf16.mxu0 0
      %1279 = vmatmul.mubr.bf16.gmra.mxu0 %v534
      %v1280 = vpop.f32.mrf.mxu0
      %v1281 = vadd.f32 0.0, %v1280
      %v1282 = vpop.f32.mrf.mxu0
      %v1283 = vadd.f32 0.0, %v1282
      %v1284 = vpop.f32.mrf.mxu0
      %v1285 = vadd.f32 0.0, %v1284
      %v1286 = vpop.f32.mrf.mxu0
      %v1287 = vadd.f32 0.0, %v1286
      %1288 = vmatprep.mubr.bf16.mxu0 0
      %1289 = vmatmul.mubr.bf16.gmra.mxu0 %v535
      %v1290 = vpop.f32.mrf.mxu0
      %v1291 = vadd.f32 0.0, %v1290
      %v1292 = vpop.f32.mrf.mxu0
      %v1293 = vadd.f32 0.0, %v1292
      %v1294 = vpop.f32.mrf.mxu0
      %v1295 = vadd.f32 0.0, %v1294
      %v1296 = vpop.f32.mrf.mxu0
      %v1297 = vadd.f32 0.0, %v1296
      %1298 = vmatprep.mubr.bf16.mxu0 0
      %1299 = vmatmul.mubr.bf16.gmra.mxu0 %v536
      %v1300 = vpop.f32.mrf.mxu0
      %v1301 = vadd.f32 0.0, %v1300
      %v1302 = vpop.f32.mrf.mxu0
      %v1303 = vadd.f32 0.0, %v1302
      %v1304 = vpop.f32.mrf.mxu0
      %v1305 = vadd.f32 0.0, %v1304
      %v1306 = vpop.f32.mrf.mxu0
      %v1307 = vadd.f32 0.0, %v1306
      %1308 = vmatprep.mubr.bf16.mxu0 0
      %1309 = vmatmul.mubr.bf16.gmra.mxu0 %v537
      %v1310 = vpop.f32.mrf.mxu0
      %v1311 = vadd.f32 0.0, %v1310
      %v1312 = vpop.f32.mrf.mxu0
      %v1313 = vadd.f32 0.0, %v1312
      %v1314 = vpop.f32.mrf.mxu0
      %v1315 = vadd.f32 0.0, %v1314
      %v1316 = vpop.f32.mrf.mxu0
      %v1317 = vadd.f32 0.0, %v1316
      %1318 = vmatprep.mubr.bf16.mxu0 0
      %1319 = vmatmul.mubr.bf16.gmra.mxu0 %v538
      %v1320 = vpop.f32.mrf.mxu0
      %v1321 = vadd.f32 0.0, %v1320
      %v1322 = vpop.f32.mrf.mxu0
      %v1323 = vadd.f32 0.0, %v1322
      %v1324 = vpop.f32.mrf.mxu0
      %v1325 = vadd.f32 0.0, %v1324
      %v1326 = vpop.f32.mrf.mxu0
      %v1327 = vadd.f32 0.0, %v1326
      %1328 = vmatprep.mubr.bf16.mxu0 0
      %1329 = vmatmul.mubr.bf16.gmra.mxu0 %v539
      %v1330 = vpop.f32.mrf.mxu0
      %v1331 = vadd.f32 0.0, %v1330
      %v1332 = vpop.f32.mrf.mxu0
      %v1333 = vadd.f32 0.0, %v1332
      %v1334 = vpop.f32.mrf.mxu0
      %v1335 = vadd.f32 0.0, %v1334
      %v1336 = vpop.f32.mrf.mxu0
      %v1337 = vadd.f32 0.0, %v1336
      %1338 = vmatprep.mubr.bf16.mxu0 0
      %1339 = vmatmul.mubr.bf16.gmra.mxu0 %v540
      %v1340 = vpop.f32.mrf.mxu0
      %v1341 = vadd.f32 0.0, %v1340
      %v1342 = vpop.f32.mrf.mxu0
      %v1343 = vadd.f32 0.0, %v1342
      %v1344 = vpop.f32.mrf.mxu0
      %v1345 = vadd.f32 0.0, %v1344
      %v1346 = vpop.f32.mrf.mxu0
      %v1347 = vadd.f32 0.0, %v1346
      %1348 = vmatprep.mubr.bf16.mxu0 0
      %1349 = vmatmul.mubr.bf16.gmra.mxu0 %v541
      %v1350 = vpop.f32.mrf.mxu0
      %v1351 = vadd.f32 0.0, %v1350
      %v1352 = vpop.f32.mrf.mxu0
      %v1353 = vadd.f32 0.0, %v1352
      %v1354 = vpop.f32.mrf.mxu0
      %v1355 = vadd.f32 0.0, %v1354
      %v1356 = vpop.f32.mrf.mxu0
      %v1357 = vadd.f32 0.0, %v1356
      %1358 = vmatprep.mubr.bf16.mxu0 0
      %1359 = vmatmul.mubr.bf16.gmra.mxu0 %v542
      %v1360 = vpop.f32.mrf.mxu0
      %v1361 = vadd.f32 0.0, %v1360
      %v1362 = vpop.f32.mrf.mxu0
      %v1363 = vadd.f32 0.0, %v1362
      %v1364 = vpop.f32.mrf.mxu0
      %v1365 = vadd.f32 0.0, %v1364
      %v1366 = vpop.f32.mrf.mxu0
      %v1367 = vadd.f32 0.0, %v1366
      %1368 = vmatprep.mubr.bf16.mxu0 0
      %1369 = vmatmul.mubr.bf16.gmra.mxu0 %v543
      %v1370 = vpop.f32.mrf.mxu0
      %v1371 = vadd.f32 0.0, %v1370
      %v1372 = vpop.f32.mrf.mxu0
      %v1373 = vadd.f32 0.0, %v1372
      %v1374 = vpop.f32.mrf.mxu0
      %v1375 = vadd.f32 0.0, %v1374
      %v1376 = vpop.f32.mrf.mxu0
      %v1377 = vadd.f32 0.0, %v1376
      %1378 = vmatprep.mubr.bf16.mxu0 0
      %1379 = vmatmul.mubr.bf16.gmra.mxu0 %v544
      %v1380 = vpop.f32.mrf.mxu0
      %v1381 = vadd.f32 0.0, %v1380
      %v1382 = vpop.f32.mrf.mxu0
      %v1383 = vadd.f32 0.0, %v1382
      %v1384 = vpop.f32.mrf.mxu0
      %v1385 = vadd.f32 0.0, %v1384
      %v1386 = vpop.f32.mrf.mxu0
      %v1387 = vadd.f32 0.0, %v1386
      %1388 = vmatprep.mubr.bf16.mxu0 0
      %1389 = vmatmul.mubr.bf16.gmra.mxu0 %v545
      %v1390 = vpop.f32.mrf.mxu0
      %v1391 = vadd.f32 0.0, %v1390
      %v1392 = vpop.f32.mrf.mxu0
      %v1393 = vadd.f32 0.0, %v1392
      %v1394 = vpop.f32.mrf.mxu0
      %v1395 = vadd.f32 0.0, %v1394
      %v1396 = vpop.f32.mrf.mxu0
      %v1397 = vadd.f32 0.0, %v1396
      %1398 = vmatprep.mubr.bf16.mxu0 0
      %1399 = vmatmul.mubr.bf16.gmra.mxu0 %v546
      %v1400 = vpop.f32.mrf.mxu0
      %v1401 = vadd.f32 0.0, %v1400
      %v1402 = vpop.f32.mrf.mxu0
      %v1403 = vadd.f32 0.0, %v1402
      %v1404 = vpop.f32.mrf.mxu0
      %v1405 = vpop.f32.mrf.mxu0
      %1406 = vdwg.mxu0
      %v1407 = vld [vmem:[#allocation3] sm:$0xff]
      %v1408 = vld [vmem:[#allocation3 + $0x8] sm:$0xff]
      %v1409 = vld [vmem:[#allocation3 + $0x10] sm:$0xff]
      %v1410 = vld [vmem:[#allocation3 + $0x18] sm:$0xff]
      %v1411 = vld [vmem:[#allocation3 + $0x20] sm:$0xff]
      %v1412 = vld [vmem:[#allocation3 + $0x28] sm:$0xff]
      %v1413 = vld [vmem:[#allocation3 + $0x30] sm:$0xff]
      %v1414 = vld [vmem:[#allocation3 + $0x38] sm:$0xff]
      %v1415 = vld [vmem:[#allocation3 + $0x40] sm:$0xff]
      %v1416 = vld [vmem:[#allocation3 + $0x48] sm:$0xff]
      %v1417 = vld [vmem:[#allocation3 + $0x50] sm:$0xff]
      %v1418 = vld [vmem:[#allocation3 + $0x58] sm:$0xff]
      %v1419 = vld [vmem:[#allocation3 + $0x60] sm:$0xff]
      %v1420 = vld [vmem:[#allocation3 + $0x68] sm:$0xff]
      %v1421 = vld [vmem:[#allocation3 + $0x70] sm:$0xff]
      %v1422 = vld [vmem:[#allocation3 + $0x78] sm:$0xff]
      %v1423 = vld [vmem:[#allocation3 + $0x80] sm:$0xff]
      %v1424 = vld [vmem:[#allocation3 + $0x88] sm:$0xff]
      %v1425 = vld [vmem:[#allocation3 + $0x90] sm:$0xff]
      %v1426 = vld [vmem:[#allocation3 + $0x98] sm:$0xff]
      %v1427 = vld [vmem:[#allocation3 + $0xa0] sm:$0xff]
      %v1428 = vld [vmem:[#allocation3 + $0xa8] sm:$0xff]
      %v1429 = vld [vmem:[#allocation3 + $0xb0] sm:$0xff]
      %v1430 = vld [vmem:[#allocation3 + $0xb8] sm:$0xff]
      %v1431 = vld [vmem:[#allocation3 + $0xc0] sm:$0xff]
      %v1432 = vld [vmem:[#allocation3 + $0xc8] sm:$0xff]
      %v1433 = vld [vmem:[#allocation3 + $0xd0] sm:$0xff]
      %v1434 = vld [vmem:[#allocation3 + $0xd8] sm:$0xff]
      %v1435 = vld [vmem:[#allocation3 + $0xe0] sm:$0xff]
      %v1436 = vld [vmem:[#allocation3 + $0xe8] sm:$0xff]
      %v1437 = vld [vmem:[#allocation3 + $0xf0] sm:$0xff]
      %v1438 = vld [vmem:[#allocation3 + $0xf8] sm:$0xff]
      %v1439 = vld [vmem:[#allocation3 + $0x100] sm:$0xff]
      %v1440 = vld [vmem:[#allocation3 + $0x108] sm:$0xff]
      %v1441 = vld [vmem:[#allocation3 + $0x110] sm:$0xff]
      %v1442 = vld [vmem:[#allocation3 + $0x118] sm:$0xff]
      %v1443 = vld [vmem:[#allocation3 + $0x120] sm:$0xff]
      %v1444 = vld [vmem:[#allocation3 + $0x128] sm:$0xff]
      %v1445 = vld [vmem:[#allocation3 + $0x130] sm:$0xff]
      %v1446 = vld [vmem:[#allocation3 + $0x138] sm:$0xff]
      %v1447 = vld [vmem:[#allocation3 + $0x140] sm:$0xff]
      %v1448 = vld [vmem:[#allocation3 + $0x148] sm:$0xff]
      %v1449 = vld [vmem:[#allocation3 + $0x150] sm:$0xff]
      %v1450 = vld [vmem:[#allocation3 + $0x158] sm:$0xff]
      %v1451 = vld [vmem:[#allocation3 + $0x160] sm:$0xff]
      %v1452 = vld [vmem:[#allocation3 + $0x168] sm:$0xff]
      %v1453 = vld [vmem:[#allocation3 + $0x170] sm:$0xff]
      %v1454 = vld [vmem:[#allocation3 + $0x178] sm:$0xff]
      %v1455 = vld [vmem:[#allocation3 + $0x180] sm:$0xff]
      %v1456 = vld [vmem:[#allocation3 + $0x188] sm:$0xff]
      %v1457 = vld [vmem:[#allocation3 + $0x190] sm:$0xff]
      %v1458 = vld [vmem:[#allocation3 + $0x198] sm:$0xff]
      %v1459 = vld [vmem:[#allocation3 + $0x1a0] sm:$0xff]
      %v1460 = vld [vmem:[#allocation3 + $0x1a8] sm:$0xff]
      %v1461 = vld [vmem:[#allocation3 + $0x1b0] sm:$0xff]
      %v1462 = vld [vmem:[#allocation3 + $0x1b8] sm:$0xff]
      %v1463 = vld [vmem:[#allocation3 + $0x1c0] sm:$0xff]
      %v1464 = vld [vmem:[#allocation3 + $0x1c8] sm:$0xff]
      %v1465 = vld [vmem:[#allocation3 + $0x1d0] sm:$0xff]
      %v1466 = vld [vmem:[#allocation3 + $0x1d8] sm:$0xff]
      %v1467 = vld [vmem:[#allocation3 + $0x1e0] sm:$0xff]
      %v1468 = vld [vmem:[#allocation3 + $0x1e8] sm:$0xff]
      %v1469 = vld [vmem:[#allocation3 + $0x1f0] sm:$0xff]
      %v1470 = vld [vmem:[#allocation3 + $0x1f8] sm:$0xff]
      %vm1537 = vcmask 1046528
      %v1538 = vrot.slane %v1241, 1
      %v1539 = vrot.slane %v1245, 1
      %v1540 = vsel %vm1537, %v1538, %v1539
      %v1541 = vrot.slane %v1243, 1
      %v1542 = vrot.slane %v1247, 1
      %v1543 = vsel %vm1537, %v1541, %v1542
      %v1544 = vrot.slane %v1251, 1
      %v1545 = vsel %vm1537, %v1539, %v1544
      %v1546 = vrot.slane %v1253, 1
      %v1547 = vsel %vm1537, %v1542, %v1546
      %v1548 = vrot.slane %v1255, 1
      %v1549 = vsel %vm1537, %v1544, %v1548
      %v1550 = vrot.slane %v1257, 1
      %v1551 = vsel %vm1537, %v1546, %v1550
      %v1552 = vrot.slane %v1261, 1
      %v1553 = vsel %vm1537, %v1548, %v1552
      %v1554 = vrot.slane %v1263, 1
      %v1555 = vsel %vm1537, %v1550, %v1554
      %v1556 = vrot.slane %v1265, 1
      %v1557 = vsel %vm1537, %v1552, %v1556
      %v1558 = vrot.slane %v1267, 1
      %v1559 = vsel %vm1537, %v1554, %v1558
      %v1560 = vrot.slane %v1271, 1
      %v1561 = vsel %vm1537, %v1556, %v1560
      %v1562 = vrot.slane %v1273, 1
      %v1563 = vsel %vm1537, %v1558, %v1562
      %v1564 = vrot.slane %v1275, 1
      %v1565 = vsel %vm1537, %v1560, %v1564
      %v1566 = vrot.slane %v1277, 1
      %v1567 = vsel %vm1537, %v1562, %v1566
      %v1568 = vrot.slane %v1281, 1
      %v1569 = vsel %vm1537, %v1564, %v1568
      %v1570 = vrot.slane %v1283, 1
      %v1571 = vsel %vm1537, %v1566, %v1570
      %v1572 = vrot.slane %v1285, 1
      %v1573 = vsel %vm1537, %v1568, %v1572
      %v1574 = vrot.slane %v1287, 1
      %v1575 = vsel %vm1537, %v1570, %v1574
      %v1576 = vrot.slane %v1291, 1
      %v1577 = vsel %vm1537, %v1572, %v1576
      %v1578 = vrot.slane %v1293, 1
      %v1579 = vsel %vm1537, %v1574, %v1578
      %v1580 = vrot.slane %v1295, 1
      %v1581 = vsel %vm1537, %v1576, %v1580
      %v1582 = vrot.slane %v1297, 1
      %v1583 = vsel %vm1537, %v1578, %v1582
      %v1584 = vrot.slane %v1301, 1
      %v1585 = vsel %vm1537, %v1580, %v1584
      %v1586 = vrot.slane %v1303, 1
      %v1587 = vsel %vm1537, %v1582, %v1586
      %v1588 = vrot.slane %v1305, 1
      %v1589 = vsel %vm1537, %v1584, %v1588
      %v1590 = vrot.slane %v1307, 1
      %v1591 = vsel %vm1537, %v1586, %v1590
      %v1592 = vrot.slane %v1311, 1
      %v1593 = vsel %vm1537, %v1588, %v1592
      %v1594 = vrot.slane %v1313, 1
      %v1595 = vsel %vm1537, %v1590, %v1594
      %v1596 = vrot.slane %v1315, 1
      %v1597 = vsel %vm1537, %v1592, %v1596
      %v1598 = vrot.slane %v1317, 1
      %v1599 = vsel %vm1537, %v1594, %v1598
      %v1600 = vrot.slane %v1321, 1
      %v1601 = vsel %vm1537, %v1596, %v1600
      %v1602 = vrot.slane %v1323, 1
      %v1603 = vsel %vm1537, %v1598, %v1602
      %v1604 = vrot.slane %v1325, 1
      %v1605 = vsel %vm1537, %v1600, %v1604
      %v1606 = vrot.slane %v1327, 1
      %v1607 = vsel %vm1537, %v1602, %v1606
      %v1608 = vrot.slane %v1331, 1
      %v1609 = vsel %vm1537, %v1604, %v1608
      %v1610 = vrot.slane %v1333, 1
      %v1611 = vsel %vm1537, %v1606, %v1610
      %v1612 = vrot.slane %v1335, 1
      %v1613 = vsel %vm1537, %v1608, %v1612
      %v1614 = vrot.slane %v1337, 1
      %v1615 = vsel %vm1537, %v1610, %v1614
      %v1616 = vrot.slane %v1341, 1
      %v1617 = vsel %vm1537, %v1612, %v1616
      %v1618 = vrot.slane %v1343, 1
      %v1619 = vsel %vm1537, %v1614, %v1618
      %v1620 = vrot.slane %v1345, 1
      %v1621 = vsel %vm1537, %v1616, %v1620
      %v1622 = vrot.slane %v1347, 1
      %v1623 = vsel %vm1537, %v1618, %v1622
      %v1624 = vrot.slane %v1351, 1
      %v1625 = vsel %vm1537, %v1620, %v1624
      %v1626 = vrot.slane %v1353, 1
      %v1627 = vsel %vm1537, %v1622, %v1626
      %v1628 = vrot.slane %v1355, 1
      %v1629 = vsel %vm1537, %v1624, %v1628
      %v1630 = vrot.slane %v1357, 1
      %v1631 = vsel %vm1537, %v1626, %v1630
      %v1632 = vrot.slane %v1361, 1
      %v1633 = vsel %vm1537, %v1628, %v1632
      %v1634 = vrot.slane %v1363, 1
      %v1635 = vsel %vm1537, %v1630, %v1634
      %v1636 = vrot.slane %v1365, 1
      %v1637 = vsel %vm1537, %v1632, %v1636
      %v1638 = vrot.slane %v1367, 1
      %v1639 = vsel %vm1537, %v1634, %v1638
      %v1640 = vrot.slane %v1371, 1
      %v1641 = vsel %vm1537, %v1636, %v1640
      %v1642 = vrot.slane %v1373, 1
      %v1643 = vsel %vm1537, %v1638, %v1642
      %v1644 = vrot.slane %v1375, 1
      %v1645 = vsel %vm1537, %v1640, %v1644
      %v1646 = vrot.slane %v1377, 1
      %v1647 = vsel %vm1537, %v1642, %v1646
      %v1648 = vrot.slane %v1381, 1
      %v1649 = vsel %vm1537, %v1644, %v1648
      %v1650 = vrot.slane %v1383, 1
      %v1651 = vsel %vm1537, %v1646, %v1650
      %v1652 = vrot.slane %v1385, 1
      %v1653 = vsel %vm1537, %v1648, %v1652
      %v1654 = vrot.slane %v1387, 1
      %v1655 = vsel %vm1537, %v1650, %v1654
      %v1656 = vrot.slane %v1391, 1
      %v1657 = vsel %vm1537, %v1652, %v1656
      %v1658 = vrot.slane %v1393, 1
      %v1659 = vsel %vm1537, %v1654, %v1658
      %v1660 = vrot.slane %v1395, 1
      %v1661 = vsel %vm1537, %v1656, %v1660
      %v1662 = vrot.slane %v1397, 1
      %v1663 = vsel %vm1537, %v1658, %v1662
      %v1664 = vrot.slane %v1401, 1
      %v1665 = vsel %vm1537, %v1660, %v1664
      %v1666 = vrot.slane %v1403, 1
      %v1667 = vsel %vm1537, %v1662, %v1666
      %v1732 = vadd.f32 %v1407, %v1540
      %v1733 = vadd.f32 %v1408, %v1543
      %v1734 = vadd.f32 %v1409, %v1545
      %v1735 = vadd.f32 %v1410, %v1547
      %v1736 = vadd.f32 %v1411, %v1549
      %v1737 = vadd.f32 %v1412, %v1551
      %v1738 = vadd.f32 %v1413, %v1553
      %v1739 = vadd.f32 %v1414, %v1555
      %v1740 = vadd.f32 %v1415, %v1557
      %v1741 = vadd.f32 %v1416, %v1559
      %v1742 = vadd.f32 %v1417, %v1561
      %v1743 = vadd.f32 %v1418, %v1563
      %v1744 = vadd.f32 %v1419, %v1565
      %v1745 = vadd.f32 %v1420, %v1567
      %v1746 = vadd.f32 %v1421, %v1569
      %v1747 = vadd.f32 %v1422, %v1571
      %v1748 = vadd.f32 %v1423, %v1573
      %v1749 = vadd.f32 %v1424, %v1575
      %v1750 = vadd.f32 %v1425, %v1577
      %v1751 = vadd.f32 %v1426, %v1579
      %v1752 = vadd.f32 %v1427, %v1581
      %v1753 = vadd.f32 %v1428, %v1583
      %v1754 = vadd.f32 %v1429, %v1585
      %v1755 = vadd.f32 %v1430, %v1587
      %v1756 = vadd.f32 %v1431, %v1589
      %v1757 = vadd.f32 %v1432, %v1591
      %v1758 = vadd.f32 %v1433, %v1593
      %v1759 = vadd.f32 %v1434, %v1595
      %v1760 = vadd.f32 %v1435, %v1597
      %v1761 = vadd.f32 %v1436, %v1599
      %v1762 = vadd.f32 %v1437, %v1601
      %v1763 = vadd.f32 %v1438, %v1603
      %v1764 = vadd.f32 %v1439, %v1605
      %v1765 = vadd.f32 %v1440, %v1607
      %v1766 = vadd.f32 %v1441, %v1609
      %v1767 = vadd.f32 %v1442, %v1611
      %v1768 = vadd.f32 %v1443, %v1613
      %v1769 = vadd.f32 %v1444, %v1615
      %v1770 = vadd.f32 %v1445, %v1617
      %v1771 = vadd.f32 %v1446, %v1619
      %v1772 = vadd.f32 %v1447, %v1621
      %v1773 = vadd.f32 %v1448, %v1623
      %v1774 = vadd.f32 %v1449, %v1625
      %v1775 = vadd.f32 %v1450, %v1627
      %v1776 = vadd.f32 %v1451, %v1629
      %v1777 = vadd.f32 %v1452, %v1631
      %v1778 = vadd.f32 %v1453, %v1633
      %v1779 = vadd.f32 %v1454, %v1635
      %v1780 = vadd.f32 %v1455, %v1637
      %v1781 = vadd.f32 %v1456, %v1639
      %v1782 = vadd.f32 %v1457, %v1641
      %v1783 = vadd.f32 %v1458, %v1643
      %v1784 = vadd.f32 %v1459, %v1645
      %v1785 = vadd.f32 %v1460, %v1647
      %v1786 = vadd.f32 %v1461, %v1649
      %v1787 = vadd.f32 %v1462, %v1651
      %v1788 = vadd.f32 %v1463, %v1653
      %v1789 = vadd.f32 %v1464, %v1655
      %v1790 = vadd.f32 %v1465, %v1657
      %v1791 = vadd.f32 %v1466, %v1659
      %v1792 = vadd.f32 %v1467, %v1661
      %v1793 = vadd.f32 %v1468, %v1663
      %v1794 = vadd.f32 %v1469, %v1665
      %v1795 = vadd.f32 %v1470, %v1667
      %1796 = vst [vmem:[#allocation3] sm:$0xff] %v1732
      %1797 = vst [vmem:[#allocation3 + $0x8] sm:$0xff] %v1733
      %1798 = vst [vmem:[#allocation3 + $0x10] sm:$0xff] %v1734
      %1799 = vst [vmem:[#allocation3 + $0x18] sm:$0xff] %v1735
      %1800 = vst [vmem:[#allocation3 + $0x20] sm:$0xff] %v1736
      %1801 = vst [vmem:[#allocation3 + $0x28] sm:$0xff] %v1737
      %1802 = vst [vmem:[#allocation3 + $0x30] sm:$0xff] %v1738
      %1803 = vst [vmem:[#allocation3 + $0x38] sm:$0xff] %v1739
      %1804 = vst [vmem:[#allocation3 + $0x40] sm:$0xff] %v1740
      %1805 = vst [vmem:[#allocation3 + $0x48] sm:$0xff] %v1741
      %1806 = vst [vmem:[#allocation3 + $0x50] sm:$0xff] %v1742
      %1807 = vst [vmem:[#allocation3 + $0x58] sm:$0xff] %v1743
      %1808 = vst [vmem:[#allocation3 + $0x60] sm:$0xff] %v1744
      %1809 = vst [vmem:[#allocation3 + $0x68] sm:$0xff] %v1745
      %1810 = vst [vmem:[#allocation3 + $0x70] sm:$0xff] %v1746
      %1811 = vst [vmem:[#allocation3 + $0x78] sm:$0xff] %v1747
      %1812 = vst [vmem:[#allocation3 + $0x80] sm:$0xff] %v1748
      %1813 = vst [vmem:[#allocation3 + $0x88] sm:$0xff] %v1749
      %1814 = vst [vmem:[#allocation3 + $0x90] sm:$0xff] %v1750
      %1815 = vst [vmem:[#allocation3 + $0x98] sm:$0xff] %v1751
      %1816 = vst [vmem:[#allocation3 + $0xa0] sm:$0xff] %v1752
      %1817 = vst [vmem:[#allocation3 + $0xa8] sm:$0xff] %v1753
      %1818 = vst [vmem:[#allocation3 + $0xb0] sm:$0xff] %v1754
      %1819 = vst [vmem:[#allocation3 + $0xb8] sm:$0xff] %v1755
      %1820 = vst [vmem:[#allocation3 + $0xc0] sm:$0xff] %v1756
      %1821 = vst [vmem:[#allocation3 + $0xc8] sm:$0xff] %v1757
      %1822 = vst [vmem:[#allocation3 + $0xd0] sm:$0xff] %v1758
      %1823 = vst [vmem:[#allocation3 + $0xd8] sm:$0xff] %v1759
      %1824 = vst [vmem:[#allocation3 + $0xe0] sm:$0xff] %v1760
      %1825 = vst [vmem:[#allocation3 + $0xe8] sm:$0xff] %v1761
      %1826 = vst [vmem:[#allocation3 + $0xf0] sm:$0xff] %v1762
      %1827 = vst [vmem:[#allocation3 + $0xf8] sm:$0xff] %v1763
      %1828 = vst [vmem:[#allocation3 + $0x100] sm:$0xff] %v1764
      %1829 = vst [vmem:[#allocation3 + $0x108] sm:$0xff] %v1765
      %1830 = vst [vmem:[#allocation3 + $0x110] sm:$0xff] %v1766
      %1831 = vst [vmem:[#allocation3 + $0x118] sm:$0xff] %v1767
      %1832 = vst [vmem:[#allocation3 + $0x120] sm:$0xff] %v1768
      %1833 = vst [vmem:[#allocation3 + $0x128] sm:$0xff] %v1769
      %1834 = vst [vmem:[#allocation3 + $0x130] sm:$0xff] %v1770
      %1835 = vst [vmem:[#allocation3 + $0x138] sm:$0xff] %v1771
      %1836 = vst [vmem:[#allocation3 + $0x140] sm:$0xff] %v1772
      %1837 = vst [vmem:[#allocation3 + $0x148] sm:$0xff] %v1773
      %1838 = vst [vmem:[#allocation3 + $0x150] sm:$0xff] %v1774
      %1839 = vst [vmem:[#allocation3 + $0x158] sm:$0xff] %v1775
      %1840 = vst [vmem:[#allocation3 + $0x160] sm:$0xff] %v1776
      %1841 = vst [vmem:[#allocation3 + $0x168] sm:$0xff] %v1777
      %1842 = vst [vmem:[#allocation3 + $0x170] sm:$0xff] %v1778
      %1843 = vst [vmem:[#allocation3 + $0x178] sm:$0xff] %v1779
      %1844 = vst [vmem:[#allocation3 + $0x180] sm:$0xff] %v1780
      %1845 = vst [vmem:[#allocation3 + $0x188] sm:$0xff] %v1781
      %1846 = vst [vmem:[#allocation3 + $0x190] sm:$0xff] %v1782
      %1847 = vst [vmem:[#allocation3 + $0x198] sm:$0xff] %v1783
      %1848 = vst [vmem:[#allocation3 + $0x1a0] sm:$0xff] %v1784
      %1849 = vst [vmem:[#allocation3 + $0x1a8] sm:$0xff] %v1785
      %1850 = vst [vmem:[#allocation3 + $0x1b0] sm:$0xff] %v1786
      %1851 = vst [vmem:[#allocation3 + $0x1b8] sm:$0xff] %v1787
      %1852 = vst [vmem:[#allocation3 + $0x1c0] sm:$0xff] %v1788
      %1853 = vst [vmem:[#allocation3 + $0x1c8] sm:$0xff] %v1789
      %1854 = vst [vmem:[#allocation3 + $0x1d0] sm:$0xff] %v1790
      %1855 = vst [vmem:[#allocation3 + $0x1d8] sm:$0xff] %v1791
      %1856 = vst [vmem:[#allocation3 + $0x1e0] sm:$0xff] %v1792
      %1857 = vst [vmem:[#allocation3 + $0x1e8] sm:$0xff] %v1793
      %1858 = vst [vmem:[#allocation3 + $0x1f0] sm:$0xff] %v1794
      %1859 = vst [vmem:[#allocation3 + $0x1f8] sm:$0xff] %v1795
      %s1860 = sadd.s32 %s444, 2
      %s1861 = smul.u32 %s1860, 32
      %s1862 = smul.addr %s1861, 4
      %s1863 = scalar_lea.vmem %s1, %s1862
      %v1864 = vld [vmem:[%s1863] sm:$0xff]
      %v1865 = vld [vmem:[%s1863 + $0x8] sm:$0xff]
      %v1866 = vld [vmem:[%s1863 + $0x10] sm:$0xff]
      %v1867 = vld [vmem:[%s1863 + $0x18] sm:$0xff]
      %v1868 = vld [vmem:[%s1863 + $0x20] sm:$0xff]
      %v1869 = vld [vmem:[%s1863 + $0x28] sm:$0xff]
      %v1870 = vld [vmem:[%s1863 + $0x30] sm:$0xff]
      %v1871 = vld [vmem:[%s1863 + $0x38] sm:$0xff]
      %v1872 = vld [vmem:[%s1863 + $0x40] sm:$0xff]
      %v1873 = vld [vmem:[%s1863 + $0x48] sm:$0xff]
      %v1874 = vld [vmem:[%s1863 + $0x50] sm:$0xff]
      %v1875 = vld [vmem:[%s1863 + $0x58] sm:$0xff]
      %v1876 = vld [vmem:[%s1863 + $0x60] sm:$0xff]
      %v1877 = vld [vmem:[%s1863 + $0x68] sm:$0xff]
      %v1878 = vld [vmem:[%s1863 + $0x70] sm:$0xff]
      %v1879 = vld [vmem:[%s1863 + $0x78] sm:$0xff]
      %v1896 = vunpack.c.l.b16 %v1864
      %v1897 = vunpack.c.h.b16 %v1864
      %v1898 = vunpack.c.l.b16 %v1865
      %v1899 = vunpack.c.h.b16 %v1865
      %v1900 = vunpack.c.l.b16 %v1866
      %v1901 = vunpack.c.h.b16 %v1866
      %v1902 = vunpack.c.l.b16 %v1867
      %v1903 = vunpack.c.h.b16 %v1867
      %v1904 = vunpack.c.l.b16 %v1868
      %v1905 = vunpack.c.h.b16 %v1868
      %v1906 = vunpack.c.l.b16 %v1869
      %v1907 = vunpack.c.h.b16 %v1869
      %v1908 = vunpack.c.l.b16 %v1870
      %v1909 = vunpack.c.h.b16 %v1870
      %v1910 = vunpack.c.l.b16 %v1871
      %v1911 = vunpack.c.h.b16 %v1871
      %v1912 = vunpack.c.l.b16 %v1872
      %v1913 = vunpack.c.h.b16 %v1872
      %v1914 = vunpack.c.l.b16 %v1873
      %v1915 = vunpack.c.h.b16 %v1873
      %v1916 = vunpack.c.l.b16 %v1874
      %v1917 = vunpack.c.h.b16 %v1874
      %v1918 = vunpack.c.l.b16 %v1875
      %v1919 = vunpack.c.h.b16 %v1875
      %v1920 = vunpack.c.l.b16 %v1876
      %v1921 = vunpack.c.h.b16 %v1876
      %v1922 = vunpack.c.l.b16 %v1877
      %v1923 = vunpack.c.h.b16 %v1877
      %v1924 = vunpack.c.l.b16 %v1878
      %v1925 = vunpack.c.h.b16 %v1878
      %v1926 = vunpack.c.l.b16 %v1879
      %v1927 = vunpack.c.h.b16 %v1879
      %v1928 = vpack.c.b16 %v1898, %v1896
      %v1929 = vpack.c.b16 %v1899, %v1897
      %v1930 = vpack.c.b16 %v1902, %v1900
      %v1931 = vpack.c.b16 %v1903, %v1901
      %v1932 = vpack.c.b16 %v1906, %v1904
      %v1933 = vpack.c.b16 %v1907, %v1905
      %v1934 = vpack.c.b16 %v1910, %v1908
      %v1935 = vpack.c.b16 %v1911, %v1909
      %v1936 = vpack.c.b16 %v1914, %v1912
      %v1937 = vpack.c.b16 %v1915, %v1913
      %v1938 = vpack.c.b16 %v1918, %v1916
      %v1939 = vpack.c.b16 %v1919, %v1917
      %v1940 = vpack.c.b16 %v1922, %v1920
      %v1941 = vpack.c.b16 %v1923, %v1921
      %v1942 = vpack.c.b16 %v1926, %v1924
      %v1943 = vpack.c.b16 %v1927, %v1925
      %1960 = vmatprep.subr.bf16.mxu0 %v1943
      %1961 = vmatpush1.bf16.msra.mxu0 %v1942
      %1962 = vmatprep.subr.bf16.mxu0 %v1941
      %1963 = vmatpush1.bf16.msra.mxu0 %v1940
      %1964 = vmatprep.subr.bf16.mxu0 %v1939
      %1965 = vmatpush1.bf16.msra.mxu0 %v1938
      %1966 = vmatprep.subr.bf16.mxu0 %v1937
      %1967 = vmatpush1.bf16.msra.mxu0 %v1936
      %1968 = vmatprep.subr.bf16.mxu0 %v1935
      %1969 = vmatpush1.bf16.msra.mxu0 %v1934
      %1970 = vmatprep.subr.bf16.mxu0 %v1933
      %1971 = vmatpush1.bf16.msra.mxu0 %v1932
      %1972 = vmatprep.subr.bf16.mxu0 %v1931
      %1973 = vmatpush1.bf16.msra.mxu0 %v1930
      %1974 = vmatprep.subr.bf16.mxu0 %v1929
      %1975 = vmatpush1.bf16.msra.mxu0 %v1928
      %1976 = vmatprep.subr.bf16.mxu0 0
      %1977 = vmatpush2.bf16.msra.mxu0 0
      %1978 = vmatprep.subr.bf16.mxu0 0
      %1979 = vmatpush2.bf16.msra.mxu0 0
      %1980 = vmatprep.subr.bf16.mxu0 0
      %1981 = vmatpush2.bf16.msra.mxu0 0
      %1982 = vmatprep.subr.bf16.mxu0 0
      %1983 = vmatpush2.bf16.msra.mxu0 0
      %1984 = vmatprep.subr.bf16.mxu0 0
      %1985 = vmatpush2.bf16.msra.mxu0 0
      %1986 = vmatprep.subr.bf16.mxu0 0
      %1987 = vmatpush2.bf16.msra.mxu0 0
      %1988 = vmatprep.subr.bf16.mxu0 0
      %1989 = vmatpush2.bf16.msra.mxu0 0
      %1990 = vmatprep.subr.bf16.mxu0 0
      %1991 = vmatpush2.bf16.msra.mxu0 0
      %1992 = vmatprep.mubr.bf16.mxu0 0
      %1993 = vmatmul.mubr.bf16.gmra.mxu0 %v530
      %v1994 = vpop.f32.mrf.mxu0
      %v1995 = vadd.f32 0.0, %v1994
      %v1996 = vpop.f32.mrf.mxu0
      %v1997 = vadd.f32 0.0, %v1996
      %v1998 = vpop.f32.mrf.mxu0
      %v1999 = vadd.f32 0.0, %v1998
      %v2000 = vpop.f32.mrf.mxu0
      %v2001 = vadd.f32 0.0, %v2000
      %2002 = vmatprep.mubr.bf16.mxu0 0
      %2003 = vmatmul.mubr.bf16.gmra.mxu0 %v531
      %v2004 = vpop.f32.mrf.mxu0
      %v2005 = vadd.f32 0.0, %v2004
      %v2006 = vpop.f32.mrf.mxu0
      %v2007 = vadd.f32 0.0, %v2006
      %v2008 = vpop.f32.mrf.mxu0
      %v2009 = vadd.f32 0.0, %v2008
      %v2010 = vpop.f32.mrf.mxu0
      %v2011 = vadd.f32 0.0, %v2010
      %2012 = vmatprep.mubr.bf16.mxu0 0
      %2013 = vmatmul.mubr.bf16.gmra.mxu0 %v532
      %v2014 = vpop.f32.mrf.mxu0
      %v2015 = vadd.f32 0.0, %v2014
      %v2016 = vpop.f32.mrf.mxu0
      %v2017 = vadd.f32 0.0, %v2016
      %v2018 = vpop.f32.mrf.mxu0
      %v2019 = vadd.f32 0.0, %v2018
      %v2020 = vpop.f32.mrf.mxu0
      %v2021 = vadd.f32 0.0, %v2020
      %2022 = vmatprep.mubr.bf16.mxu0 0
      %2023 = vmatmul.mubr.bf16.gmra.mxu0 %v533
      %v2024 = vpop.f32.mrf.mxu0
      %v2025 = vadd.f32 0.0, %v2024
      %v2026 = vpop.f32.mrf.mxu0
      %v2027 = vadd.f32 0.0, %v2026
      %v2028 = vpop.f32.mrf.mxu0
      %v2029 = vadd.f32 0.0, %v2028
      %v2030 = vpop.f32.mrf.mxu0
      %v2031 = vadd.f32 0.0, %v2030
      %2032 = vmatprep.mubr.bf16.mxu0 0
      %2033 = vmatmul.mubr.bf16.gmra.mxu0 %v534
      %v2034 = vpop.f32.mrf.mxu0
      %v2035 = vadd.f32 0.0, %v2034
      %v2036 = vpop.f32.mrf.mxu0
      %v2037 = vadd.f32 0.0, %v2036
      %v2038 = vpop.f32.mrf.mxu0
      %v2039 = vadd.f32 0.0, %v2038
      %v2040 = vpop.f32.mrf.mxu0
      %v2041 = vadd.f32 0.0, %v2040
      %2042 = vmatprep.mubr.bf16.mxu0 0
      %2043 = vmatmul.mubr.bf16.gmra.mxu0 %v535
      %v2044 = vpop.f32.mrf.mxu0
      %v2045 = vadd.f32 0.0, %v2044
      %v2046 = vpop.f32.mrf.mxu0
      %v2047 = vadd.f32 0.0, %v2046
      %v2048 = vpop.f32.mrf.mxu0
      %v2049 = vadd.f32 0.0, %v2048
      %v2050 = vpop.f32.mrf.mxu0
      %v2051 = vadd.f32 0.0, %v2050
      %2052 = vmatprep.mubr.bf16.mxu0 0
      %2053 = vmatmul.mubr.bf16.gmra.mxu0 %v536
      %v2054 = vpop.f32.mrf.mxu0
      %v2055 = vadd.f32 0.0, %v2054
      %v2056 = vpop.f32.mrf.mxu0
      %v2057 = vadd.f32 0.0, %v2056
      %v2058 = vpop.f32.mrf.mxu0
      %v2059 = vadd.f32 0.0, %v2058
      %v2060 = vpop.f32.mrf.mxu0
      %v2061 = vadd.f32 0.0, %v2060
      %2062 = vmatprep.mubr.bf16.mxu0 0
      %2063 = vmatmul.mubr.bf16.gmra.mxu0 %v537
      %v2064 = vpop.f32.mrf.mxu0
      %v2065 = vadd.f32 0.0, %v2064
      %v2066 = vpop.f32.mrf.mxu0
      %v2067 = vadd.f32 0.0, %v2066
      %v2068 = vpop.f32.mrf.mxu0
      %v2069 = vadd.f32 0.0, %v2068
      %v2070 = vpop.f32.mrf.mxu0
      %v2071 = vadd.f32 0.0, %v2070
      %2072 = vmatprep.mubr.bf16.mxu0 0
      %2073 = vmatmul.mubr.bf16.gmra.mxu0 %v538
      %v2074 = vpop.f32.mrf.mxu0
      %v2075 = vadd.f32 0.0, %v2074
      %v2076 = vpop.f32.mrf.mxu0
      %v2077 = vadd.f32 0.0, %v2076
      %v2078 = vpop.f32.mrf.mxu0
      %v2079 = vadd.f32 0.0, %v2078
      %v2080 = vpop.f32.mrf.mxu0
      %v2081 = vadd.f32 0.0, %v2080
      %2082 = vmatprep.mubr.bf16.mxu0 0
      %2083 = vmatmul.mubr.bf16.gmra.mxu0 %v539
      %v2084 = vpop.f32.mrf.mxu0
      %v2085 = vadd.f32 0.0, %v2084
      %v2086 = vpop.f32.mrf.mxu0
      %v2087 = vadd.f32 0.0, %v2086
      %v2088 = vpop.f32.mrf.mxu0
      %v2089 = vadd.f32 0.0, %v2088
      %v2090 = vpop.f32.mrf.mxu0
      %v2091 = vadd.f32 0.0, %v2090
      %2092 = vmatprep.mubr.bf16.mxu0 0
      %2093 = vmatmul.mubr.bf16.gmra.mxu0 %v540
      %v2094 = vpop.f32.mrf.mxu0
      %v2095 = vadd.f32 0.0, %v2094
      %v2096 = vpop.f32.mrf.mxu0
      %v2097 = vadd.f32 0.0, %v2096
      %v2098 = vpop.f32.mrf.mxu0
      %v2099 = vadd.f32 0.0, %v2098
      %v2100 = vpop.f32.mrf.mxu0
      %v2101 = vadd.f32 0.0, %v2100
      %2102 = vmatprep.mubr.bf16.mxu0 0
      %2103 = vmatmul.mubr.bf16.gmra.mxu0 %v541
      %v2104 = vpop.f32.mrf.mxu0
      %v2105 = vadd.f32 0.0, %v2104
      %v2106 = vpop.f32.mrf.mxu0
      %v2107 = vadd.f32 0.0, %v2106
      %v2108 = vpop.f32.mrf.mxu0
      %v2109 = vadd.f32 0.0, %v2108
      %v2110 = vpop.f32.mrf.mxu0
      %v2111 = vadd.f32 0.0, %v2110
      %2112 = vmatprep.mubr.bf16.mxu0 0
      %2113 = vmatmul.mubr.bf16.gmra.mxu0 %v542
      %v2114 = vpop.f32.mrf.mxu0
      %v2115 = vadd.f32 0.0, %v2114
      %v2116 = vpop.f32.mrf.mxu0
      %v2117 = vadd.f32 0.0, %v2116
      %v2118 = vpop.f32.mrf.mxu0
      %v2119 = vadd.f32 0.0, %v2118
      %v2120 = vpop.f32.mrf.mxu0
      %v2121 = vadd.f32 0.0, %v2120
      %2122 = vmatprep.mubr.bf16.mxu0 0
      %2123 = vmatmul.mubr.bf16.gmra.mxu0 %v543
      %v2124 = vpop.f32.mrf.mxu0
      %v2125 = vadd.f32 0.0, %v2124
      %v2126 = vpop.f32.mrf.mxu0
      %v2127 = vadd.f32 0.0, %v2126
      %v2128 = vpop.f32.mrf.mxu0
      %v2129 = vadd.f32 0.0, %v2128
      %v2130 = vpop.f32.mrf.mxu0
      %v2131 = vadd.f32 0.0, %v2130
      %2132 = vmatprep.mubr.bf16.mxu0 0
      %2133 = vmatmul.mubr.bf16.gmra.mxu0 %v544
      %v2134 = vpop.f32.mrf.mxu0
      %v2135 = vadd.f32 0.0, %v2134
      %v2136 = vpop.f32.mrf.mxu0
      %v2137 = vadd.f32 0.0, %v2136
      %v2138 = vpop.f32.mrf.mxu0
      %v2139 = vadd.f32 0.0, %v2138
      %v2140 = vpop.f32.mrf.mxu0
      %v2141 = vadd.f32 0.0, %v2140
      %2142 = vmatprep.mubr.bf16.mxu0 0
      %2143 = vmatmul.mubr.bf16.gmra.mxu0 %v545
      %v2144 = vpop.f32.mrf.mxu0
      %v2145 = vadd.f32 0.0, %v2144
      %v2146 = vpop.f32.mrf.mxu0
      %v2147 = vadd.f32 0.0, %v2146
      %v2148 = vpop.f32.mrf.mxu0
      %v2149 = vadd.f32 0.0, %v2148
      %v2150 = vpop.f32.mrf.mxu0
      %v2151 = vadd.f32 0.0, %v2150
      %2152 = vmatprep.mubr.bf16.mxu0 0
      %2153 = vmatmul.mubr.bf16.gmra.mxu0 %v546
      %v2154 = vpop.f32.mrf.mxu0
      %v2155 = vadd.f32 0.0, %v2154
      %v2156 = vpop.f32.mrf.mxu0
      %v2157 = vadd.f32 0.0, %v2156
      %v2158 = vpop.f32.mrf.mxu0
      %v2159 = vpop.f32.mrf.mxu0
      %2160 = vdwg.mxu0
      %v2161 = vld [vmem:[#allocation3] sm:$0xff]
      %v2162 = vld [vmem:[#allocation3 + $0x8] sm:$0xff]
      %v2163 = vld [vmem:[#allocation3 + $0x10] sm:$0xff]
      %v2164 = vld [vmem:[#allocation3 + $0x18] sm:$0xff]
      %v2165 = vld [vmem:[#allocation3 + $0x20] sm:$0xff]
      %v2166 = vld [vmem:[#allocation3 + $0x28] sm:$0xff]
      %v2167 = vld [vmem:[#allocation3 + $0x30] sm:$0xff]
      %v2168 = vld [vmem:[#allocation3 + $0x38] sm:$0xff]
      %v2169 = vld [vmem:[#allocation3 + $0x40] sm:$0xff]
      %v2170 = vld [vmem:[#allocation3 + $0x48] sm:$0xff]
      %v2171 = vld [vmem:[#allocation3 + $0x50] sm:$0xff]
      %v2172 = vld [vmem:[#allocation3 + $0x58] sm:$0xff]
      %v2173 = vld [vmem:[#allocation3 + $0x60] sm:$0xff]
      %v2174 = vld [vmem:[#allocation3 + $0x68] sm:$0xff]
      %v2175 = vld [vmem:[#allocation3 + $0x70] sm:$0xff]
      %v2176 = vld [vmem:[#allocation3 + $0x78] sm:$0xff]
      %v2177 = vld [vmem:[#allocation3 + $0x80] sm:$0xff]
      %v2178 = vld [vmem:[#allocation3 + $0x88] sm:$0xff]
      %v2179 = vld [vmem:[#allocation3 + $0x90] sm:$0xff]
      %v2180 = vld [vmem:[#allocation3 + $0x98] sm:$0xff]
      %v2181 = vld [vmem:[#allocation3 + $0xa0] sm:$0xff]
      %v2182 = vld [vmem:[#allocation3 + $0xa8] sm:$0xff]
      %v2183 = vld [vmem:[#allocation3 + $0xb0] sm:$0xff]
      %v2184 = vld [vmem:[#allocation3 + $0xb8] sm:$0xff]
      %v2185 = vld [vmem:[#allocation3 + $0xc0] sm:$0xff]
      %v2186 = vld [vmem:[#allocation3 + $0xc8] sm:$0xff]
      %v2187 = vld [vmem:[#allocation3 + $0xd0] sm:$0xff]
      %v2188 = vld [vmem:[#allocation3 + $0xd8] sm:$0xff]
      %v2189 = vld [vmem:[#allocation3 + $0xe0] sm:$0xff]
      %v2190 = vld [vmem:[#allocation3 + $0xe8] sm:$0xff]
      %v2191 = vld [vmem:[#allocation3 + $0xf0] sm:$0xff]
      %v2192 = vld [vmem:[#allocation3 + $0xf8] sm:$0xff]
      %v2193 = vld [vmem:[#allocation3 + $0x100] sm:$0xff]
      %v2194 = vld [vmem:[#allocation3 + $0x108] sm:$0xff]
      %v2195 = vld [vmem:[#allocation3 + $0x110] sm:$0xff]
      %v2196 = vld [vmem:[#allocation3 + $0x118] sm:$0xff]
      %v2197 = vld [vmem:[#allocation3 + $0x120] sm:$0xff]
      %v2198 = vld [vmem:[#allocation3 + $0x128] sm:$0xff]
      %v2199 = vld [vmem:[#allocation3 + $0x130] sm:$0xff]
      %v2200 = vld [vmem:[#allocation3 + $0x138] sm:$0xff]
      %v2201 = vld [vmem:[#allocation3 + $0x140] sm:$0xff]
      %v2202 = vld [vmem:[#allocation3 + $0x148] sm:$0xff]
      %v2203 = vld [vmem:[#allocation3 + $0x150] sm:$0xff]
      %v2204 = vld [vmem:[#allocation3 + $0x158] sm:$0xff]
      %v2205 = vld [vmem:[#allocation3 + $0x160] sm:$0xff]
      %v2206 = vld [vmem:[#allocation3 + $0x168] sm:$0xff]
      %v2207 = vld [vmem:[#allocation3 + $0x170] sm:$0xff]
      %v2208 = vld [vmem:[#allocation3 + $0x178] sm:$0xff]
      %v2209 = vld [vmem:[#allocation3 + $0x180] sm:$0xff]
      %v2210 = vld [vmem:[#allocation3 + $0x188] sm:$0xff]
      %v2211 = vld [vmem:[#allocation3 + $0x190] sm:$0xff]
      %v2212 = vld [vmem:[#allocation3 + $0x198] sm:$0xff]
      %v2213 = vld [vmem:[#allocation3 + $0x1a0] sm:$0xff]
      %v2214 = vld [vmem:[#allocation3 + $0x1a8] sm:$0xff]
      %v2215 = vld [vmem:[#allocation3 + $0x1b0] sm:$0xff]
      %v2216 = vld [vmem:[#allocation3 + $0x1b8] sm:$0xff]
      %v2217 = vld [vmem:[#allocation3 + $0x1c0] sm:$0xff]
      %v2218 = vld [vmem:[#allocation3 + $0x1c8] sm:$0xff]
      %v2219 = vld [vmem:[#allocation3 + $0x1d0] sm:$0xff]
      %v2220 = vld [vmem:[#allocation3 + $0x1d8] sm:$0xff]
      %v2221 = vld [vmem:[#allocation3 + $0x1e0] sm:$0xff]
      %v2222 = vld [vmem:[#allocation3 + $0x1e8] sm:$0xff]
      %v2223 = vld [vmem:[#allocation3 + $0x1f0] sm:$0xff]
      %v2224 = vld [vmem:[#allocation3 + $0x1f8] sm:$0xff]
      %vm2291 = vcmask 1045504
      %v2292 = vrot.slane %v1995, 2
      %v2293 = vrot.slane %v1999, 2
      %v2294 = vsel %vm2291, %v2292, %v2293
      %v2295 = vrot.slane %v1997, 2
      %v2296 = vrot.slane %v2001, 2
      %v2297 = vsel %vm2291, %v2295, %v2296
      %v2298 = vrot.slane %v2005, 2
      %v2299 = vsel %vm2291, %v2293, %v2298
      %v2300 = vrot.slane %v2007, 2
      %v2301 = vsel %vm2291, %v2296, %v2300
      %v2302 = vrot.slane %v2009, 2
      %v2303 = vsel %vm2291, %v2298, %v2302
      %v2304 = vrot.slane %v2011, 2
      %v2305 = vsel %vm2291, %v2300, %v2304
      %v2306 = vrot.slane %v2015, 2
      %v2307 = vsel %vm2291, %v2302, %v2306
      %v2308 = vrot.slane %v2017, 2
      %v2309 = vsel %vm2291, %v2304, %v2308
      %v2310 = vrot.slane %v2019, 2
      %v2311 = vsel %vm2291, %v2306, %v2310
      %v2312 = vrot.slane %v2021, 2
      %v2313 = vsel %vm2291, %v2308, %v2312
      %v2314 = vrot.slane %v2025, 2
      %v2315 = vsel %vm2291, %v2310, %v2314
      %v2316 = vrot.slane %v2027, 2
      %v2317 = vsel %vm2291, %v2312, %v2316
      %v2318 = vrot.slane %v2029, 2
      %v2319 = vsel %vm2291, %v2314, %v2318
      %v2320 = vrot.slane %v2031, 2
      %v2321 = vsel %vm2291, %v2316, %v2320
      %v2322 = vrot.slane %v2035, 2
      %v2323 = vsel %vm2291, %v2318, %v2322
      %v2324 = vrot.slane %v2037, 2
      %v2325 = vsel %vm2291, %v2320, %v2324
      %v2326 = vrot.slane %v2039, 2
      %v2327 = vsel %vm2291, %v2322, %v2326
      %v2328 = vrot.slane %v2041, 2
      %v2329 = vsel %vm2291, %v2324, %v2328
      %v2330 = vrot.slane %v2045, 2
      %v2331 = vsel %vm2291, %v2326, %v2330
      %v2332 = vrot.slane %v2047, 2
      %v2333 = vsel %vm2291, %v2328, %v2332
      %v2334 = vrot.slane %v2049, 2
      %v2335 = vsel %vm2291, %v2330, %v2334
      %v2336 = vrot.slane %v2051, 2
      %v2337 = vsel %vm2291, %v2332, %v2336
      %v2338 = vrot.slane %v2055, 2
      %v2339 = vsel %vm2291, %v2334, %v2338
      %v2340 = vrot.slane %v2057, 2
      %v2341 = vsel %vm2291, %v2336, %v2340
      %v2342 = vrot.slane %v2059, 2
      %v2343 = vsel %vm2291, %v2338, %v2342
      %v2344 = vrot.slane %v2061, 2
      %v2345 = vsel %vm2291, %v2340, %v2344
      %v2346 = vrot.slane %v2065, 2
      %v2347 = vsel %vm2291, %v2342, %v2346
      %v2348 = vrot.slane %v2067, 2
      %v2349 = vsel %vm2291, %v2344, %v2348
      %v2350 = vrot.slane %v2069, 2
      %v2351 = vsel %vm2291, %v2346, %v2350
      %v2352 = vrot.slane %v2071, 2
      %v2353 = vsel %vm2291, %v2348, %v2352
      %v2354 = vrot.slane %v2075, 2
      %v2355 = vsel %vm2291, %v2350, %v2354
      %v2356 = vrot.slane %v2077, 2
      %v2357 = vsel %vm2291, %v2352, %v2356
      %v2358 = vrot.slane %v2079, 2
      %v2359 = vsel %vm2291, %v2354, %v2358
      %v2360 = vrot.slane %v2081, 2
      %v2361 = vsel %vm2291, %v2356, %v2360
      %v2362 = vrot.slane %v2085, 2
      %v2363 = vsel %vm2291, %v2358, %v2362
      %v2364 = vrot.slane %v2087, 2
      %v2365 = vsel %vm2291, %v2360, %v2364
      %v2366 = vrot.slane %v2089, 2
      %v2367 = vsel %vm2291, %v2362, %v2366
      %v2368 = vrot.slane %v2091, 2
      %v2369 = vsel %vm2291, %v2364, %v2368
      %v2370 = vrot.slane %v2095, 2
      %v2371 = vsel %vm2291, %v2366, %v2370
      %v2372 = vrot.slane %v2097, 2
      %v2373 = vsel %vm2291, %v2368, %v2372
      %v2374 = vrot.slane %v2099, 2
      %v2375 = vsel %vm2291, %v2370, %v2374
      %v2376 = vrot.slane %v2101, 2
      %v2377 = vsel %vm2291, %v2372, %v2376
      %v2378 = vrot.slane %v2105, 2
      %v2379 = vsel %vm2291, %v2374, %v2378
      %v2380 = vrot.slane %v2107, 2
      %v2381 = vsel %vm2291, %v2376, %v2380
      %v2382 = vrot.slane %v2109, 2
      %v2383 = vsel %vm2291, %v2378, %v2382
      %v2384 = vrot.slane %v2111, 2
      %v2385 = vsel %vm2291, %v2380, %v2384
      %v2386 = vrot.slane %v2115, 2
      %v2387 = vsel %vm2291, %v2382, %v2386
      %v2388 = vrot.slane %v2117, 2
      %v2389 = vsel %vm2291, %v2384, %v2388
      %v2390 = vrot.slane %v2119, 2
      %v2391 = vsel %vm2291, %v2386, %v2390
      %v2392 = vrot.slane %v2121, 2
      %v2393 = vsel %vm2291, %v2388, %v2392
      %v2394 = vrot.slane %v2125, 2
      %v2395 = vsel %vm2291, %v2390, %v2394
      %v2396 = vrot.slane %v2127, 2
      %v2397 = vsel %vm2291, %v2392, %v2396
      %v2398 = vrot.slane %v2129, 2
      %v2399 = vsel %vm2291, %v2394, %v2398
      %v2400 = vrot.slane %v2131, 2
      %v2401 = vsel %vm2291, %v2396, %v2400
      %v2402 = vrot.slane %v2135, 2
      %v2403 = vsel %vm2291, %v2398, %v2402
      %v2404 = vrot.slane %v2137, 2
      %v2405 = vsel %vm2291, %v2400, %v2404
      %v2406 = vrot.slane %v2139, 2
      %v2407 = vsel %vm2291, %v2402, %v2406
      %v2408 = vrot.slane %v2141, 2
      %v2409 = vsel %vm2291, %v2404, %v2408
      %v2410 = vrot.slane %v2145, 2
      %v2411 = vsel %vm2291, %v2406, %v2410
      %v2412 = vrot.slane %v2147, 2
      %v2413 = vsel %vm2291, %v2408, %v2412
      %v2414 = vrot.slane %v2149, 2
      %v2415 = vsel %vm2291, %v2410, %v2414
      %v2416 = vrot.slane %v2151, 2
      %v2417 = vsel %vm2291, %v2412, %v2416
      %v2418 = vrot.slane %v2155, 2
      %v2419 = vsel %vm2291, %v2414, %v2418
      %v2420 = vrot.slane %v2157, 2
      %v2421 = vsel %vm2291, %v2416, %v2420
      %v2486 = vadd.f32 %v2161, %v2294
      %v2487 = vadd.f32 %v2162, %v2297
      %v2488 = vadd.f32 %v2163, %v2299
      %v2489 = vadd.f32 %v2164, %v2301
      %v2490 = vadd.f32 %v2165, %v2303
      %v2491 = vadd.f32 %v2166, %v2305
      %v2492 = vadd.f32 %v2167, %v2307
      %v2493 = vadd.f32 %v2168, %v2309
      %v2494 = vadd.f32 %v2169, %v2311
      %v2495 = vadd.f32 %v2170, %v2313
      %v2496 = vadd.f32 %v2171, %v2315
      %v2497 = vadd.f32 %v2172, %v2317
      %v2498 = vadd.f32 %v2173, %v2319
      %v2499 = vadd.f32 %v2174, %v2321
      %v2500 = vadd.f32 %v2175, %v2323
      %v2501 = vadd.f32 %v2176, %v2325
      %v2502 = vadd.f32 %v2177, %v2327
      %v2503 = vadd.f32 %v2178, %v2329
      %v2504 = vadd.f32 %v2179, %v2331
      %v2505 = vadd.f32 %v2180, %v2333
      %v2506 = vadd.f32 %v2181, %v2335
      %v2507 = vadd.f32 %v2182, %v2337
      %v2508 = vadd.f32 %v2183, %v2339
      %v2509 = vadd.f32 %v2184, %v2341
      %v2510 = vadd.f32 %v2185, %v2343
      %v2511 = vadd.f32 %v2186, %v2345
      %v2512 = vadd.f32 %v2187, %v2347
      %v2513 = vadd.f32 %v2188, %v2349
      %v2514 = vadd.f32 %v2189, %v2351
      %v2515 = vadd.f32 %v2190, %v2353
      %v2516 = vadd.f32 %v2191, %v2355
      %v2517 = vadd.f32 %v2192, %v2357
      %v2518 = vadd.f32 %v2193, %v2359
      %v2519 = vadd.f32 %v2194, %v2361
      %v2520 = vadd.f32 %v2195, %v2363
      %v2521 = vadd.f32 %v2196, %v2365
      %v2522 = vadd.f32 %v2197, %v2367
      %v2523 = vadd.f32 %v2198, %v2369
      %v2524 = vadd.f32 %v2199, %v2371
      %v2525 = vadd.f32 %v2200, %v2373
      %v2526 = vadd.f32 %v2201, %v2375
      %v2527 = vadd.f32 %v2202, %v2377
      %v2528 = vadd.f32 %v2203, %v2379
      %v2529 = vadd.f32 %v2204, %v2381
      %v2530 = vadd.f32 %v2205, %v2383
      %v2531 = vadd.f32 %v2206, %v2385
      %v2532 = vadd.f32 %v2207, %v2387
      %v2533 = vadd.f32 %v2208, %v2389
      %v2534 = vadd.f32 %v2209, %v2391
      %v2535 = vadd.f32 %v2210, %v2393
      %v2536 = vadd.f32 %v2211, %v2395
      %v2537 = vadd.f32 %v2212, %v2397
      %v2538 = vadd.f32 %v2213, %v2399
      %v2539 = vadd.f32 %v2214, %v2401
      %v2540 = vadd.f32 %v2215, %v2403
      %v2541 = vadd.f32 %v2216, %v2405
      %v2542 = vadd.f32 %v2217, %v2407
      %v2543 = vadd.f32 %v2218, %v2409
      %v2544 = vadd.f32 %v2219, %v2411
      %v2545 = vadd.f32 %v2220, %v2413
      %v2546 = vadd.f32 %v2221, %v2415
      %v2547 = vadd.f32 %v2222, %v2417
      %v2548 = vadd.f32 %v2223, %v2419
      %v2549 = vadd.f32 %v2224, %v2421
      %2550 = vst [vmem:[#allocation3] sm:$0xff] %v2486
      %2551 = vst [vmem:[#allocation3 + $0x8] sm:$0xff] %v2487
      %2552 = vst [vmem:[#allocation3 + $0x10] sm:$0xff] %v2488
      %2553 = vst [vmem:[#allocation3 + $0x18] sm:$0xff] %v2489
      %2554 = vst [vmem:[#allocation3 + $0x20] sm:$0xff] %v2490
      %2555 = vst [vmem:[#allocation3 + $0x28] sm:$0xff] %v2491
      %2556 = vst [vmem:[#allocation3 + $0x30] sm:$0xff] %v2492
      %2557 = vst [vmem:[#allocation3 + $0x38] sm:$0xff] %v2493
      %2558 = vst [vmem:[#allocation3 + $0x40] sm:$0xff] %v2494
      %2559 = vst [vmem:[#allocation3 + $0x48] sm:$0xff] %v2495
      %2560 = vst [vmem:[#allocation3 + $0x50] sm:$0xff] %v2496
      %2561 = vst [vmem:[#allocation3 + $0x58] sm:$0xff] %v2497
      %2562 = vst [vmem:[#allocation3 + $0x60] sm:$0xff] %v2498
      %2563 = vst [vmem:[#allocation3 + $0x68] sm:$0xff] %v2499
      %2564 = vst [vmem:[#allocation3 + $0x70] sm:$0xff] %v2500
      %2565 = vst [vmem:[#allocation3 + $0x78] sm:$0xff] %v2501
      %2566 = vst [vmem:[#allocation3 + $0x80] sm:$0xff] %v2502
      %2567 = vst [vmem:[#allocation3 + $0x88] sm:$0xff] %v2503
      %2568 = vst [vmem:[#allocation3 + $0x90] sm:$0xff] %v2504
      %2569 = vst [vmem:[#allocation3 + $0x98] sm:$0xff] %v2505
      %2570 = vst [vmem:[#allocation3 + $0xa0] sm:$0xff] %v2506
      %2571 = vst [vmem:[#allocation3 + $0xa8] sm:$0xff] %v2507
      %2572 = vst [vmem:[#allocation3 + $0xb0] sm:$0xff] %v2508
      %2573 = vst [vmem:[#allocation3 + $0xb8] sm:$0xff] %v2509
      %2574 = vst [vmem:[#allocation3 + $0xc0] sm:$0xff] %v2510
      %2575 = vst [vmem:[#allocation3 + $0xc8] sm:$0xff] %v2511
      %2576 = vst [vmem:[#allocation3 + $0xd0] sm:$0xff] %v2512
      %2577 = vst [vmem:[#allocation3 + $0xd8] sm:$0xff] %v2513
      %2578 = vst [vmem:[#allocation3 + $0xe0] sm:$0xff] %v2514
      %2579 = vst [vmem:[#allocation3 + $0xe8] sm:$0xff] %v2515
      %2580 = vst [vmem:[#allocation3 + $0xf0] sm:$0xff] %v2516
      %2581 = vst [vmem:[#allocation3 + $0xf8] sm:$0xff] %v2517
      %2582 = vst [vmem:[#allocation3 + $0x100] sm:$0xff] %v2518
      %2583 = vst [vmem:[#allocation3 + $0x108] sm:$0xff] %v2519
      %2584 = vst [vmem:[#allocation3 + $0x110] sm:$0xff] %v2520
      %2585 = vst [vmem:[#allocation3 + $0x118] sm:$0xff] %v2521
      %2586 = vst [vmem:[#allocation3 + $0x120] sm:$0xff] %v2522
      %2587 = vst [vmem:[#allocation3 + $0x128] sm:$0xff] %v2523
      %2588 = vst [vmem:[#allocation3 + $0x130] sm:$0xff] %v2524
      %2589 = vst [vmem:[#allocation3 + $0x138] sm:$0xff] %v2525
      %2590 = vst [vmem:[#allocation3 + $0x140] sm:$0xff] %v2526
      %2591 = vst [vmem:[#allocation3 + $0x148] sm:$0xff] %v2527
      %2592 = vst [vmem:[#allocation3 + $0x150] sm:$0xff] %v2528
      %2593 = vst [vmem:[#allocation3 + $0x158] sm:$0xff] %v2529
      %2594 = vst [vmem:[#allocation3 + $0x160] sm:$0xff] %v2530
      %2595 = vst [vmem:[#allocation3 + $0x168] sm:$0xff] %v2531
      %2596 = vst [vmem:[#allocation3 + $0x170] sm:$0xff] %v2532
      %2597 = vst [vmem:[#allocation3 + $0x178] sm:$0xff] %v2533
      %2598 = vst [vmem:[#allocation3 + $0x180] sm:$0xff] %v2534
      %2599 = vst [vmem:[#allocation3 + $0x188] sm:$0xff] %v2535
      %2600 = vst [vmem:[#allocation3 + $0x190] sm:$0xff] %v2536
      %2601 = vst [vmem:[#allocation3 + $0x198] sm:$0xff] %v2537
      %2602 = vst [vmem:[#allocation3 + $0x1a0] sm:$0xff] %v2538
      %2603 = vst [vmem:[#allocation3 + $0x1a8] sm:$0xff] %v2539
      %2604 = vst [vmem:[#allocation3 + $0x1b0] sm:$0xff] %v2540
      %2605 = vst [vmem:[#allocation3 + $0x1b8] sm:$0xff] %v2541
      %2606 = vst [vmem:[#allocation3 + $0x1c0] sm:$0xff] %v2542
      %2607 = vst [vmem:[#allocation3 + $0x1c8] sm:$0xff] %v2543
      %2608 = vst [vmem:[#allocation3 + $0x1d0] sm:$0xff] %v2544
      %2609 = vst [vmem:[#allocation3 + $0x1d8] sm:$0xff] %v2545
      %2610 = vst [vmem:[#allocation3 + $0x1e0] sm:$0xff] %v2546
      %2611 = vst [vmem:[#allocation3 + $0x1e8] sm:$0xff] %v2547
      %2612 = vst [vmem:[#allocation3 + $0x1f0] sm:$0xff] %v2548
      %2613 = vst [vmem:[#allocation3 + $0x1f8] sm:$0xff] %v2549
      %p2614 = scmp.eq.s32.totalorder %s21, 2
      // Predicated region
      $region127: #{aux_loss_forward.1} parent=35 // pred_check
        %p2615 = pneg %p2614
      $region128: #{aux_loss_forward.1} parent=35 // pred_check_branch
        %2617 = sbr.rel (%p2615) target = $region130
      $region129: #{aux_loss_forward.1} parent=35 // pred_region
        %v2618 = vld [vmem:[#allocation3] sm:$0xff]
        %v2619 = vld [vmem:[#allocation3 + $0x8] sm:$0xff]
        %v2620 = vld [vmem:[#allocation3 + $0x10] sm:$0xff]
        %v2621 = vld [vmem:[#allocation3 + $0x18] sm:$0xff]
        %v2622 = vld [vmem:[#allocation3 + $0x20] sm:$0xff]
        %v2623 = vld [vmem:[#allocation3 + $0x28] sm:$0xff]
        %v2624 = vld [vmem:[#allocation3 + $0x30] sm:$0xff]
        %v2625 = vld [vmem:[#allocation3 + $0x38] sm:$0xff]
        %v2626 = vld [vmem:[#allocation3 + $0x40] sm:$0xff]
        %v2627 = vld [vmem:[#allocation3 + $0x48] sm:$0xff]
        %v2628 = vld [vmem:[#allocation3 + $0x50] sm:$0xff]
        %v2629 = vld [vmem:[#allocation3 + $0x58] sm:$0xff]
        %v2630 = vld [vmem:[#allocation3 + $0x60] sm:$0xff]
        %v2631 = vld [vmem:[#allocation3 + $0x68] sm:$0xff]
        %v2632 = vld [vmem:[#allocation3 + $0x70] sm:$0xff]
        %v2633 = vld [vmem:[#allocation3 + $0x78] sm:$0xff]
        %v2634 = vld [vmem:[#allocation3 + $0x80] sm:$0xff]
        %v2635 = vld [vmem:[#allocation3 + $0x88] sm:$0xff]
        %v2636 = vld [vmem:[#allocation3 + $0x90] sm:$0xff]
        %v2637 = vld [vmem:[#allocation3 + $0x98] sm:$0xff]
        %v2638 = vld [vmem:[#allocation3 + $0xa0] sm:$0xff]
        %v2639 = vld [vmem:[#allocation3 + $0xa8] sm:$0xff]
        %v2640 = vld [vmem:[#allocation3 + $0xb0] sm:$0xff]
        %v2641 = vld [vmem:[#allocation3 + $0xb8] sm:$0xff]
        %v2642 = vld [vmem:[#allocation3 + $0xc0] sm:$0xff]
        %v2643 = vld [vmem:[#allocation3 + $0xc8] sm:$0xff]
        %v2644 = vld [vmem:[#allocation3 + $0xd0] sm:$0xff]
        %v2645 = vld [vmem:[#allocation3 + $0xd8] sm:$0xff]
        %v2646 = vld [vmem:[#allocation3 + $0xe0] sm:$0xff]
        %v2647 = vld [vmem:[#allocation3 + $0xe8] sm:$0xff]
        %v2648 = vld [vmem:[#allocation3 + $0xf0] sm:$0xff]
        %v2649 = vld [vmem:[#allocation3 + $0xf8] sm:$0xff]
        %v2650 = vld [vmem:[#allocation3 + $0x100] sm:$0xff]
        %v2651 = vld [vmem:[#allocation3 + $0x108] sm:$0xff]
        %v2652 = vld [vmem:[#allocation3 + $0x110] sm:$0xff]
        %v2653 = vld [vmem:[#allocation3 + $0x118] sm:$0xff]
        %v2654 = vld [vmem:[#allocation3 + $0x120] sm:$0xff]
        %v2655 = vld [vmem:[#allocation3 + $0x128] sm:$0xff]
        %v2656 = vld [vmem:[#allocation3 + $0x130] sm:$0xff]
        %v2657 = vld [vmem:[#allocation3 + $0x138] sm:$0xff]
        %v2658 = vld [vmem:[#allocation3 + $0x140] sm:$0xff]
        %v2659 = vld [vmem:[#allocation3 + $0x148] sm:$0xff]
        %v2660 = vld [vmem:[#allocation3 + $0x150] sm:$0xff]
        %v2661 = vld [vmem:[#allocation3 + $0x158] sm:$0xff]
        %v2662 = vld [vmem:[#allocation3 + $0x160] sm:$0xff]
        %v2663 = vld [vmem:[#allocation3 + $0x168] sm:$0xff]
        %v2664 = vld [vmem:[#allocation3 + $0x170] sm:$0xff]
        %v2665 = vld [vmem:[#allocation3 + $0x178] sm:$0xff]
        %v2666 = vld [vmem:[#allocation3 + $0x180] sm:$0xff]
        %v2667 = vld [vmem:[#allocation3 + $0x188] sm:$0xff]
        %v2668 = vld [vmem:[#allocation3 + $0x190] sm:$0xff]
        %v2669 = vld [vmem:[#allocation3 + $0x198] sm:$0xff]
        %v2670 = vld [vmem:[#allocation3 + $0x1a0] sm:$0xff]
        %v2671 = vld [vmem:[#allocation3 + $0x1a8] sm:$0xff]
        %v2672 = vld [vmem:[#allocation3 + $0x1b0] sm:$0xff]
        %v2673 = vld [vmem:[#allocation3 + $0x1b8] sm:$0xff]
        %v2674 = vld [vmem:[#allocation3 + $0x1c0] sm:$0xff]
        %v2675 = vld [vmem:[#allocation3 + $0x1c8] sm:$0xff]
        %v2676 = vld [vmem:[#allocation3 + $0x1d0] sm:$0xff]
        %v2677 = vld [vmem:[#allocation3 + $0x1d8] sm:$0xff]
        %v2678 = vld [vmem:[#allocation3 + $0x1e0] sm:$0xff]
        %v2679 = vld [vmem:[#allocation3 + $0x1e8] sm:$0xff]
        %v2680 = vld [vmem:[#allocation3 + $0x1f0] sm:$0xff]
        %v2681 = vld [vmem:[#allocation3 + $0x1f8] sm:$0xff]
        %v2682 = vld [vmem:[%s2] sm:$0x3]
        %v2684 = vlaneseq
        %v2685 = vshrl.u32 %v2684, 7
        %v2686 = vsub.s32 0, %v2685
        %v2687 = vrot.slane %v2682, %v2686
        %v2688 = vlaneseq
        %v2689 = vshrl.u32 %v2688, 7
        %v2690 = vsub.s32 1, %v2689
        %v2691 = vrot.slane %v2682, %v2690
        %v2694 = vadd.f32 %v2618, %v2687
        %v2695 = vadd.f32 %v2619, %v2691
        %v2696 = vadd.f32 %v2620, %v2687
        %v2697 = vadd.f32 %v2621, %v2691
        %v2698 = vadd.f32 %v2622, %v2687
        %v2699 = vadd.f32 %v2623, %v2691
        %v2700 = vadd.f32 %v2624, %v2687
        %v2701 = vadd.f32 %v2625, %v2691
        %v2702 = vadd.f32 %v2626, %v2687
        %v2703 = vadd.f32 %v2627, %v2691
        %v2704 = vadd.f32 %v2628, %v2687
        %v2705 = vadd.f32 %v2629, %v2691
        %v2706 = vadd.f32 %v2630, %v2687
        %v2707 = vadd.f32 %v2631, %v2691
        %v2708 = vadd.f32 %v2632, %v2687
        %v2709 = vadd.f32 %v2633, %v2691
        %v2710 = vadd.f32 %v2634, %v2687
        %v2711 = vadd.f32 %v2635, %v2691
        %v2712 = vadd.f32 %v2636, %v2687
        %v2713 = vadd.f32 %v2637, %v2691
        %v2714 = vadd.f32 %v2638, %v2687
        %v2715 = vadd.f32 %v2639, %v2691
        %v2716 = vadd.f32 %v2640, %v2687
        %v2717 = vadd.f32 %v2641, %v2691
        %v2718 = vadd.f32 %v2642, %v2687
        %v2719 = vadd.f32 %v2643, %v2691
        %v2720 = vadd.f32 %v2644, %v2687
        %v2721 = vadd.f32 %v2645, %v2691
        %v2722 = vadd.f32 %v2646, %v2687
        %v2723 = vadd.f32 %v2647, %v2691
        %v2724 = vadd.f32 %v2648, %v2687
        %v2725 = vadd.f32 %v2649, %v2691
        %v2726 = vadd.f32 %v2650, %v2687
        %v2727 = vadd.f32 %v2651, %v2691
        %v2728 = vadd.f32 %v2652, %v2687
        %v2729 = vadd.f32 %v2653, %v2691
        %v2730 = vadd.f32 %v2654, %v2687
        %v2731 = vadd.f32 %v2655, %v2691
        %v2732 = vadd.f32 %v2656, %v2687
        %v2733 = vadd.f32 %v2657, %v2691
        %v2734 = vadd.f32 %v2658, %v2687
        %v2735 = vadd.f32 %v2659, %v2691
        %v2736 = vadd.f32 %v2660, %v2687
        %v2737 = vadd.f32 %v2661, %v2691
        %v2738 = vadd.f32 %v2662, %v2687
        %v2739 = vadd.f32 %v2663, %v2691
        %v2740 = vadd.f32 %v2664, %v2687
        %v2741 = vadd.f32 %v2665, %v2691
        %v2742 = vadd.f32 %v2666, %v2687
        %v2743 = vadd.f32 %v2667, %v2691
        %v2744 = vadd.f32 %v2668, %v2687
        %v2745 = vadd.f32 %v2669, %v2691
        %v2746 = vadd.f32 %v2670, %v2687
        %v2747 = vadd.f32 %v2671, %v2691
        %v2748 = vadd.f32 %v2672, %v2687
        %v2749 = vadd.f32 %v2673, %v2691
        %v2750 = vadd.f32 %v2674, %v2687
        %v2751 = vadd.f32 %v2675, %v2691
        %v2752 = vadd.f32 %v2676, %v2687
        %v2753 = vadd.f32 %v2677, %v2691
        %v2754 = vadd.f32 %v2678, %v2687
        %v2755 = vadd.f32 %v2679, %v2691
        %v2756 = vadd.f32 %v2680, %v2687
        %v2757 = vadd.f32 %v2681, %v2691
        %v2758 = vmax.f32 %v2694, 0.0
        %v2759 = vmax.f32 %v2695, 0.0
        %v2760 = vmax.f32 %v2696, 0.0
        %v2761 = vmax.f32 %v2697, 0.0
        %v2762 = vmax.f32 %v2698, 0.0
        %v2763 = vmax.f32 %v2699, 0.0
        %v2764 = vmax.f32 %v2700, 0.0
        %v2765 = vmax.f32 %v2701, 0.0
        %v2766 = vmax.f32 %v2702, 0.0
        %v2767 = vmax.f32 %v2703, 0.0
        %v2768 = vmax.f32 %v2704, 0.0
        %v2769 = vmax.f32 %v2705, 0.0
        %v2770 = vmax.f32 %v2706, 0.0
        %v2771 = vmax.f32 %v2707, 0.0
        %v2772 = vmax.f32 %v2708, 0.0
        %v2773 = vmax.f32 %v2709, 0.0
        %v2774 = vmax.f32 %v2710, 0.0
        %v2775 = vmax.f32 %v2711, 0.0
        %v2776 = vmax.f32 %v2712, 0.0
        %v2777 = vmax.f32 %v2713, 0.0
        %v2778 = vmax.f32 %v2714, 0.0
        %v2779 = vmax.f32 %v2715, 0.0
        %v2780 = vmax.f32 %v2716, 0.0
        %v2781 = vmax.f32 %v2717, 0.0
        %v2782 = vmax.f32 %v2718, 0.0
        %v2783 = vmax.f32 %v2719, 0.0
        %v2784 = vmax.f32 %v2720, 0.0
        %v2785 = vmax.f32 %v2721, 0.0
        %v2786 = vmax.f32 %v2722, 0.0
        %v2787 = vmax.f32 %v2723, 0.0
        %v2788 = vmax.f32 %v2724, 0.0
        %v2789 = vmax.f32 %v2725, 0.0
        %v2790 = vmax.f32 %v2726, 0.0
        %v2791 = vmax.f32 %v2727, 0.0
        %v2792 = vmax.f32 %v2728, 0.0
        %v2793 = vmax.f32 %v2729, 0.0
        %v2794 = vmax.f32 %v2730, 0.0
        %v2795 = vmax.f32 %v2731, 0.0
        %v2796 = vmax.f32 %v2732, 0.0
        %v2797 = vmax.f32 %v2733, 0.0
        %v2798 = vmax.f32 %v2734, 0.0
        %v2799 = vmax.f32 %v2735, 0.0
        %v2800 = vmax.f32 %v2736, 0.0
        %v2801 = vmax.f32 %v2737, 0.0
        %v2802 = vmax.f32 %v2738, 0.0
        %v2803 = vmax.f32 %v2739, 0.0
        %v2804 = vmax.f32 %v2740, 0.0
        %v2805 = vmax.f32 %v2741, 0.0
        %v2806 = vmax.f32 %v2742, 0.0
        %v2807 = vmax.f32 %v2743, 0.0
        %v2808 = vmax.f32 %v2744, 0.0
        %v2809 = vmax.f32 %v2745, 0.0
        %v2810 = vmax.f32 %v2746, 0.0
        %v2811 = vmax.f32 %v2747, 0.0
        %v2812 = vmax.f32 %v2748, 0.0
        %v2813 = vmax.f32 %v2749, 0.0
        %v2814 = vmax.f32 %v2750, 0.0
        %v2815 = vmax.f32 %v2751, 0.0
        %v2816 = vmax.f32 %v2752, 0.0
        %v2817 = vmax.f32 %v2753, 0.0
        %v2818 = vmax.f32 %v2754, 0.0
        %v2819 = vmax.f32 %v2755, 0.0
        %v2820 = vmax.f32 %v2756, 0.0
        %v2821 = vmax.f32 %v2757, 0.0
        %v2822 = vpack.c.bf16 %v2760, %v2758
        %v2823 = vpack.c.bf16 %v2761, %v2759
        %v2824 = vpack.c.bf16 %v2764, %v2762
        %v2825 = vpack.c.bf16 %v2765, %v2763
        %v2826 = vpack.c.bf16 %v2768, %v2766
        %v2827 = vpack.c.bf16 %v2769, %v2767
        %v2828 = vpack.c.bf16 %v2772, %v2770
        %v2829 = vpack.c.bf16 %v2773, %v2771
        %v2830 = vpack.c.bf16 %v2776, %v2774
        %v2831 = vpack.c.bf16 %v2777, %v2775
        %v2832 = vpack.c.bf16 %v2780, %v2778
        %v2833 = vpack.c.bf16 %v2781, %v2779
        %v2834 = vpack.c.bf16 %v2784, %v2782
        %v2835 = vpack.c.bf16 %v2785, %v2783
        %v2836 = vpack.c.bf16 %v2788, %v2786
        %v2837 = vpack.c.bf16 %v2789, %v2787
        %v2838 = vpack.c.bf16 %v2792, %v2790
        %v2839 = vpack.c.bf16 %v2793, %v2791
        %v2840 = vpack.c.bf16 %v2796, %v2794
        %v2841 = vpack.c.bf16 %v2797, %v2795
        %v2842 = vpack.c.bf16 %v2800, %v2798
        %v2843 = vpack.c.bf16 %v2801, %v2799
        %v2844 = vpack.c.bf16 %v2804, %v2802
        %v2845 = vpack.c.bf16 %v2805, %v2803
        %v2846 = vpack.c.bf16 %v2808, %v2806
        %v2847 = vpack.c.bf16 %v2809, %v2807
        %v2848 = vpack.c.bf16 %v2812, %v2810
        %v2849 = vpack.c.bf16 %v2813, %v2811
        %v2850 = vpack.c.bf16 %v2816, %v2814
        %v2851 = vpack.c.bf16 %v2817, %v2815
        %v2852 = vpack.c.bf16 %v2820, %v2818
        %v2853 = vpack.c.bf16 %v2821, %v2819
        %v2854 = vld [vmem:[%s3] sm:$0xf]
        %v2855 = vld [vmem:[%s3 + $0x4] sm:$0xf]
        %v2856 = vld [vmem:[%s3 + $0x8] sm:$0xf]
        %v2857 = vld [vmem:[%s3 + $0xc] sm:$0xf]
        %v2858 = vld [vmem:[%s3 + $0x10] sm:$0xf]
        %v2859 = vld [vmem:[%s3 + $0x14] sm:$0xf]
        %v2860 = vld [vmem:[%s3 + $0x18] sm:$0xf]
        %v2861 = vld [vmem:[%s3 + $0x1c] sm:$0xf]
        %v2862 = vld [vmem:[%s3 + $0x20] sm:$0xf]
        %v2863 = vld [vmem:[%s3 + $0x24] sm:$0xf]
        %v2864 = vld [vmem:[%s3 + $0x28] sm:$0xf]
        %v2865 = vld [vmem:[%s3 + $0x2c] sm:$0xf]
        %v2866 = vld [vmem:[%s3 + $0x30] sm:$0xf]
        %v2867 = vld [vmem:[%s3 + $0x34] sm:$0xf]
        %v2868 = vld [vmem:[%s3 + $0x38] sm:$0xf]
        %v2869 = vld [vmem:[%s3 + $0x3c] sm:$0xf]
        %v2870 = vld [vmem:[%s3 + $0x40] sm:$0xf]
        %v2871 = vld [vmem:[%s3 + $0x44] sm:$0xf]
        %v2872 = vld [vmem:[%s3 + $0x48] sm:$0xf]
        %v2873 = vld [vmem:[%s3 + $0x4c] sm:$0xf]
        %v2874 = vld [vmem:[%s3 + $0x50] sm:$0xf]
        %v2875 = vld [vmem:[%s3 + $0x54] sm:$0xf]
        %v2876 = vld [vmem:[%s3 + $0x58] sm:$0xf]
        %v2877 = vld [vmem:[%s3 + $0x5c] sm:$0xf]
        %v2878 = vld [vmem:[%s3 + $0x60] sm:$0xf]
        %v2879 = vld [vmem:[%s3 + $0x64] sm:$0xf]
        %v2880 = vld [vmem:[%s3 + $0x68] sm:$0xf]
        %v2881 = vld [vmem:[%s3 + $0x6c] sm:$0xf]
        %v2882 = vld [vmem:[%s3 + $0x70] sm:$0xf]
        %v2883 = vld [vmem:[%s3 + $0x74] sm:$0xf]
        %v2884 = vld [vmem:[%s3 + $0x78] sm:$0xf]
        %v2885 = vld [vmem:[%s3 + $0x7c] sm:$0xf]
        %v2886 = vld [vmem:[%s4] sm:$0x1]
        %v2888 = vlaneseq
        %v2889 = vshrl.u32 %v2888, 7
        %v2890 = vsub.s32 0, %v2889
        %v2891 = vrot.slane %v2886, %v2890
        %v2925 = vunpack.c.l.b16 %v2854
        %v2926 = vunpack.c.l.b16 %v2855
        %v2927 = vunpack.c.l.b16 %v2856
        %v2928 = vunpack.c.l.b16 %v2857
        %v2929 = vunpack.c.l.b16 %v2858
        %v2930 = vunpack.c.l.b16 %v2859
        %v2931 = vunpack.c.l.b16 %v2860
        %v2932 = vunpack.c.l.b16 %v2861
        %v2933 = vunpack.c.l.b16 %v2862
        %v2934 = vunpack.c.l.b16 %v2863
        %v2935 = vunpack.c.l.b16 %v2864
        %v2936 = vunpack.c.l.b16 %v2865
        %v2937 = vunpack.c.l.b16 %v2866
        %v2938 = vunpack.c.l.b16 %v2867
        %v2939 = vunpack.c.l.b16 %v2868
        %v2940 = vunpack.c.l.b16 %v2869
        %v2941 = vunpack.c.l.b16 %v2870
        %v2942 = vunpack.c.l.b16 %v2871
        %v2943 = vunpack.c.l.b16 %v2872
        %v2944 = vunpack.c.l.b16 %v2873
        %v2945 = vunpack.c.l.b16 %v2874
        %v2946 = vunpack.c.l.b16 %v2875
        %v2947 = vunpack.c.l.b16 %v2876
        %v2948 = vunpack.c.l.b16 %v2877
        %v2949 = vunpack.c.l.b16 %v2878
        %v2950 = vunpack.c.l.b16 %v2879
        %v2951 = vunpack.c.l.b16 %v2880
        %v2952 = vunpack.c.l.b16 %v2881
        %v2953 = vunpack.c.l.b16 %v2882
        %v2954 = vunpack.c.l.b16 %v2883
        %v2955 = vunpack.c.l.b16 %v2884
        %v2956 = vunpack.c.l.b16 %v2885
        %v2957 = vpack.c.b16 %v2926, %v2925
        %v2958 = vpack.c.b16 %v2928, %v2927
        %v2959 = vpack.c.b16 %v2930, %v2929
        %v2960 = vpack.c.b16 %v2932, %v2931
        %v2961 = vpack.c.b16 %v2934, %v2933
        %v2962 = vpack.c.b16 %v2936, %v2935
        %v2963 = vpack.c.b16 %v2938, %v2937
        %v2964 = vpack.c.b16 %v2940, %v2939
        %v2965 = vpack.c.b16 %v2942, %v2941
        %v2966 = vpack.c.b16 %v2944, %v2943
        %v2967 = vpack.c.b16 %v2946, %v2945
        %v2968 = vpack.c.b16 %v2948, %v2947
        %v2969 = vpack.c.b16 %v2950, %v2949
        %v2970 = vpack.c.b16 %v2952, %v2951
        %v2971 = vpack.c.b16 %v2954, %v2953
        %v2972 = vpack.c.b16 %v2956, %v2955
        %2989 = vmatprep.subr.bf16.mxu0 0
        %2990 = vmatpush1.bf16.msra.mxu0 %v2964
        %2991 = vmatprep.subr.bf16.mxu0 0
        %2992 = vmatpush1.bf16.msra.mxu0 %v2963
        %2993 = vmatprep.subr.bf16.mxu0 0
        %2994 = vmatpush1.bf16.msra.mxu0 %v2962
        %2995 = vmatprep.subr.bf16.mxu0 0
        %2996 = vmatpush1.bf16.msra.mxu0 %v2961
        %2997 = vmatprep.subr.bf16.mxu0 0
        %2998 = vmatpush1.bf16.msra.mxu0 %v2960
        %2999 = vmatprep.subr.bf16.mxu0 0
        %3000 = vmatpush1.bf16.msra.mxu0 %v2959
        %3001 = vmatprep.subr.bf16.mxu0 0
        %3002 = vmatpush1.bf16.msra.mxu0 %v2958
        %3003 = vmatprep.subr.bf16.mxu0 0
        %3004 = vmatpush1.bf16.msra.mxu0 %v2957
        %3005 = vmatprep.subr.bf16.mxu0 0
        %3006 = vmatpush2.bf16.msra.mxu0 %v2972
        %3007 = vmatprep.subr.bf16.mxu0 0
        %3008 = vmatpush2.bf16.msra.mxu0 %v2971
        %3009 = vmatprep.subr.bf16.mxu0 0
        %3010 = vmatpush2.bf16.msra.mxu0 %v2970
        %3011 = vmatprep.subr.bf16.mxu0 0
        %3012 = vmatpush2.bf16.msra.mxu0 %v2969
        %3013 = vmatprep.subr.bf16.mxu0 0
        %3014 = vmatpush2.bf16.msra.mxu0 %v2968
        %3015 = vmatprep.subr.bf16.mxu0 0
        %3016 = vmatpush2.bf16.msra.mxu0 %v2967
        %3017 = vmatprep.subr.bf16.mxu0 0
        %3018 = vmatpush2.bf16.msra.mxu0 %v2966
        %3019 = vmatprep.subr.bf16.mxu0 0
        %3020 = vmatpush2.bf16.msra.mxu0 %v2965
        %3021 = vmatprep.mubr.bf16.mxu0 %v2823
        %3022 = vmatmul.mubr.bf16.gmra.mxu0 %v2822
        %v3023 = vpop.f32.mrf.mxu0
        %v3024 = vadd.f32 %v2891, %v3023
        %v3025 = vpop.f32.mrf.mxu0
        %v3026 = vpop.f32.mrf.mxu0
        %v3027 = vadd.f32 %v2891, %v3026
        %v3028 = vpop.f32.mrf.mxu0
        %3029 = vmatprep.mubr.bf16.mxu0 %v2825
        %3030 = vmatmul.mubr.bf16.gmra.mxu0 %v2824
        %v3031 = vpop.f32.mrf.mxu0
        %v3032 = vadd.f32 %v2891, %v3031
        %v3033 = vpop.f32.mrf.mxu0
        %v3034 = vpop.f32.mrf.mxu0
        %v3035 = vadd.f32 %v2891, %v3034
        %v3036 = vpop.f32.mrf.mxu0
        %3037 = vmatprep.mubr.bf16.mxu0 %v2827
        %3038 = vmatmul.mubr.bf16.gmra.mxu0 %v2826
        %v3039 = vpop.f32.mrf.mxu0
        %v3040 = vadd.f32 %v2891, %v3039
        %v3041 = vpop.f32.mrf.mxu0
        %v3042 = vpop.f32.mrf.mxu0
        %v3043 = vadd.f32 %v2891, %v3042
        %v3044 = vpop.f32.mrf.mxu0
        %3045 = vmatprep.mubr.bf16.mxu0 %v2829
        %3046 = vmatmul.mubr.bf16.gmra.mxu0 %v2828
        %v3047 = vpop.f32.mrf.mxu0
        %v3048 = vadd.f32 %v2891, %v3047
        %v3049 = vpop.f32.mrf.mxu0
        %v3050 = vpop.f32.mrf.mxu0
        %v3051 = vadd.f32 %v2891, %v3050
        %v3052 = vpop.f32.mrf.mxu0
        %3053 = vmatprep.mubr.bf16.mxu0 %v2831
        %3054 = vmatmul.mubr.bf16.gmra.mxu0 %v2830
        %v3055 = vpop.f32.mrf.mxu0
        %v3056 = vadd.f32 %v2891, %v3055
        %v3057 = vpop.f32.mrf.mxu0
        %v3058 = vpop.f32.mrf.mxu0
        %v3059 = vadd.f32 %v2891, %v3058
        %v3060 = vpop.f32.mrf.mxu0
        %3061 = vmatprep.mubr.bf16.mxu0 %v2833
        %3062 = vmatmul.mubr.bf16.gmra.mxu0 %v2832
        %v3063 = vpop.f32.mrf.mxu0
        %v3064 = vadd.f32 %v2891, %v3063
        %v3065 = vpop.f32.mrf.mxu0
        %v3066 = vpop.f32.mrf.mxu0
        %v3067 = vadd.f32 %v2891, %v3066
        %v3068 = vpop.f32.mrf.mxu0
        %3069 = vmatprep.mubr.bf16.mxu0 %v2835
        %3070 = vmatmul.mubr.bf16.gmra.mxu0 %v2834
        %v3071 = vpop.f32.mrf.mxu0
        %v3072 = vadd.f32 %v2891, %v3071
        %v3073 = vpop.f32.mrf.mxu0
        %v3074 = vpop.f32.mrf.mxu0
        %v3075 = vadd.f32 %v2891, %v3074
        %v3076 = vpop.f32.mrf.mxu0
        %3077 = vmatprep.mubr.bf16.mxu0 %v2837
        %3078 = vmatmul.mubr.bf16.gmra.mxu0 %v2836
        %v3079 = vpop.f32.mrf.mxu0
        %v3080 = vadd.f32 %v2891, %v3079
        %v3081 = vpop.f32.mrf.mxu0
        %v3082 = vpop.f32.mrf.mxu0
        %v3083 = vadd.f32 %v2891, %v3082
        %v3084 = vpop.f32.mrf.mxu0
        %3085 = vmatprep.mubr.bf16.mxu0 %v2839
        %3086 = vmatmul.mubr.bf16.gmra.mxu0 %v2838
        %v3087 = vpop.f32.mrf.mxu0
        %v3088 = vadd.f32 %v2891, %v3087
        %v3089 = vpop.f32.mrf.mxu0
        %v3090 = vpop.f32.mrf.mxu0
        %v3091 = vadd.f32 %v2891, %v3090
        %v3092 = vpop.f32.mrf.mxu0
        %3093 = vmatprep.mubr.bf16.mxu0 %v2841
        %3094 = vmatmul.mubr.bf16.gmra.mxu0 %v2840
        %v3095 = vpop.f32.mrf.mxu0
        %v3096 = vadd.f32 %v2891, %v3095
        %v3097 = vpop.f32.mrf.mxu0
        %v3098 = vpop.f32.mrf.mxu0
        %v3099 = vadd.f32 %v2891, %v3098
        %v3100 = vpop.f32.mrf.mxu0
        %3101 = vmatprep.mubr.bf16.mxu0 %v2843
        %3102 = vmatmul.mubr.bf16.gmra.mxu0 %v2842
        %v3103 = vpop.f32.mrf.mxu0
        %v3104 = vadd.f32 %v2891, %v3103
        %v3105 = vpop.f32.mrf.mxu0
        %v3106 = vpop.f32.mrf.mxu0
        %v3107 = vadd.f32 %v2891, %v3106
        %v3108 = vpop.f32.mrf.mxu0
        %3109 = vmatprep.mubr.bf16.mxu0 %v2845
        %3110 = vmatmul.mubr.bf16.gmra.mxu0 %v2844
        %v3111 = vpop.f32.mrf.mxu0
        %v3112 = vadd.f32 %v2891, %v3111
        %v3113 = vpop.f32.mrf.mxu0
        %v3114 = vpop.f32.mrf.mxu0
        %v3115 = vadd.f32 %v2891, %v3114
        %v3116 = vpop.f32.mrf.mxu0
        %3117 = vmatprep.mubr.bf16.mxu0 %v2847
        %3118 = vmatmul.mubr.bf16.gmra.mxu0 %v2846
        %v3119 = vpop.f32.mrf.mxu0
        %v3120 = vadd.f32 %v2891, %v3119
        %v3121 = vpop.f32.mrf.mxu0
        %v3122 = vpop.f32.mrf.mxu0
        %v3123 = vadd.f32 %v2891, %v3122
        %v3124 = vpop.f32.mrf.mxu0
        %3125 = vmatprep.mubr.bf16.mxu0 %v2849
        %3126 = vmatmul.mubr.bf16.gmra.mxu0 %v2848
        %v3127 = vpop.f32.mrf.mxu0
        %v3128 = vadd.f32 %v2891, %v3127
        %v3129 = vpop.f32.mrf.mxu0
        %v3130 = vpop.f32.mrf.mxu0
        %v3131 = vadd.f32 %v2891, %v3130
        %v3132 = vpop.f32.mrf.mxu0
        %3133 = vmatprep.mubr.bf16.mxu0 %v2851
        %3134 = vmatmul.mubr.bf16.gmra.mxu0 %v2850
        %v3135 = vpop.f32.mrf.mxu0
        %v3136 = vadd.f32 %v2891, %v3135
        %v3137 = vpop.f32.mrf.mxu0
        %v3138 = vpop.f32.mrf.mxu0
        %v3139 = vadd.f32 %v2891, %v3138
        %v3140 = vpop.f32.mrf.mxu0
        %3141 = vmatprep.mubr.bf16.mxu0 %v2853
        %3142 = vmatmul.mubr.bf16.gmra.mxu0 %v2852
        %v3143 = vpop.f32.mrf.mxu0
        %v3144 = vadd.f32 %v2891, %v3143
        %v3145 = vpop.f32.mrf.mxu0
        %v3146 = vpop.f32.mrf.mxu0
        %v3147 = vadd.f32 %v2891, %v3146
        %v3148 = vpop.f32.mrf.mxu0
        %3149 = vdwg.mxu0
        %3150 = vst [vmem:[%s190] sm:$0xff] %v3024
        %3151 = vst [vmem:[%s190 + $0x8] sm:$0xff] %v3027
        %3152 = vst [vmem:[%s190 + $0x10] sm:$0xff] %v3032
        %3153 = vst [vmem:[%s190 + $0x18] sm:$0xff] %v3035
        %3154 = vst [vmem:[%s190 + $0x20] sm:$0xff] %v3040
        %3155 = vst [vmem:[%s190 + $0x28] sm:$0xff] %v3043
        %3156 = vst [vmem:[%s190 + $0x30] sm:$0xff] %v3048
        %3157 = vst [vmem:[%s190 + $0x38] sm:$0xff] %v3051
        %3158 = vst [vmem:[%s190 + $0x40] sm:$0xff] %v3056
        %3159 = vst [vmem:[%s190 + $0x48] sm:$0xff] %v3059
        %3160 = vst [vmem:[%s190 + $0x50] sm:$0xff] %v3064
        %3161 = vst [vmem:[%s190 + $0x58] sm:$0xff] %v3067
        %3162 = vst [vmem:[%s190 + $0x60] sm:$0xff] %v3072
        %3163 = vst [vmem:[%s190 + $0x68] sm:$0xff] %v3075
        %3164 = vst [vmem:[%s190 + $0x70] sm:$0xff] %v3080
        %3165 = vst [vmem:[%s190 + $0x78] sm:$0xff] %v3083
        %3166 = vst [vmem:[%s190 + $0x80] sm:$0xff] %v3088
        %3167 = vst [vmem:[%s190 + $0x88] sm:$0xff] %v3091
        %3168 = vst [vmem:[%s190 + $0x90] sm:$0xff] %v3096
        %3169 = vst [vmem:[%s190 + $0x98] sm:$0xff] %v3099
        %3170 = vst [vmem:[%s190 + $0xa0] sm:$0xff] %v3104
        %3171 = vst [vmem:[%s190 + $0xa8] sm:$0xff] %v3107
        %3172 = vst [vmem:[%s190 + $0xb0] sm:$0xff] %v3112
        %3173 = vst [vmem:[%s190 + $0xb8] sm:$0xff] %v3115
        %3174 = vst [vmem:[%s190 + $0xc0] sm:$0xff] %v3120
        %3175 = vst [vmem:[%s190 + $0xc8] sm:$0xff] %v3123
        %3176 = vst [vmem:[%s190 + $0xd0] sm:$0xff] %v3128
        %3177 = vst [vmem:[%s190 + $0xd8] sm:$0xff] %v3131
        %3178 = vst [vmem:[%s190 + $0xe0] sm:$0xff] %v3136
        %3179 = vst [vmem:[%s190 + $0xe8] sm:$0xff] %v3139
        %3180 = vst [vmem:[%s190 + $0xf0] sm:$0xff] %v3144
        %3181 = vst [vmem:[%s190 + $0xf8] sm:$0xff] %v3147
      $region130: #{aux_loss_forward.1} parent=35 // pred_fallthru
        _
      %s3182 = smul.u32 32, %s20
      %p3183 = scmp.lt.s32.totalorder %s3182, 63
      %s3184 = scalar_select %p3183, %s3182, 63
      %s3185 = smul.addr %s3184, 8
      %s3186 = scalar_lea.vmem %s5, %s3185
      // Predicated region
      $region131: #{aux_loss_forward.1} parent=35 // pred_check
        %p3187 = pneg %p130
      $region132: #{aux_loss_forward.1} parent=35 // pred_check_branch
        %3189 = sbr.rel (%p3187) target = $region134
      $region133: #{aux_loss_forward.1} parent=35 // pred_region
        %s3190 = smul.u32 32, %s20
      $region134: #{aux_loss_forward.1} parent=35 // pred_fallthru
        _
    $region36: #{aux_loss_forward.1} parent=5 // pred_fallthru
      _
    %p3191 = scmp.le.s32.totalorder 2, %s11
    // Predicated region
    $region135: #{aux_loss_forward.1} parent=5 // pred_check
      %p3192 = pneg %p3191
    $region136: #{aux_loss_forward.1} parent=5 // pred_check_branch
      %3194 = sbr.rel (%p3192) target = $region138
    $region137: #{aux_loss_forward.1} parent=5 // pred_region
      %s3195 = ssub.s32 %s11, 2
      // Predicated region
      $region139: #{aux_loss_forward.1} parent=137 // pred_check
        %p3196 = pneg %p136
      $region140: #{aux_loss_forward.1} parent=137 // pred_check_branch
        %3198 = sbr.rel (%p3196) target = $region142
      $region141: #{aux_loss_forward.1} parent=137 // pred_region
        %s3199 = smul.u32 32, %s22
        %p3200 = scmp.lt.s32.totalorder %s3199, 63
        %s3201 = scalar_select %p3200, %s3199, 63
        %s3202 = smul.addr %s3201, 8
        %s3203 = scalar_lea.vmem %s5, %s3202
      $region142: #{aux_loss_forward.1} parent=137 // pred_fallthru
        _
    $region138: #{aux_loss_forward.1} parent=5 // pred_fallthru
      _
  $region6: #{aux_loss_forward.1} parent=0 // loop_footer
    %s15 = sadd.s32 1, %s11
  $region7: #{aux_loss_forward.1} parent=0 // loop_footer_branch
    %10 = sbr.rel target = $region3
  $region8: #{aux_loss_forward.1} parent=0 // loop_exit
    _
  %3204 = vsyncmov [#allocation4]
  %s3205 = vpop.sfrf %3204
  %p3206 = scmp.eq.s32.totalorder %s3205, 0
  %p3207 = pneg %p3206
  %3209 = shalt.err (%p3207)
  %s3210 = scalar_lea.sflag [#allocation4], 1
  %3211 = vsyncmov %s3210
  %s3212 = vpop.sfrf %3211
  %p3213 = scmp.eq.s32.totalorder %s3212, 0
  %p3214 = pneg %p3213
  %3216 = shalt.err (%p3214)

</llo_original>
